<compile_context>
chip_gen: v6e
topology: v6e:2x2x1
jax: 0.10.0
libtpu: 0.0.40
codegen_flags: <defaults>
</compile_context>

<pallas_src>
import numpy as np
import jax
import jax.numpy as jnp
from jax.experimental import pallas as pl
from jax.experimental.pallas import tpu as pltpu


def din_attn_kernel(src_ref, w1_ref, w_ih_ref, w_hh_ref, b_ref,
                    w_big_ref, fc_ref, alphas_ref, out_ref):
    """One batch tile of the DinAttnModel forward, fully VMEM-resident."""
    T, Bt, in_dim = src_ref.shape
    H = w_hh_ref.shape[0]
    a1 = alphas_ref[0]          # PReLU slopes (scalars in SMEM)
    a2 = alphas_ref[1]
    a3 = alphas_ref[2]

    # ---- hoisted feed-forward: mlp1 + act1 + LSTM input projection ---------
    x2d = src_ref[...].reshape(T * Bt, in_dim)            # timestep-major rows
    x = jnp.dot(x2d.astype(w1_ref.dtype), w1_ref[...],
                preferred_element_type=jnp.float32)       # (T*Bt, 32)
    x = jnp.where(x >= 0, x, a1 * x)                      # act1 (+ dropout=id)
    x_gates = (jnp.dot(x.astype(w_ih_ref.dtype), w_ih_ref[...],
                       preferred_element_type=jnp.float32)
               + b_ref[...])                              # (T*Bt, 4H), bias folded

    # ---- LSTM recurrence (irreducible serial chain) -------------------------
    # TODO(synk): a feature-major (batch-on-lanes) recurrence layout would cut
    # per-step VPU/EUP vreg work further once Bt >= 128; deferred for robustness.
    w_hh = w_hh_ref[...]
    h = jnp.zeros((Bt, H), jnp.float32)
    c = jnp.zeros((Bt, H), jnp.float32)
    hs = []                                               # act2-applied outputs
    for t in range(T):                                    # static unroll (T small)
        gates = x_gates[t * Bt:(t + 1) * Bt, :] + jnp.dot(
            h, w_hh, preferred_element_type=jnp.float32)  # (Bt,4H), [i|f|o|g]
        sig = jax.nn.sigmoid(gates[:, :3 * H])            # i, f, o only
        g_g = jnp.tanh(gates[:, 3 * H:])                  # g only
        i_g = sig[:, :H]
        f_g = sig[:, H:2 * H]
        o_g = sig[:, 2 * H:3 * H]
        c = f_g * c + i_g * g_g
        h = o_g * jnp.tanh(c)
        hs.append(jnp.where(h >= 0, h, a2 * h))           # act2 (+ dropout=id)

    v1 = hs[-1]                                           # (Bt, H)

    # ---- all (T-1) heads + mlp2 + v1 tail as ONE K = T*4H matmul ------------
    head_blocks = []
    for t in range(T):
        ht = hs[t]
        cv = jnp.concatenate([v1, ht, v1 - ht, v1 * ht], axis=-1)   # (Bt, 4H)
        if t < T - 1:                                     # per-head PReLU
            a = alphas_ref[3 + t]
            cv = jnp.where(cv >= 0, cv, a * cv)
        # t == T-1 block: only its first H lanes (== v1) hit nonzero weight.
        head_blocks.append(cv)
    acts = jnp.concatenate(head_blocks, axis=-1)          # (Bt, T*4H), lane-aligned
    y = jnp.dot(acts.astype(w_big_ref.dtype), w_big_ref[...],
                preferred_element_type=jnp.float32)       # (Bt, 10)  (= mlp2 out)
    y = jnp.where(y >= 0, y, a3 * y)                      # act3 (+ dropout=id)

    # ---- fc (N=1): VPU multiply + lane reduction, no MXU pass ---------------
    out_ref[...] = jnp.sum(y * fc_ref[...], axis=-1, keepdims=True)   # (Bt, 1)


def _pick_b_tile(B):
    """Generation-aware default tile: whole batch on 1-TC chips (v5e/v6e),
    two 'parallel' tiles on v7x (2 TensorCores). Never tile smaller for VMEM."""
    kind = ""
    try:
        kind = jax.devices()[0].device_kind.lower()
    except Exception:
        pass
    two_tc = ("v7" in kind) or ("tpu7" in kind) or ("7x" in kind)
    bt = B
    if two_tc and B % 2 == 0 and (B // 2) % 8 == 0:
        bt = B // 2
    # only for very large batches, cap per-tile footprint
    while bt > 2048 and bt % 2 == 0 and (bt // 2) % 8 == 0:
        bt //= 2
    return bt


def din_attn_forward(src, w_mlp1, w_ih, w_hh, b_lstm, gin_w, w_mlp2, w_fc,
                     alphas, *, b_tile=None, mxu_dtype=jnp.float32):
    """src: (B, T, in_dim) batch-first, exactly like the PyTorch module."""
    B, T, in_dim = src.shape
    H = w_hh.shape[0]
    n_heads = T - 1

    if b_tile is None:
        b_tile = _pick_b_tile(B)
    assert B % b_tile == 0 and (b_tile % 8 == 0 or b_tile == B)

    # ---- wrapper-side layout / algebra plumbing -----------------------------
    # timestep-major activations: one batch tile is a contiguous block and
    # per-step rows inside the kernel are sublane-aligned static slices.
    src_t = jnp.transpose(src, (1, 0, 2))                           # (T, B, in)

    # gate-column permutation [i|f|g|o] -> [i|f|o|g] so the kernel can apply
    # sigmoid to the first 3H columns and tanh only to the last H.
    perm = np.concatenate([np.arange(0, 2 * H),
                           np.arange(3 * H, 4 * H),
                           np.arange(2 * H, 3 * H)])
    w_ih_r = w_ih[:, perm]
    w_hh_r = w_hh[:, perm].astype(jnp.float32)
    b_r = b_lstm[:, perm].astype(jnp.float32)

    # fuse each gin head's Linear(4H,10) with its matching 10-row block of
    # mlp2 (both bias-free, no nonlinearity between), vstack all head blocks,
    # and append the v1 tail padded to a full 4H block -> (T*4H, 10).
    w2_heads = w_mlp2[:10 * n_heads].reshape(n_heads, 10, 10)
    comb = jnp.einsum('hkm,hmn->hkn', gin_w, w2_heads)              # (T-1,4H,10)
    w2_tail = w_mlp2[10 * n_heads:]                                 # (H, 10)
    w_big = jnp.concatenate(
        [comb.reshape(n_heads * 4 * H, 10),
         w2_tail,
         jnp.zeros((3 * H, 10), w_mlp2.dtype)], axis=0)             # (T*4H, 10)

    fc_row = w_fc.reshape(1, 10).astype(jnp.float32)
    alphas_all = alphas.astype(jnp.float32)                         # (3 + T-1,)

    # bf16-at-the-MXU for the feed-forward matmuls; recurrence stays f32.
    w_mlp1_c = w_mlp1.astype(mxu_dtype)
    w_ih_r = w_ih_r.astype(mxu_dtype)
    w_big = w_big.astype(mxu_dtype)

    vmem = pl.BlockSpec(memory_space=pltpu.MemorySpace.VMEM)
    smem = pl.BlockSpec(memory_space=pltpu.MemorySpace.SMEM)

    return pl.pallas_call(
        din_attn_kernel,
        out_shape=jax.ShapeDtypeStruct((B, 1), jnp.float32),
        grid=(B // b_tile,),
        in_specs=[
            pl.BlockSpec((T, b_tile, in_dim), lambda b: (0, b, 0)),  # src tile
            vmem,    # w_mlp1
            vmem,    # w_ih  (reordered, mxu dtype)
            vmem,    # w_hh  (reordered, f32)
            vmem,    # b_lstm (reordered, f32)
            vmem,    # w_big (fused attention + mlp2 weight)
            vmem,    # fc_row
            smem,    # alphas (act1/act2/act3 + per-head)
        ],
        out_specs=pl.BlockSpec((b_tile, 1), lambda b: (b, 0)),
        compiler_params=pltpu.CompilerParams(
            dimension_semantics=("parallel",)),           # shards the 2 TCs on v7x
    )(src_t, w_mlp1_c, w_ih_r, w_hh_r, b_r, w_big, fc_row, alphas_all)


# ------------------------------ numpy reference -------------------------------
def reference_numpy(src, w_mlp1, w_ih, w_hh, b_lstm, gin_w, w_mlp2, w_fc,
                    alphas):
    f64 = lambda a: np.asarray(a, np.float64)
    (src, w_mlp1, w_ih, w_hh, b_lstm, gin_w, w_mlp2, w_fc, alphas) = map(
        f64, (src, w_mlp1, w_ih, w_hh, b_lstm, gin_w, w_mlp2, w_fc, alphas))
    B, T, _ = src.shape
    H = w_hh.shape[0]
    prelu = lambda x, a: np.where(x >= 0, x, a * x)
    sigmoid = lambda x: 1.0 / (1.0 + np.exp(-x))

    x = prelu(src @ w_mlp1, alphas[0])
    h = np.zeros((B, H)); c = np.zeros((B, H))
    hs = []
    for t in range(T):
        g = x[:, t] @ w_ih + h @ w_hh + b_lstm
        i_g = sigmoid(g[:, :H]); f_g = sigmoid(g[:, H:2 * H])
        g_g = np.tanh(g[:, 2 * H:3 * H]); o_g = sigmoid(g[:, 3 * H:])
        c = f_g * c + i_g * g_g
        h = o_g * np.tanh(c)
        hs.append(prelu(h, alphas[1]))
    v1 = hs[-1]
    res = []
    for i in range(T - 1):
        v2 = hs[i]
        cv = np.concatenate([v1, v2, v1 - v2, v1 * v2], axis=-1)
        cv = prelu(cv, alphas[3 + i])
        res.append(cv @ gin_w[i])
    feat = np.concatenate(res + [v1], axis=-1)
    y = prelu(feat @ w_mlp2, alphas[2])
    return y @ w_fc


# ---------------------------------- driver ------------------------------------
if __name__ == "__main__":
    B, T, IN_DIM, H = 64, 8, 16, 32
    GIN_OUT = 10
    MLP2_IN = 10 * (T - 1) + H          # 102

    key = jax.random.PRNGKey(0)
    ks = jax.random.split(key, 9)
    s = 0.1
    w_mlp1 = s * jax.random.normal(ks[0], (IN_DIM, 32), jnp.float32)
    w_ih = s * jax.random.normal(ks[1], (32, 4 * H), jnp.float32)     # [i|f|g|o]
    w_hh = s * jax.random.normal(ks[2], (H, 4 * H), jnp.float32)
    b_lstm = s * jax.random.normal(ks[3], (1, 4 * H), jnp.float32)    # b_ih + b_hh
    gin_w = s * jax.random.normal(ks[4], (T - 1, 4 * H, GIN_OUT), jnp.float32)
    w_mlp2 = s * jax.random.normal(ks[5], (MLP2_IN, GIN_OUT), jnp.float32)
    w_fc = s * jax.random.normal(ks[6], (GIN_OUT, 1), jnp.float32)
    # PReLU slopes: act1, act2, act3, then one per gin_attn head.
    alphas = 0.25 + 0.05 * jnp.arange(3 + (T - 1), dtype=jnp.float32)

    src = jax.random.normal(ks[7], (B, T, IN_DIM), jnp.float32)
    stock_id = jax.random.randint(ks[8], (B,), 0, 1605)   # unused by forward

    forward = jax.jit(din_attn_forward, static_argnames=("b_tile", "mxu_dtype"))

    # f32 path: correctness gate against the float64 reference.
    out = forward(src, w_mlp1, w_ih, w_hh, b_lstm, gin_w, w_mlp2, w_fc, alphas)
    out = jax.block_until_ready(out)
    ref = reference_numpy(src, w_mlp1, w_ih, w_hh, b_lstm, gin_w, w_mlp2,
                          w_fc, alphas)
    np.testing.assert_allclose(np.asarray(out, np.float64), ref,
                               rtol=5e-3, atol=5e-3)
    assert out.shape == (B, 1)

    # bf16 feed-forward path (recurrence stays f32): the one-time re-check the
    # review asked for, at a tolerance appropriate to bf16 operands.
    out_bf16 = forward(src, w_mlp1, w_ih, w_hh, b_lstm, gin_w, w_mlp2, w_fc,
                       alphas, mxu_dtype=jnp.bfloat16)
    out_bf16 = jax.block_until_ready(out_bf16)
    np.testing.assert_allclose(np.asarray(out_bf16, np.float64), ref,
                               rtol=5e-2, atol=5e-2)

    print("KERNEL_OK")
</pallas_src>

<mosaic_0001>
module attributes {stable_mosaic.version = 11 : i64} {
  func.func @din_attn_kernel(%arg0: i32, %arg1: memref<8x64x16xf32, #tpu.memory_space<vmem>>, %arg2: memref<16x32xf32, #tpu.memory_space<vmem>>, %arg3: memref<32x128xf32, #tpu.memory_space<vmem>>, %arg4: memref<32x128xf32, #tpu.memory_space<vmem>>, %arg5: memref<1x128xf32, #tpu.memory_space<vmem>>, %arg6: memref<1024x10xf32, #tpu.memory_space<vmem>>, %arg7: memref<1x10xf32, #tpu.memory_space<vmem>>, %arg8: memref<10xf32, #tpu.memory_space<smem>>, %arg9: memref<64x1xf32, #tpu.memory_space<vmem>>) attributes {dimension_semantics = [#tpu.dimension_semantics<parallel>], iteration_bounds = array<i64: 1>, scalar_prefetch = 0 : i64, scratch_operands = 0 : i64, tpu.core_type = #tpu.core_type<tc>, window_params = [{transform_indices = @transform_0, window_bounds = array<i64: 8, 64, 16>}, {pipeline_mode = #tpu.pipeline_mode<synchronous>, transform_indices = @transform_1, window_bounds = array<i64: 16, 32>}, {pipeline_mode = #tpu.pipeline_mode<synchronous>, transform_indices = @transform_2, window_bounds = array<i64: 32, 128>}, {pipeline_mode = #tpu.pipeline_mode<synchronous>, transform_indices = @transform_3, window_bounds = array<i64: 32, 128>}, {pipeline_mode = #tpu.pipeline_mode<synchronous>, transform_indices = @transform_4, window_bounds = array<i64: 1, 128>}, {pipeline_mode = #tpu.pipeline_mode<synchronous>, transform_indices = @transform_5, window_bounds = array<i64: 1024, 10>}, {pipeline_mode = #tpu.pipeline_mode<synchronous>, transform_indices = @transform_6, window_bounds = array<i64: 1, 10>}, {transform_indices = @transform_7, window_bounds = array<i64: 10>}, {transform_indices = @transform_8, window_bounds = array<i64: 64, 1>}]} {
    %c0 = arith.constant 0 : index
    %0 = memref.load %arg8[%c0] : memref<10xf32, #tpu.memory_space<smem>>
    %c1 = arith.constant 1 : index
    %1 = memref.load %arg8[%c1] : memref<10xf32, #tpu.memory_space<smem>>
    %c2 = arith.constant 2 : index
    %2 = memref.load %arg8[%c2] : memref<10xf32, #tpu.memory_space<smem>>
    %c0_0 = arith.constant 0 : index
    %c0_1 = arith.constant 0 : index
    %c0_2 = arith.constant 0 : index
    %3 = vector.load %arg1[%c0_0, %c0_1, %c0_2] : memref<8x64x16xf32, #tpu.memory_space<vmem>>, vector<8x64x16xf32>
    %4 = vector.shape_cast %3 : vector<8x64x16xf32> to vector<512x16xf32>
    %c0_3 = arith.constant 0 : index
    %c0_4 = arith.constant 0 : index
    %5 = vector.load %arg2[%c0_3, %c0_4] : memref<16x32xf32, #tpu.memory_space<vmem>>, vector<16x32xf32>
    %cst = arith.constant dense<0.000000e+00> : vector<512x32xf32>
    %6 = tpu.matmul %4, %5, %cst {dimension_numbers = #tpu.dot_dimension_numbers<[1], [0], [0], [1], [0, 0, 1, 1], [], []>} : vector<512x16xf32>, vector<16x32xf32>, vector<512x32xf32> -> vector<512x32xf32>
    %cst_5 = arith.constant 0.000000e+00 : f32
    %7 = vector.broadcast %cst_5 : f32 to vector<512x32xf32>
    %8 = arith.cmpf oge, %6, %7 : vector<512x32xf32>
    %9 = vector.broadcast %0 : f32 to vector<512x32xf32>
    %10 = arith.mulf %9, %6 : vector<512x32xf32>
    %11 = arith.select %8, %6, %10 : vector<512x32xi1>, vector<512x32xf32>
    %c0_6 = arith.constant 0 : index
    %c0_7 = arith.constant 0 : index
    %12 = vector.load %arg3[%c0_6, %c0_7] : memref<32x128xf32, #tpu.memory_space<vmem>>, vector<32x128xf32>
    %cst_8 = arith.constant dense<0.000000e+00> : vector<512x128xf32>
    %13 = tpu.matmul %11, %12, %cst_8 {dimension_numbers = #tpu.dot_dimension_numbers<[1], [0], [0], [1], [0, 0, 1, 1], [], []>} : vector<512x32xf32>, vector<32x128xf32>, vector<512x128xf32> -> vector<512x128xf32>
    %c0_9 = arith.constant 0 : index
    %c0_10 = arith.constant 0 : index
    %14 = vector.load %arg5[%c0_9, %c0_10] : memref<1x128xf32, #tpu.memory_space<vmem>>, vector<1x128xf32>
    %15 = vector.broadcast %14 : vector<1x128xf32> to vector<512x128xf32>
    %16 = arith.addf %13, %15 : vector<512x128xf32>
    %c0_11 = arith.constant 0 : index
    %c0_12 = arith.constant 0 : index
    %17 = vector.load %arg4[%c0_11, %c0_12] : memref<32x128xf32, #tpu.memory_space<vmem>>, vector<32x128xf32>
    %cst_13 = arith.constant 0.000000e+00 : f32
    %18 = vector.broadcast %cst_13 : f32 to vector<64x32xf32>
    %cst_14 = arith.constant 0.000000e+00 : f32
    %19 = vector.broadcast %cst_14 : f32 to vector<64x32xf32>
    %20 = vector.extract_strided_slice %16 {offsets = [0, 0], sizes = [64, 128], strides = [1, 1]} : vector<512x128xf32> to vector<64x128xf32>
    %cst_15 = arith.constant dense<0.000000e+00> : vector<64x128xf32>
    %21 = tpu.matmul %18, %17, %cst_15 {dimension_numbers = #tpu.dot_dimension_numbers<[1], [0], [0], [1], [0, 0, 1, 1], [], []>} : vector<64x32xf32>, vector<32x128xf32>, vector<64x128xf32> -> vector<64x128xf32>
    %22 = arith.addf %20, %21 : vector<64x128xf32>
    %23 = vector.extract_strided_slice %22 {offsets = [0, 0], sizes = [64, 96], strides = [1, 1]} : vector<64x128xf32> to vector<64x96xf32>
    %24 = arith.negf %23 : vector<64x96xf32>
    %25 = math.exp %24 : vector<64x96xf32>
    %cst_16 = arith.constant 1.000000e+00 : f32
    %26 = vector.broadcast %cst_16 : f32 to vector<64x96xf32>
    %27 = arith.addf %26, %25 : vector<64x96xf32>
    %28 = arith.divf %26, %27 : vector<64x96xf32>
    %29 = vector.extract_strided_slice %22 {offsets = [0, 96], sizes = [64, 32], strides = [1, 1]} : vector<64x128xf32> to vector<64x32xf32>
    %30 = math.tanh %29 : vector<64x32xf32>
    %31 = vector.extract_strided_slice %28 {offsets = [0, 0], sizes = [64, 32], strides = [1, 1]} : vector<64x96xf32> to vector<64x32xf32>
    %32 = vector.extract_strided_slice %28 {offsets = [0, 32], sizes = [64, 32], strides = [1, 1]} : vector<64x96xf32> to vector<64x32xf32>
    %33 = vector.extract_strided_slice %28 {offsets = [0, 64], sizes = [64, 32], strides = [1, 1]} : vector<64x96xf32> to vector<64x32xf32>
    %34 = arith.mulf %32, %19 : vector<64x32xf32>
    %35 = arith.mulf %31, %30 : vector<64x32xf32>
    %36 = arith.addf %34, %35 : vector<64x32xf32>
    %37 = math.tanh %36 : vector<64x32xf32>
    %38 = arith.mulf %33, %37 : vector<64x32xf32>
    %cst_17 = arith.constant 0.000000e+00 : f32
    %39 = vector.broadcast %cst_17 : f32 to vector<64x32xf32>
    %40 = arith.cmpf oge, %38, %39 : vector<64x32xf32>
    %41 = vector.broadcast %1 : f32 to vector<64x32xf32>
    %42 = arith.mulf %41, %38 : vector<64x32xf32>
    %43 = arith.select %40, %38, %42 : vector<64x32xi1>, vector<64x32xf32>
    %44 = vector.extract_strided_slice %16 {offsets = [64, 0], sizes = [64, 128], strides = [1, 1]} : vector<512x128xf32> to vector<64x128xf32>
    %cst_18 = arith.constant dense<0.000000e+00> : vector<64x128xf32>
    %45 = tpu.matmul %38, %17, %cst_18 {dimension_numbers = #tpu.dot_dimension_numbers<[1], [0], [0], [1], [0, 0, 1, 1], [], []>} : vector<64x32xf32>, vector<32x128xf32>, vector<64x128xf32> -> vector<64x128xf32>
    %46 = arith.addf %44, %45 : vector<64x128xf32>
    %47 = vector.extract_strided_slice %46 {offsets = [0, 0], sizes = [64, 96], strides = [1, 1]} : vector<64x128xf32> to vector<64x96xf32>
    %48 = arith.negf %47 : vector<64x96xf32>
    %49 = math.exp %48 : vector<64x96xf32>
    %cst_19 = arith.constant 1.000000e+00 : f32
    %50 = vector.broadcast %cst_19 : f32 to vector<64x96xf32>
    %51 = arith.addf %50, %49 : vector<64x96xf32>
    %52 = arith.divf %50, %51 : vector<64x96xf32>
    %53 = vector.extract_strided_slice %46 {offsets = [0, 96], sizes = [64, 32], strides = [1, 1]} : vector<64x128xf32> to vector<64x32xf32>
    %54 = math.tanh %53 : vector<64x32xf32>
    %55 = vector.extract_strided_slice %52 {offsets = [0, 0], sizes = [64, 32], strides = [1, 1]} : vector<64x96xf32> to vector<64x32xf32>
    %56 = vector.extract_strided_slice %52 {offsets = [0, 32], sizes = [64, 32], strides = [1, 1]} : vector<64x96xf32> to vector<64x32xf32>
    %57 = vector.extract_strided_slice %52 {offsets = [0, 64], sizes = [64, 32], strides = [1, 1]} : vector<64x96xf32> to vector<64x32xf32>
    %58 = arith.mulf %56, %36 : vector<64x32xf32>
    %59 = arith.mulf %55, %54 : vector<64x32xf32>
    %60 = arith.addf %58, %59 : vector<64x32xf32>
    %61 = math.tanh %60 : vector<64x32xf32>
    %62 = arith.mulf %57, %61 : vector<64x32xf32>
    %cst_20 = arith.constant 0.000000e+00 : f32
    %63 = vector.broadcast %cst_20 : f32 to vector<64x32xf32>
    %64 = arith.cmpf oge, %62, %63 : vector<64x32xf32>
    %65 = vector.broadcast %1 : f32 to vector<64x32xf32>
    %66 = arith.mulf %65, %62 : vector<64x32xf32>
    %67 = arith.select %64, %62, %66 : vector<64x32xi1>, vector<64x32xf32>
    %68 = vector.extract_strided_slice %16 {offsets = [128, 0], sizes = [64, 128], strides = [1, 1]} : vector<512x128xf32> to vector<64x128xf32>
    %cst_21 = arith.constant dense<0.000000e+00> : vector<64x128xf32>
    %69 = tpu.matmul %62, %17, %cst_21 {dimension_numbers = #tpu.dot_dimension_numbers<[1], [0], [0], [1], [0, 0, 1, 1], [], []>} : vector<64x32xf32>, vector<32x128xf32>, vector<64x128xf32> -> vector<64x128xf32>
    %70 = arith.addf %68, %69 : vector<64x128xf32>
    %71 = vector.extract_strided_slice %70 {offsets = [0, 0], sizes = [64, 96], strides = [1, 1]} : vector<64x128xf32> to vector<64x96xf32>
    %72 = arith.negf %71 : vector<64x96xf32>
    %73 = math.exp %72 : vector<64x96xf32>
    %cst_22 = arith.constant 1.000000e+00 : f32
    %74 = vector.broadcast %cst_22 : f32 to vector<64x96xf32>
    %75 = arith.addf %74, %73 : vector<64x96xf32>
    %76 = arith.divf %74, %75 : vector<64x96xf32>
    %77 = vector.extract_strided_slice %70 {offsets = [0, 96], sizes = [64, 32], strides = [1, 1]} : vector<64x128xf32> to vector<64x32xf32>
    %78 = math.tanh %77 : vector<64x32xf32>
    %79 = vector.extract_strided_slice %76 {offsets = [0, 0], sizes = [64, 32], strides = [1, 1]} : vector<64x96xf32> to vector<64x32xf32>
    %80 = vector.extract_strided_slice %76 {offsets = [0, 32], sizes = [64, 32], strides = [1, 1]} : vector<64x96xf32> to vector<64x32xf32>
    %81 = vector.extract_strided_slice %76 {offsets = [0, 64], sizes = [64, 32], strides = [1, 1]} : vector<64x96xf32> to vector<64x32xf32>
    %82 = arith.mulf %80, %60 : vector<64x32xf32>
    %83 = arith.mulf %79, %78 : vector<64x32xf32>
    %84 = arith.addf %82, %83 : vector<64x32xf32>
    %85 = math.tanh %84 : vector<64x32xf32>
    %86 = arith.mulf %81, %85 : vector<64x32xf32>
    %cst_23 = arith.constant 0.000000e+00 : f32
    %87 = vector.broadcast %cst_23 : f32 to vector<64x32xf32>
    %88 = arith.cmpf oge, %86, %87 : vector<64x32xf32>
    %89 = vector.broadcast %1 : f32 to vector<64x32xf32>
    %90 = arith.mulf %89, %86 : vector<64x32xf32>
    %91 = arith.select %88, %86, %90 : vector<64x32xi1>, vector<64x32xf32>
    %92 = vector.extract_strided_slice %16 {offsets = [192, 0], sizes = [64, 128], strides = [1, 1]} : vector<512x128xf32> to vector<64x128xf32>
    %cst_24 = arith.constant dense<0.000000e+00> : vector<64x128xf32>
    %93 = tpu.matmul %86, %17, %cst_24 {dimension_numbers = #tpu.dot_dimension_numbers<[1], [0], [0], [1], [0, 0, 1, 1], [], []>} : vector<64x32xf32>, vector<32x128xf32>, vector<64x128xf32> -> vector<64x128xf32>
    %94 = arith.addf %92, %93 : vector<64x128xf32>
    %95 = vector.extract_strided_slice %94 {offsets = [0, 0], sizes = [64, 96], strides = [1, 1]} : vector<64x128xf32> to vector<64x96xf32>
    %96 = arith.negf %95 : vector<64x96xf32>
    %97 = math.exp %96 : vector<64x96xf32>
    %cst_25 = arith.constant 1.000000e+00 : f32
    %98 = vector.broadcast %cst_25 : f32 to vector<64x96xf32>
    %99 = arith.addf %98, %97 : vector<64x96xf32>
    %100 = arith.divf %98, %99 : vector<64x96xf32>
    %101 = vector.extract_strided_slice %94 {offsets = [0, 96], sizes = [64, 32], strides = [1, 1]} : vector<64x128xf32> to vector<64x32xf32>
    %102 = math.tanh %101 : vector<64x32xf32>
    %103 = vector.extract_strided_slice %100 {offsets = [0, 0], sizes = [64, 32], strides = [1, 1]} : vector<64x96xf32> to vector<64x32xf32>
    %104 = vector.extract_strided_slice %100 {offsets = [0, 32], sizes = [64, 32], strides = [1, 1]} : vector<64x96xf32> to vector<64x32xf32>
    %105 = vector.extract_strided_slice %100 {offsets = [0, 64], sizes = [64, 32], strides = [1, 1]} : vector<64x96xf32> to vector<64x32xf32>
    %106 = arith.mulf %104, %84 : vector<64x32xf32>
    %107 = arith.mulf %103, %102 : vector<64x32xf32>
    %108 = arith.addf %106, %107 : vector<64x32xf32>
    %109 = math.tanh %108 : vector<64x32xf32>
    %110 = arith.mulf %105, %109 : vector<64x32xf32>
    %cst_26 = arith.constant 0.000000e+00 : f32
    %111 = vector.broadcast %cst_26 : f32 to vector<64x32xf32>
    %112 = arith.cmpf oge, %110, %111 : vector<64x32xf32>
    %113 = vector.broadcast %1 : f32 to vector<64x32xf32>
    %114 = arith.mulf %113, %110 : vector<64x32xf32>
    %115 = arith.select %112, %110, %114 : vector<64x32xi1>, vector<64x32xf32>
    %116 = vector.extract_strided_slice %16 {offsets = [256, 0], sizes = [64, 128], strides = [1, 1]} : vector<512x128xf32> to vector<64x128xf32>
    %cst_27 = arith.constant dense<0.000000e+00> : vector<64x128xf32>
    %117 = tpu.matmul %110, %17, %cst_27 {dimension_numbers = #tpu.dot_dimension_numbers<[1], [0], [0], [1], [0, 0, 1, 1], [], []>} : vector<64x32xf32>, vector<32x128xf32>, vector<64x128xf32> -> vector<64x128xf32>
    %118 = arith.addf %116, %117 : vector<64x128xf32>
    %119 = vector.extract_strided_slice %118 {offsets = [0, 0], sizes = [64, 96], strides = [1, 1]} : vector<64x128xf32> to vector<64x96xf32>
    %120 = arith.negf %119 : vector<64x96xf32>
    %121 = math.exp %120 : vector<64x96xf32>
    %cst_28 = arith.constant 1.000000e+00 : f32
    %122 = vector.broadcast %cst_28 : f32 to vector<64x96xf32>
    %123 = arith.addf %122, %121 : vector<64x96xf32>
    %124 = arith.divf %122, %123 : vector<64x96xf32>
    %125 = vector.extract_strided_slice %118 {offsets = [0, 96], sizes = [64, 32], strides = [1, 1]} : vector<64x128xf32> to vector<64x32xf32>
    %126 = math.tanh %125 : vector<64x32xf32>
    %127 = vector.extract_strided_slice %124 {offsets = [0, 0], sizes = [64, 32], strides = [1, 1]} : vector<64x96xf32> to vector<64x32xf32>
    %128 = vector.extract_strided_slice %124 {offsets = [0, 32], sizes = [64, 32], strides = [1, 1]} : vector<64x96xf32> to vector<64x32xf32>
    %129 = vector.extract_strided_slice %124 {offsets = [0, 64], sizes = [64, 32], strides = [1, 1]} : vector<64x96xf32> to vector<64x32xf32>
    %130 = arith.mulf %128, %108 : vector<64x32xf32>
    %131 = arith.mulf %127, %126 : vector<64x32xf32>
    %132 = arith.addf %130, %131 : vector<64x32xf32>
    %133 = math.tanh %132 : vector<64x32xf32>
    %134 = arith.mulf %129, %133 : vector<64x32xf32>
    %cst_29 = arith.constant 0.000000e+00 : f32
    %135 = vector.broadcast %cst_29 : f32 to vector<64x32xf32>
    %136 = arith.cmpf oge, %134, %135 : vector<64x32xf32>
    %137 = vector.broadcast %1 : f32 to vector<64x32xf32>
    %138 = arith.mulf %137, %134 : vector<64x32xf32>
    %139 = arith.select %136, %134, %138 : vector<64x32xi1>, vector<64x32xf32>
    %140 = vector.extract_strided_slice %16 {offsets = [320, 0], sizes = [64, 128], strides = [1, 1]} : vector<512x128xf32> to vector<64x128xf32>
    %cst_30 = arith.constant dense<0.000000e+00> : vector<64x128xf32>
    %141 = tpu.matmul %134, %17, %cst_30 {dimension_numbers = #tpu.dot_dimension_numbers<[1], [0], [0], [1], [0, 0, 1, 1], [], []>} : vector<64x32xf32>, vector<32x128xf32>, vector<64x128xf32> -> vector<64x128xf32>
    %142 = arith.addf %140, %141 : vector<64x128xf32>
    %143 = vector.extract_strided_slice %142 {offsets = [0, 0], sizes = [64, 96], strides = [1, 1]} : vector<64x128xf32> to vector<64x96xf32>
    %144 = arith.negf %143 : vector<64x96xf32>
    %145 = math.exp %144 : vector<64x96xf32>
    %cst_31 = arith.constant 1.000000e+00 : f32
    %146 = vector.broadcast %cst_31 : f32 to vector<64x96xf32>
    %147 = arith.addf %146, %145 : vector<64x96xf32>
    %148 = arith.divf %146, %147 : vector<64x96xf32>
    %149 = vector.extract_strided_slice %142 {offsets = [0, 96], sizes = [64, 32], strides = [1, 1]} : vector<64x128xf32> to vector<64x32xf32>
    %150 = math.tanh %149 : vector<64x32xf32>
    %151 = vector.extract_strided_slice %148 {offsets = [0, 0], sizes = [64, 32], strides = [1, 1]} : vector<64x96xf32> to vector<64x32xf32>
    %152 = vector.extract_strided_slice %148 {offsets = [0, 32], sizes = [64, 32], strides = [1, 1]} : vector<64x96xf32> to vector<64x32xf32>
    %153 = vector.extract_strided_slice %148 {offsets = [0, 64], sizes = [64, 32], strides = [1, 1]} : vector<64x96xf32> to vector<64x32xf32>
    %154 = arith.mulf %152, %132 : vector<64x32xf32>
    %155 = arith.mulf %151, %150 : vector<64x32xf32>
    %156 = arith.addf %154, %155 : vector<64x32xf32>
    %157 = math.tanh %156 : vector<64x32xf32>
    %158 = arith.mulf %153, %157 : vector<64x32xf32>
    %cst_32 = arith.constant 0.000000e+00 : f32
    %159 = vector.broadcast %cst_32 : f32 to vector<64x32xf32>
    %160 = arith.cmpf oge, %158, %159 : vector<64x32xf32>
    %161 = vector.broadcast %1 : f32 to vector<64x32xf32>
    %162 = arith.mulf %161, %158 : vector<64x32xf32>
    %163 = arith.select %160, %158, %162 : vector<64x32xi1>, vector<64x32xf32>
    %164 = vector.extract_strided_slice %16 {offsets = [384, 0], sizes = [64, 128], strides = [1, 1]} : vector<512x128xf32> to vector<64x128xf32>
    %cst_33 = arith.constant dense<0.000000e+00> : vector<64x128xf32>
    %165 = tpu.matmul %158, %17, %cst_33 {dimension_numbers = #tpu.dot_dimension_numbers<[1], [0], [0], [1], [0, 0, 1, 1], [], []>} : vector<64x32xf32>, vector<32x128xf32>, vector<64x128xf32> -> vector<64x128xf32>
    %166 = arith.addf %164, %165 : vector<64x128xf32>
    %167 = vector.extract_strided_slice %166 {offsets = [0, 0], sizes = [64, 96], strides = [1, 1]} : vector<64x128xf32> to vector<64x96xf32>
    %168 = arith.negf %167 : vector<64x96xf32>
    %169 = math.exp %168 : vector<64x96xf32>
    %cst_34 = arith.constant 1.000000e+00 : f32
    %170 = vector.broadcast %cst_34 : f32 to vector<64x96xf32>
    %171 = arith.addf %170, %169 : vector<64x96xf32>
    %172 = arith.divf %170, %171 : vector<64x96xf32>
    %173 = vector.extract_strided_slice %166 {offsets = [0, 96], sizes = [64, 32], strides = [1, 1]} : vector<64x128xf32> to vector<64x32xf32>
    %174 = math.tanh %173 : vector<64x32xf32>
    %175 = vector.extract_strided_slice %172 {offsets = [0, 0], sizes = [64, 32], strides = [1, 1]} : vector<64x96xf32> to vector<64x32xf32>
    %176 = vector.extract_strided_slice %172 {offsets = [0, 32], sizes = [64, 32], strides = [1, 1]} : vector<64x96xf32> to vector<64x32xf32>
    %177 = vector.extract_strided_slice %172 {offsets = [0, 64], sizes = [64, 32], strides = [1, 1]} : vector<64x96xf32> to vector<64x32xf32>
    %178 = arith.mulf %176, %156 : vector<64x32xf32>
    %179 = arith.mulf %175, %174 : vector<64x32xf32>
    %180 = arith.addf %178, %179 : vector<64x32xf32>
    %181 = math.tanh %180 : vector<64x32xf32>
    %182 = arith.mulf %177, %181 : vector<64x32xf32>
    %cst_35 = arith.constant 0.000000e+00 : f32
    %183 = vector.broadcast %cst_35 : f32 to vector<64x32xf32>
    %184 = arith.cmpf oge, %182, %183 : vector<64x32xf32>
    %185 = vector.broadcast %1 : f32 to vector<64x32xf32>
    %186 = arith.mulf %185, %182 : vector<64x32xf32>
    %187 = arith.select %184, %182, %186 : vector<64x32xi1>, vector<64x32xf32>
    %188 = vector.extract_strided_slice %16 {offsets = [448, 0], sizes = [64, 128], strides = [1, 1]} : vector<512x128xf32> to vector<64x128xf32>
    %cst_36 = arith.constant dense<0.000000e+00> : vector<64x128xf32>
    %189 = tpu.matmul %182, %17, %cst_36 {dimension_numbers = #tpu.dot_dimension_numbers<[1], [0], [0], [1], [0, 0, 1, 1], [], []>} : vector<64x32xf32>, vector<32x128xf32>, vector<64x128xf32> -> vector<64x128xf32>
    %190 = arith.addf %188, %189 : vector<64x128xf32>
    %191 = vector.extract_strided_slice %190 {offsets = [0, 0], sizes = [64, 96], strides = [1, 1]} : vector<64x128xf32> to vector<64x96xf32>
    %192 = arith.negf %191 : vector<64x96xf32>
    %193 = math.exp %192 : vector<64x96xf32>
    %cst_37 = arith.constant 1.000000e+00 : f32
    %194 = vector.broadcast %cst_37 : f32 to vector<64x96xf32>
    %195 = arith.addf %194, %193 : vector<64x96xf32>
    %196 = arith.divf %194, %195 : vector<64x96xf32>
    %197 = vector.extract_strided_slice %190 {offsets = [0, 96], sizes = [64, 32], strides = [1, 1]} : vector<64x128xf32> to vector<64x32xf32>
    %198 = math.tanh %197 : vector<64x32xf32>
    %199 = vector.extract_strided_slice %196 {offsets = [0, 0], sizes = [64, 32], strides = [1, 1]} : vector<64x96xf32> to vector<64x32xf32>
    %200 = vector.extract_strided_slice %196 {offsets = [0, 32], sizes = [64, 32], strides = [1, 1]} : vector<64x96xf32> to vector<64x32xf32>
    %201 = vector.extract_strided_slice %196 {offsets = [0, 64], sizes = [64, 32], strides = [1, 1]} : vector<64x96xf32> to vector<64x32xf32>
    %202 = arith.mulf %200, %180 : vector<64x32xf32>
    %203 = arith.mulf %199, %198 : vector<64x32xf32>
    %204 = arith.addf %202, %203 : vector<64x32xf32>
    %205 = math.tanh %204 : vector<64x32xf32>
    %206 = arith.mulf %201, %205 : vector<64x32xf32>
    %cst_38 = arith.constant 0.000000e+00 : f32
    %207 = vector.broadcast %cst_38 : f32 to vector<64x32xf32>
    %208 = arith.cmpf oge, %206, %207 : vector<64x32xf32>
    %209 = vector.broadcast %1 : f32 to vector<64x32xf32>
    %210 = arith.mulf %209, %206 : vector<64x32xf32>
    %211 = arith.select %208, %206, %210 : vector<64x32xi1>, vector<64x32xf32>
    %212 = arith.subf %211, %43 : vector<64x32xf32>
    %213 = arith.mulf %211, %43 : vector<64x32xf32>
    %214 = tpu.concatenate %211, %43, %212, %213 in 1 : vector<64x32xf32>, vector<64x32xf32>, vector<64x32xf32>, vector<64x32xf32> -> vector<64x128xf32>
    %c3 = arith.constant 3 : index
    %215 = memref.load %arg8[%c3] : memref<10xf32, #tpu.memory_space<smem>>
    %cst_39 = arith.constant 0.000000e+00 : f32
    %216 = vector.broadcast %cst_39 : f32 to vector<64x128xf32>
    %217 = arith.cmpf oge, %214, %216 : vector<64x128xf32>
    %218 = vector.broadcast %215 : f32 to vector<64x128xf32>
    %219 = arith.mulf %218, %214 : vector<64x128xf32>
    %220 = arith.select %217, %214, %219 : vector<64x128xi1>, vector<64x128xf32>
    %221 = arith.subf %211, %67 : vector<64x32xf32>
    %222 = arith.mulf %211, %67 : vector<64x32xf32>
    %223 = tpu.concatenate %211, %67, %221, %222 in 1 : vector<64x32xf32>, vector<64x32xf32>, vector<64x32xf32>, vector<64x32xf32> -> vector<64x128xf32>
    %c4 = arith.constant 4 : index
    %224 = memref.load %arg8[%c4] : memref<10xf32, #tpu.memory_space<smem>>
    %cst_40 = arith.constant 0.000000e+00 : f32
    %225 = vector.broadcast %cst_40 : f32 to vector<64x128xf32>
    %226 = arith.cmpf oge, %223, %225 : vector<64x128xf32>
    %227 = vector.broadcast %224 : f32 to vector<64x128xf32>
    %228 = arith.mulf %227, %223 : vector<64x128xf32>
    %229 = arith.select %226, %223, %228 : vector<64x128xi1>, vector<64x128xf32>
    %230 = arith.subf %211, %91 : vector<64x32xf32>
    %231 = arith.mulf %211, %91 : vector<64x32xf32>
    %232 = tpu.concatenate %211, %91, %230, %231 in 1 : vector<64x32xf32>, vector<64x32xf32>, vector<64x32xf32>, vector<64x32xf32> -> vector<64x128xf32>
    %c5 = arith.constant 5 : index
    %233 = memref.load %arg8[%c5] : memref<10xf32, #tpu.memory_space<smem>>
    %cst_41 = arith.constant 0.000000e+00 : f32
    %234 = vector.broadcast %cst_41 : f32 to vector<64x128xf32>
    %235 = arith.cmpf oge, %232, %234 : vector<64x128xf32>
    %236 = vector.broadcast %233 : f32 to vector<64x128xf32>
    %237 = arith.mulf %236, %232 : vector<64x128xf32>
    %238 = arith.select %235, %232, %237 : vector<64x128xi1>, vector<64x128xf32>
    %239 = arith.subf %211, %115 : vector<64x32xf32>
    %240 = arith.mulf %211, %115 : vector<64x32xf32>
    %241 = tpu.concatenate %211, %115, %239, %240 in 1 : vector<64x32xf32>, vector<64x32xf32>, vector<64x32xf32>, vector<64x32xf32> -> vector<64x128xf32>
    %c6 = arith.constant 6 : index
    %242 = memref.load %arg8[%c6] : memref<10xf32, #tpu.memory_space<smem>>
    %cst_42 = arith.constant 0.000000e+00 : f32
    %243 = vector.broadcast %cst_42 : f32 to vector<64x128xf32>
    %244 = arith.cmpf oge, %241, %243 : vector<64x128xf32>
    %245 = vector.broadcast %242 : f32 to vector<64x128xf32>
    %246 = arith.mulf %245, %241 : vector<64x128xf32>
    %247 = arith.select %244, %241, %246 : vector<64x128xi1>, vector<64x128xf32>
    %248 = arith.subf %211, %139 : vector<64x32xf32>
    %249 = arith.mulf %211, %139 : vector<64x32xf32>
    %250 = tpu.concatenate %211, %139, %248, %249 in 1 : vector<64x32xf32>, vector<64x32xf32>, vector<64x32xf32>, vector<64x32xf32> -> vector<64x128xf32>
    %c7 = arith.constant 7 : index
    %251 = memref.load %arg8[%c7] : memref<10xf32, #tpu.memory_space<smem>>
    %cst_43 = arith.constant 0.000000e+00 : f32
    %252 = vector.broadcast %cst_43 : f32 to vector<64x128xf32>
    %253 = arith.cmpf oge, %250, %252 : vector<64x128xf32>
    %254 = vector.broadcast %251 : f32 to vector<64x128xf32>
    %255 = arith.mulf %254, %250 : vector<64x128xf32>
    %256 = arith.select %253, %250, %255 : vector<64x128xi1>, vector<64x128xf32>
    %257 = arith.subf %211, %163 : vector<64x32xf32>
    %258 = arith.mulf %211, %163 : vector<64x32xf32>
    %259 = tpu.concatenate %211, %163, %257, %258 in 1 : vector<64x32xf32>, vector<64x32xf32>, vector<64x32xf32>, vector<64x32xf32> -> vector<64x128xf32>
    %c8 = arith.constant 8 : index
    %260 = memref.load %arg8[%c8] : memref<10xf32, #tpu.memory_space<smem>>
    %cst_44 = arith.constant 0.000000e+00 : f32
    %261 = vector.broadcast %cst_44 : f32 to vector<64x128xf32>
    %262 = arith.cmpf oge, %259, %261 : vector<64x128xf32>
    %263 = vector.broadcast %260 : f32 to vector<64x128xf32>
    %264 = arith.mulf %263, %259 : vector<64x128xf32>
    %265 = arith.select %262, %259, %264 : vector<64x128xi1>, vector<64x128xf32>
    %266 = arith.subf %211, %187 : vector<64x32xf32>
    %267 = arith.mulf %211, %187 : vector<64x32xf32>
    %268 = tpu.concatenate %211, %187, %266, %267 in 1 : vector<64x32xf32>, vector<64x32xf32>, vector<64x32xf32>, vector<64x32xf32> -> vector<64x128xf32>
    %c9 = arith.constant 9 : index
    %269 = memref.load %arg8[%c9] : memref<10xf32, #tpu.memory_space<smem>>
    %cst_45 = arith.constant 0.000000e+00 : f32
    %270 = vector.broadcast %cst_45 : f32 to vector<64x128xf32>
    %271 = arith.cmpf oge, %268, %270 : vector<64x128xf32>
    %272 = vector.broadcast %269 : f32 to vector<64x128xf32>
    %273 = arith.mulf %272, %268 : vector<64x128xf32>
    %274 = arith.select %271, %268, %273 : vector<64x128xi1>, vector<64x128xf32>
    %275 = arith.subf %211, %211 : vector<64x32xf32>
    %276 = arith.mulf %211, %211 : vector<64x32xf32>
    %277 = tpu.concatenate %211, %211, %275, %276 in 1 : vector<64x32xf32>, vector<64x32xf32>, vector<64x32xf32>, vector<64x32xf32> -> vector<64x128xf32>
    %278 = tpu.concatenate %220, %229, %238, %247, %256, %265, %274, %277 in 1 : vector<64x128xf32>, vector<64x128xf32>, vector<64x128xf32>, vector<64x128xf32>, vector<64x128xf32>, vector<64x128xf32>, vector<64x128xf32>, vector<64x128xf32> -> vector<64x1024xf32>
    %c0_46 = arith.constant 0 : index
    %c0_47 = arith.constant 0 : index
    %279 = vector.load %arg6[%c0_46, %c0_47] : memref<1024x10xf32, #tpu.memory_space<vmem>>, vector<1024x10xf32>
    %cst_48 = arith.constant dense<0.000000e+00> : vector<64x10xf32>
    %280 = tpu.matmul %278, %279, %cst_48 {dimension_numbers = #tpu.dot_dimension_numbers<[1], [0], [0], [1], [0, 0, 1, 1], [], []>} : vector<64x1024xf32>, vector<1024x10xf32>, vector<64x10xf32> -> vector<64x10xf32>
    %cst_49 = arith.constant 0.000000e+00 : f32
    %281 = vector.broadcast %cst_49 : f32 to vector<64x10xf32>
    %282 = arith.cmpf oge, %280, %281 : vector<64x10xf32>
    %283 = vector.broadcast %2 : f32 to vector<64x10xf32>
    %284 = arith.mulf %283, %280 : vector<64x10xf32>
    %285 = arith.select %282, %280, %284 : vector<64x10xi1>, vector<64x10xf32>
    %c0_50 = arith.constant 0 : index
    %c0_51 = arith.constant 0 : index
    %286 = vector.load %arg7[%c0_50, %c0_51] : memref<1x10xf32, #tpu.memory_space<vmem>>, vector<1x10xf32>
    %287 = vector.broadcast %286 : vector<1x10xf32> to vector<64x10xf32>
    %288 = arith.mulf %285, %287 : vector<64x10xf32>
    %cst_52 = arith.constant dense<0.000000e+00> : vector<64xf32>
    %289 = vector.multi_reduction <add>, %288, %cst_52 [1] : vector<64x10xf32> to vector<64xf32>
    %290 = vector.shape_cast %289 : vector<64xf32> to vector<64x1xf32>
    %c0_53 = arith.constant 0 : index
    %c0_54 = arith.constant 0 : index
    %291 = vector.load %arg9[%c0_53, %c0_54] : memref<64x1xf32, #tpu.memory_space<vmem>>, vector<64x1xf32>
    tpu.vector_store %arg9[%c0_53, %c0_54], %290 {strides = array<i32>} : memref<64x1xf32, #tpu.memory_space<vmem>>, vector<64x1xf32>,
    return
  }
  func.func @transform_0(%arg0: i32) -> (i32, i32, i32) {
    %c0_i32 = arith.constant 0 : i32
    %c0_i32_0 = arith.constant 0 : i32
    %c0_i32_1 = arith.constant 0 : i32
    return %c0_i32, %arg0, %c0_i32_0 : i32, i32, i32
  }
  func.func @transform_1(%arg0: i32) -> (i32, i32) {
    %c0_i32 = arith.constant 0 : i32
    %c0_i32_0 = arith.constant 0 : i32
    %c0_i32_1 = arith.constant 0 : i32
    return %c0_i32, %c0_i32_0 : i32, i32
  }
  func.func @transform_2(%arg0: i32) -> (i32, i32) {
    %c0_i32 = arith.constant 0 : i32
    %c0_i32_0 = arith.constant 0 : i32
    %c0_i32_1 = arith.constant 0 : i32
    return %c0_i32, %c0_i32_0 : i32, i32
  }
  func.func @transform_3(%arg0: i32) -> (i32, i32) {
    %c0_i32 = arith.constant 0 : i32
    %c0_i32_0 = arith.constant 0 : i32
    %c0_i32_1 = arith.constant 0 : i32
    return %c0_i32, %c0_i32_0 : i32, i32
  }
  func.func @transform_4(%arg0: i32) -> (i32, i32) {
    %c0_i32 = arith.constant 0 : i32
    %c0_i32_0 = arith.constant 0 : i32
    %c0_i32_1 = arith.constant 0 : i32
    return %c0_i32, %c0_i32_0 : i32, i32
  }
  func.func @transform_5(%arg0: i32) -> (i32, i32) {
    %c0_i32 = arith.constant 0 : i32
    %c0_i32_0 = arith.constant 0 : i32
    %c0_i32_1 = arith.constant 0 : i32
    return %c0_i32, %c0_i32_0 : i32, i32
  }
  func.func @transform_6(%arg0: i32) -> (i32, i32) {
    %c0_i32 = arith.constant 0 : i32
    %c0_i32_0 = arith.constant 0 : i32
    %c0_i32_1 = arith.constant 0 : i32
    return %c0_i32, %c0_i32_0 : i32, i32
  }
  func.func @transform_7(%arg0: i32) -> i32 {
    %c0_i32 = arith.constant 0 : i32
    %c0_i32_0 = arith.constant 0 : i32
    return %c0_i32 : i32
  }
  func.func @transform_8(%arg0: i32) -> (i32, i32) {
    %c0_i32 = arith.constant 0 : i32
    %c0_i32_0 = arith.constant 0 : i32
    return %arg0, %c0_i32 : i32, i32
  }
}

</mosaic_0001>

<llo_original>
// kernel: din_attn_forward.1
$region0: #{din_attn_forward.1}
  #allocation0 [shape = 'u32[]', space=smem, size = 0x4, offset = 0x4, fixed_abs, tag = 'smem constant byte address 0x4 - core index']
  #allocation1 [shape = 'u32[144,128]{1,0:T(1,128)}', space=vmem, size = 0x12000, scoped, tag = 'internal scratch']
  %s0 = inlined_call_operand.vmem [shape: f32[8,64,16], index: 0, kind: input, shape index: {}]
  %s1 = inlined_call_operand.vmem [shape: f32[16,32], index: 1, kind: input, shape index: {}]
  %s2 = inlined_call_operand.vmem [shape: f32[32,128], index: 2, kind: input, shape index: {}]
  %s3 = inlined_call_operand.vmem [shape: f32[32,128], index: 3, kind: input, shape index: {}]
  %s4 = inlined_call_operand.vmem [shape: f32[1,128], index: 4, kind: input, shape index: {}]
  %s5 = inlined_call_operand.vmem [shape: f32[1024,10], index: 5, kind: input, shape index: {}]
  %s6 = inlined_call_operand.vmem [shape: f32[1,10], index: 6, kind: input, shape index: {}]
  %s7 = inlined_call_operand.vmem [shape: f32[10], index: 7, kind: input, shape index: {}]
  %s8 = inlined_call_operand.vmem [shape: f32[64,1], index: 8, kind: output, shape index: {}]
  %s9 = sld [smem:[#allocation0]]
  $region46: #{din_attn_forward.1} parent=0
    _
  %s11 = ssub.s32 1, %s9
  %s12 = scalar_select 0, %s11, %s9
  $region1: #{din_attn_forward.1} parent=0
    #allocation2 [shape = 'u8[512]{0}', space=smem, size = 0x200, scoped, tag = 'input window, operand 7, single buffered']
    #allocation3 [shape = 's32[1]{0}', space=sflag, size = 0x4, scoped, tag = 'scoped memory for din_attn_forward.1']
    %13 = vsyncpa [#allocation3], 0
    // Predicated region
    $region2: #{din_attn_forward.1} parent=1 // pred_check
      _
    $region3: #{din_attn_forward.1} parent=1 // pred_check_branch
      %15 = sbr.rel (0) target = $region5
    $region4: #{din_attn_forward.1} parent=1 // pred_region
      _
    $region5: #{din_attn_forward.1} parent=1 // pred_fallthru
      _
    // Predicated region
    $region6: #{din_attn_forward.1} parent=1 // pred_check
      _
    $region7: #{din_attn_forward.1} parent=1 // pred_check_branch
      %17 = sbr.rel (0) target = $region9
    $region8: #{din_attn_forward.1} parent=1 // pred_region
      _
    $region9: #{din_attn_forward.1} parent=1 // pred_fallthru
      _
    // Predicated region
    $region10: #{din_attn_forward.1} parent=1 // pred_check
      _
    $region11: #{din_attn_forward.1} parent=1 // pred_check_branch
      %19 = sbr.rel (0) target = $region13
    $region12: #{din_attn_forward.1} parent=1 // pred_region
      _
    $region13: #{din_attn_forward.1} parent=1 // pred_fallthru
      _
    // Predicated region
    $region14: #{din_attn_forward.1} parent=1 // pred_check
      _
    $region15: #{din_attn_forward.1} parent=1 // pred_check_branch
      %21 = sbr.rel (0) target = $region17
    $region16: #{din_attn_forward.1} parent=1 // pred_region
      _
    $region17: #{din_attn_forward.1} parent=1 // pred_fallthru
      _
    // Predicated region
    $region18: #{din_attn_forward.1} parent=1 // pred_check
      _
    $region19: #{din_attn_forward.1} parent=1 // pred_check_branch
      %23 = sbr.rel (0) target = $region21
    $region20: #{din_attn_forward.1} parent=1 // pred_region
      _
    $region21: #{din_attn_forward.1} parent=1 // pred_fallthru
      _
    // Predicated region
    $region22: #{din_attn_forward.1} parent=1 // pred_check
      _
    $region23: #{din_attn_forward.1} parent=1 // pred_check_branch
      %25 = sbr.rel (0) target = $region25
    $region24: #{din_attn_forward.1} parent=1 // pred_region
      _
    $region25: #{din_attn_forward.1} parent=1 // pred_fallthru
      _
    // Predicated region
    $region26: #{din_attn_forward.1} parent=1 // pred_check
      _
    $region27: #{din_attn_forward.1} parent=1 // pred_check_branch
      %27 = sbr.rel (0) target = $region29
    $region28: #{din_attn_forward.1} parent=1 // pred_region
      _
    $region29: #{din_attn_forward.1} parent=1 // pred_fallthru
      _
    // Predicated region
    $region30: #{din_attn_forward.1} parent=1 // pred_check
      _
    $region31: #{din_attn_forward.1} parent=1 // pred_check_branch
      %29 = sbr.rel (0) target = $region33
    $region32: #{din_attn_forward.1} parent=1 // pred_region
      %s31 = ssub.s32 16, 16
      %32 = vsyncadd [#allocation3], %s31
      %s34 = sshll.u32 %s7, 4
      %s35 = int_to_ptr.vmem [resolvable:$true] %s34
      %37 = dma.vmem_to_smem %s35, 16, [#allocation2], [#allocation3]
    $region33: #{din_attn_forward.1} parent=1 // pred_fallthru
      _
    // Predicated region
    $region34: #{din_attn_forward.1} parent=1 // pred_check
      _
    $region35: #{din_attn_forward.1} parent=1 // pred_check_branch
      %39 = sbr.rel (0) target = $region37
    $region36: #{din_attn_forward.1} parent=1 // pred_region
      %40 = dma.done [#allocation3], 16
    $region37: #{din_attn_forward.1} parent=1 // pred_fallthru
      _
    %41 = sfence
    %s42 = sld [smem:[#allocation2]]
    %s43 = sld [smem:[#allocation2 + $0x1]]
    %s44 = sld [smem:[#allocation2 + $0x2]]
    %v45 = vld [vmem:[%s0] sm:$0xff]
    %v46 = vld [vmem:[%s0 + $0x8] sm:$0xff]
    %v47 = vld [vmem:[%s0 + $0x10] sm:$0xff]
    %v48 = vld [vmem:[%s0 + $0x18] sm:$0xff]
    %v49 = vld [vmem:[%s0 + $0x20] sm:$0xff]
    %v50 = vld [vmem:[%s0 + $0x28] sm:$0xff]
    %v51 = vld [vmem:[%s0 + $0x30] sm:$0xff]
    %v52 = vld [vmem:[%s0 + $0x38] sm:$0xff]
    %v53 = vld [vmem:[%s0 + $0x40] sm:$0xff]
    %v54 = vld [vmem:[%s0 + $0x48] sm:$0xff]
    %v55 = vld [vmem:[%s0 + $0x50] sm:$0xff]
    %v56 = vld [vmem:[%s0 + $0x58] sm:$0xff]
    %v57 = vld [vmem:[%s0 + $0x60] sm:$0xff]
    %v58 = vld [vmem:[%s0 + $0x68] sm:$0xff]
    %v59 = vld [vmem:[%s0 + $0x70] sm:$0xff]
    %v60 = vld [vmem:[%s0 + $0x78] sm:$0xff]
    %v61 = vld [vmem:[%s0 + $0x80] sm:$0xff]
    %v62 = vld [vmem:[%s0 + $0x88] sm:$0xff]
    %v63 = vld [vmem:[%s0 + $0x90] sm:$0xff]
    %v64 = vld [vmem:[%s0 + $0x98] sm:$0xff]
    %v65 = vld [vmem:[%s0 + $0xa0] sm:$0xff]
    %v66 = vld [vmem:[%s0 + $0xa8] sm:$0xff]
    %v67 = vld [vmem:[%s0 + $0xb0] sm:$0xff]
    %v68 = vld [vmem:[%s0 + $0xb8] sm:$0xff]
    %v69 = vld [vmem:[%s0 + $0xc0] sm:$0xff]
    %v70 = vld [vmem:[%s0 + $0xc8] sm:$0xff]
    %v71 = vld [vmem:[%s0 + $0xd0] sm:$0xff]
    %v72 = vld [vmem:[%s0 + $0xd8] sm:$0xff]
    %v73 = vld [vmem:[%s0 + $0xe0] sm:$0xff]
    %v74 = vld [vmem:[%s0 + $0xe8] sm:$0xff]
    %v75 = vld [vmem:[%s0 + $0xf0] sm:$0xff]
    %v76 = vld [vmem:[%s0 + $0xf8] sm:$0xff]
    %v77 = vld [vmem:[%s0 + $0x100] sm:$0xff]
    %v78 = vld [vmem:[%s0 + $0x108] sm:$0xff]
    %v79 = vld [vmem:[%s0 + $0x110] sm:$0xff]
    %v80 = vld [vmem:[%s0 + $0x118] sm:$0xff]
    %v81 = vld [vmem:[%s0 + $0x120] sm:$0xff]
    %v82 = vld [vmem:[%s0 + $0x128] sm:$0xff]
    %v83 = vld [vmem:[%s0 + $0x130] sm:$0xff]
    %v84 = vld [vmem:[%s0 + $0x138] sm:$0xff]
    %v85 = vld [vmem:[%s0 + $0x140] sm:$0xff]
    %v86 = vld [vmem:[%s0 + $0x148] sm:$0xff]
    %v87 = vld [vmem:[%s0 + $0x150] sm:$0xff]
    %v88 = vld [vmem:[%s0 + $0x158] sm:$0xff]
    %v89 = vld [vmem:[%s0 + $0x160] sm:$0xff]
    %v90 = vld [vmem:[%s0 + $0x168] sm:$0xff]
    %v91 = vld [vmem:[%s0 + $0x170] sm:$0xff]
    %v92 = vld [vmem:[%s0 + $0x178] sm:$0xff]
    %v93 = vld [vmem:[%s0 + $0x180] sm:$0xff]
    %v94 = vld [vmem:[%s0 + $0x188] sm:$0xff]
    %v95 = vld [vmem:[%s0 + $0x190] sm:$0xff]
    %v96 = vld [vmem:[%s0 + $0x198] sm:$0xff]
    %v97 = vld [vmem:[%s0 + $0x1a0] sm:$0xff]
    %v98 = vld [vmem:[%s0 + $0x1a8] sm:$0xff]
    %v99 = vld [vmem:[%s0 + $0x1b0] sm:$0xff]
    %v100 = vld [vmem:[%s0 + $0x1b8] sm:$0xff]
    %v101 = vld [vmem:[%s0 + $0x1c0] sm:$0xff]
    %v102 = vld [vmem:[%s0 + $0x1c8] sm:$0xff]
    %v103 = vld [vmem:[%s0 + $0x1d0] sm:$0xff]
    %v104 = vld [vmem:[%s0 + $0x1d8] sm:$0xff]
    %v105 = vld [vmem:[%s0 + $0x1e0] sm:$0xff]
    %v106 = vld [vmem:[%s0 + $0x1e8] sm:$0xff]
    %v107 = vld [vmem:[%s0 + $0x1f0] sm:$0xff]
    %v108 = vld [vmem:[%s0 + $0x1f8] sm:$0xff]
    %v109 = vld [vmem:[%s1] sm:$0xff]
    %v110 = vld [vmem:[%s1 + $0x8] sm:$0xff]
    %vm111 = vcmask 130048
    %v113 = vsel %vm111, %v45, 0
    %v116 = vsel %vm111, %v46, 0
    %v119 = vsel %vm111, %v47, 0
    %v122 = vsel %vm111, %v48, 0
    %v125 = vsel %vm111, %v49, 0
    %v128 = vsel %vm111, %v50, 0
    %v131 = vsel %vm111, %v51, 0
    %v134 = vsel %vm111, %v52, 0
    %v137 = vsel %vm111, %v53, 0
    %v140 = vsel %vm111, %v54, 0
    %v143 = vsel %vm111, %v55, 0
    %v146 = vsel %vm111, %v56, 0
    %v149 = vsel %vm111, %v57, 0
    %v152 = vsel %vm111, %v58, 0
    %v155 = vsel %vm111, %v59, 0
    %v158 = vsel %vm111, %v60, 0
    %v161 = vsel %vm111, %v61, 0
    %v164 = vsel %vm111, %v62, 0
    %v167 = vsel %vm111, %v63, 0
    %v170 = vsel %vm111, %v64, 0
    %v173 = vsel %vm111, %v65, 0
    %v176 = vsel %vm111, %v66, 0
    %v179 = vsel %vm111, %v67, 0
    %v182 = vsel %vm111, %v68, 0
    %v185 = vsel %vm111, %v69, 0
    %v188 = vsel %vm111, %v70, 0
    %v191 = vsel %vm111, %v71, 0
    %v194 = vsel %vm111, %v72, 0
    %v197 = vsel %vm111, %v73, 0
    %v200 = vsel %vm111, %v74, 0
    %v203 = vsel %vm111, %v75, 0
    %v206 = vsel %vm111, %v76, 0
    %v209 = vsel %vm111, %v77, 0
    %v212 = vsel %vm111, %v78, 0
    %v215 = vsel %vm111, %v79, 0
    %v218 = vsel %vm111, %v80, 0
    %v221 = vsel %vm111, %v81, 0
    %v224 = vsel %vm111, %v82, 0
    %v227 = vsel %vm111, %v83, 0
    %v230 = vsel %vm111, %v84, 0
    %v233 = vsel %vm111, %v85, 0
    %v236 = vsel %vm111, %v86, 0
    %v239 = vsel %vm111, %v87, 0
    %v242 = vsel %vm111, %v88, 0
    %v245 = vsel %vm111, %v89, 0
    %v248 = vsel %vm111, %v90, 0
    %v251 = vsel %vm111, %v91, 0
    %v254 = vsel %vm111, %v92, 0
    %v257 = vsel %vm111, %v93, 0
    %v260 = vsel %vm111, %v94, 0
    %v263 = vsel %vm111, %v95, 0
    %v266 = vsel %vm111, %v96, 0
    %v269 = vsel %vm111, %v97, 0
    %v272 = vsel %vm111, %v98, 0
    %v275 = vsel %vm111, %v99, 0
    %v278 = vsel %vm111, %v100, 0
    %v281 = vsel %vm111, %v101, 0
    %v284 = vsel %vm111, %v102, 0
    %v287 = vsel %vm111, %v103, 0
    %v290 = vsel %vm111, %v104, 0
    %v293 = vsel %vm111, %v105, 0
    %v296 = vsel %vm111, %v106, 0
    %v299 = vsel %vm111, %v107, 0
    %v302 = vsel %vm111, %v108, 0
    %304 = vmatprep.subr.mxu0 0.0
    %305 = vmatpush1.msra.mxu0 0.0
    %306 = vmatprep.subr.mxu0 0.0
    %307 = vmatpush1.msra.mxu0 0.0
    %308 = vmatprep.subr.mxu0 0.0
    %309 = vmatpush1.msra.mxu0 0.0
    %310 = vmatprep.subr.mxu0 0.0
    %311 = vmatpush1.msra.mxu0 0.0
    %312 = vmatprep.subr.mxu0 0.0
    %313 = vmatpush1.msra.mxu0 0.0
    %314 = vmatprep.subr.mxu0 0.0
    %315 = vmatpush1.msra.mxu0 0.0
    %316 = vmatprep.subr.mxu0 0.0
    %317 = vmatpush1.msra.mxu0 0.0
    %318 = vmatprep.subr.mxu0 0.0
    %319 = vmatpush1.msra.mxu0 0.0
    %320 = vmatprep.subr.mxu0 0.0
    %321 = vmatpush1.msra.mxu0 0.0
    %322 = vmatprep.subr.mxu0 0.0
    %323 = vmatpush1.msra.mxu0 0.0
    %324 = vmatprep.subr.mxu0 0.0
    %325 = vmatpush1.msra.mxu0 0.0
    %326 = vmatprep.subr.mxu0 0.0
    %327 = vmatpush1.msra.mxu0 0.0
    %328 = vmatprep.subr.mxu0 0.0
    %329 = vmatpush1.msra.mxu0 0.0
    %330 = vmatprep.subr.mxu0 0.0
    %331 = vmatpush1.msra.mxu0 0.0
    %332 = vmatprep.subr.mxu0 0.0
    %333 = vmatpush1.msra.mxu0 %v110
    %334 = vmatprep.subr.mxu0 0.0
    %335 = vmatpush1.msra.mxu0 %v109
    %336 = vmatprep.subr.mxu0 0.0
    %337 = vmatpush2.msra.mxu0 0.0
    %338 = vmatprep.subr.mxu0 0.0
    %339 = vmatpush2.msra.mxu0 0.0
    %340 = vmatprep.subr.mxu0 0.0
    %341 = vmatpush2.msra.mxu0 0.0
    %342 = vmatprep.subr.mxu0 0.0
    %343 = vmatpush2.msra.mxu0 0.0
    %344 = vmatprep.subr.mxu0 0.0
    %345 = vmatpush2.msra.mxu0 0.0
    %346 = vmatprep.subr.mxu0 0.0
    %347 = vmatpush2.msra.mxu0 0.0
    %348 = vmatprep.subr.mxu0 0.0
    %349 = vmatpush2.msra.mxu0 0.0
    %350 = vmatprep.subr.mxu0 0.0
    %351 = vmatpush2.msra.mxu0 0.0
    %352 = vmatprep.subr.mxu0 0.0
    %353 = vmatpush2.msra.mxu0 0.0
    %354 = vmatprep.subr.mxu0 0.0
    %355 = vmatpush2.msra.mxu0 0.0
    %356 = vmatprep.subr.mxu0 0.0
    %357 = vmatpush2.msra.mxu0 0.0
    %358 = vmatprep.subr.mxu0 0.0
    %359 = vmatpush2.msra.mxu0 0.0
    %360 = vmatprep.subr.mxu0 0.0
    %361 = vmatpush2.msra.mxu0 0.0
    %362 = vmatprep.subr.mxu0 0.0
    %363 = vmatpush2.msra.mxu0 0.0
    %364 = vmatprep.subr.mxu0 0.0
    %365 = vmatpush2.msra.mxu0 0.0
    %366 = vmatprep.subr.mxu0 0.0
    %367 = vmatpush2.msra.mxu0 0.0
    %368 = vmatprep.mubr.f32.mxu0 0.0
    %369 = vmatmul.mubr.f32.gmra.mxu0 %v113
    %v370 = vpop.f32.mrf.mxu0
    %v371 = vadd.f32 0.0, %v370
    %v372 = vpop.f32.mrf.mxu0
    %373 = vmatprep.mubr.f32.mxu0 0.0
    %374 = vmatmul.mubr.f32.gmra.mxu0 %v116
    %v375 = vpop.f32.mrf.mxu0
    %v376 = vadd.f32 0.0, %v375
    %v377 = vpop.f32.mrf.mxu0
    %378 = vmatprep.mubr.f32.mxu0 0.0
    %379 = vmatmul.mubr.f32.gmra.mxu0 %v119
    %v380 = vpop.f32.mrf.mxu0
    %v381 = vadd.f32 0.0, %v380
    %v382 = vpop.f32.mrf.mxu0
    %383 = vmatprep.mubr.f32.mxu0 0.0
    %384 = vmatmul.mubr.f32.gmra.mxu0 %v122
    %v385 = vpop.f32.mrf.mxu0
    %v386 = vadd.f32 0.0, %v385
    %v387 = vpop.f32.mrf.mxu0
    %388 = vmatprep.mubr.f32.mxu0 0.0
    %389 = vmatmul.mubr.f32.gmra.mxu0 %v125
    %v390 = vpop.f32.mrf.mxu0
    %v391 = vadd.f32 0.0, %v390
    %v392 = vpop.f32.mrf.mxu0
    %393 = vmatprep.mubr.f32.mxu0 0.0
    %394 = vmatmul.mubr.f32.gmra.mxu0 %v128
    %v395 = vpop.f32.mrf.mxu0
    %v396 = vadd.f32 0.0, %v395
    %v397 = vpop.f32.mrf.mxu0
    %398 = vmatprep.mubr.f32.mxu0 0.0
    %399 = vmatmul.mubr.f32.gmra.mxu0 %v131
    %v400 = vpop.f32.mrf.mxu0
    %v401 = vadd.f32 0.0, %v400
    %v402 = vpop.f32.mrf.mxu0
    %403 = vmatprep.mubr.f32.mxu0 0.0
    %404 = vmatmul.mubr.f32.gmra.mxu0 %v134
    %v405 = vpop.f32.mrf.mxu0
    %v406 = vadd.f32 0.0, %v405
    %v407 = vpop.f32.mrf.mxu0
    %408 = vmatprep.mubr.f32.mxu0 0.0
    %409 = vmatmul.mubr.f32.gmra.mxu0 %v137
    %v410 = vpop.f32.mrf.mxu0
    %v411 = vadd.f32 0.0, %v410
    %v412 = vpop.f32.mrf.mxu0
    %413 = vmatprep.mubr.f32.mxu0 0.0
    %414 = vmatmul.mubr.f32.gmra.mxu0 %v140
    %v415 = vpop.f32.mrf.mxu0
    %v416 = vadd.f32 0.0, %v415
    %v417 = vpop.f32.mrf.mxu0
    %418 = vmatprep.mubr.f32.mxu0 0.0
    %419 = vmatmul.mubr.f32.gmra.mxu0 %v143
    %v420 = vpop.f32.mrf.mxu0
    %v421 = vadd.f32 0.0, %v420
    %v422 = vpop.f32.mrf.mxu0
    %423 = vmatprep.mubr.f32.mxu0 0.0
    %424 = vmatmul.mubr.f32.gmra.mxu0 %v146
    %v425 = vpop.f32.mrf.mxu0
    %v426 = vadd.f32 0.0, %v425
    %v427 = vpop.f32.mrf.mxu0
    %428 = vmatprep.mubr.f32.mxu0 0.0
    %429 = vmatmul.mubr.f32.gmra.mxu0 %v149
    %v430 = vpop.f32.mrf.mxu0
    %v431 = vadd.f32 0.0, %v430
    %v432 = vpop.f32.mrf.mxu0
    %433 = vmatprep.mubr.f32.mxu0 0.0
    %434 = vmatmul.mubr.f32.gmra.mxu0 %v152
    %v435 = vpop.f32.mrf.mxu0
    %v436 = vadd.f32 0.0, %v435
    %v437 = vpop.f32.mrf.mxu0
    %438 = vmatprep.mubr.f32.mxu0 0.0
    %439 = vmatmul.mubr.f32.gmra.mxu0 %v155
    %v440 = vpop.f32.mrf.mxu0
    %v441 = vadd.f32 0.0, %v440
    %v442 = vpop.f32.mrf.mxu0
    %443 = vmatprep.mubr.f32.mxu0 0.0
    %444 = vmatmul.mubr.f32.gmra.mxu0 %v158
    %v445 = vpop.f32.mrf.mxu0
    %v446 = vadd.f32 0.0, %v445
    %v447 = vpop.f32.mrf.mxu0
    %448 = vmatprep.mubr.f32.mxu0 0.0
    %449 = vmatmul.mubr.f32.gmra.mxu0 %v161
    %v450 = vpop.f32.mrf.mxu0
    %v451 = vadd.f32 0.0, %v450
    %v452 = vpop.f32.mrf.mxu0
    %453 = vmatprep.mubr.f32.mxu0 0.0
    %454 = vmatmul.mubr.f32.gmra.mxu0 %v164
    %v455 = vpop.f32.mrf.mxu0
    %v456 = vadd.f32 0.0, %v455
    %v457 = vpop.f32.mrf.mxu0
    %458 = vmatprep.mubr.f32.mxu0 0.0
    %459 = vmatmul.mubr.f32.gmra.mxu0 %v167
    %v460 = vpop.f32.mrf.mxu0
    %v461 = vadd.f32 0.0, %v460
    %v462 = vpop.f32.mrf.mxu0
    %463 = vmatprep.mubr.f32.mxu0 0.0
    %464 = vmatmul.mubr.f32.gmra.mxu0 %v170
    %v465 = vpop.f32.mrf.mxu0
    %v466 = vadd.f32 0.0, %v465
    %v467 = vpop.f32.mrf.mxu0
    %468 = vmatprep.mubr.f32.mxu0 0.0
    %469 = vmatmul.mubr.f32.gmra.mxu0 %v173
    %v470 = vpop.f32.mrf.mxu0
    %v471 = vadd.f32 0.0, %v470
    %v472 = vpop.f32.mrf.mxu0
    %473 = vmatprep.mubr.f32.mxu0 0.0
    %474 = vmatmul.mubr.f32.gmra.mxu0 %v176
    %v475 = vpop.f32.mrf.mxu0
    %v476 = vadd.f32 0.0, %v475
    %v477 = vpop.f32.mrf.mxu0
    %478 = vmatprep.mubr.f32.mxu0 0.0
    %479 = vmatmul.mubr.f32.gmra.mxu0 %v179
    %v480 = vpop.f32.mrf.mxu0
    %v481 = vadd.f32 0.0, %v480
    %v482 = vpop.f32.mrf.mxu0
    %483 = vmatprep.mubr.f32.mxu0 0.0
    %484 = vmatmul.mubr.f32.gmra.mxu0 %v182
    %v485 = vpop.f32.mrf.mxu0
    %v486 = vadd.f32 0.0, %v485
    %v487 = vpop.f32.mrf.mxu0
    %488 = vmatprep.mubr.f32.mxu0 0.0
    %489 = vmatmul.mubr.f32.gmra.mxu0 %v185
    %v490 = vpop.f32.mrf.mxu0
    %v491 = vadd.f32 0.0, %v490
    %v492 = vpop.f32.mrf.mxu0
    %493 = vmatprep.mubr.f32.mxu0 0.0
    %494 = vmatmul.mubr.f32.gmra.mxu0 %v188
    %v495 = vpop.f32.mrf.mxu0
    %v496 = vadd.f32 0.0, %v495
    %v497 = vpop.f32.mrf.mxu0
    %498 = vmatprep.mubr.f32.mxu0 0.0
    %499 = vmatmul.mubr.f32.gmra.mxu0 %v191
    %v500 = vpop.f32.mrf.mxu0
    %v501 = vadd.f32 0.0, %v500
    %v502 = vpop.f32.mrf.mxu0
    %503 = vmatprep.mubr.f32.mxu0 0.0
    %504 = vmatmul.mubr.f32.gmra.mxu0 %v194
    %v505 = vpop.f32.mrf.mxu0
    %v506 = vadd.f32 0.0, %v505
    %v507 = vpop.f32.mrf.mxu0
    %508 = vmatprep.mubr.f32.mxu0 0.0
    %509 = vmatmul.mubr.f32.gmra.mxu0 %v197
    %v510 = vpop.f32.mrf.mxu0
    %v511 = vadd.f32 0.0, %v510
    %v512 = vpop.f32.mrf.mxu0
    %513 = vmatprep.mubr.f32.mxu0 0.0
    %514 = vmatmul.mubr.f32.gmra.mxu0 %v200
    %v515 = vpop.f32.mrf.mxu0
    %v516 = vadd.f32 0.0, %v515
    %v517 = vpop.f32.mrf.mxu0
    %518 = vmatprep.mubr.f32.mxu0 0.0
    %519 = vmatmul.mubr.f32.gmra.mxu0 %v203
    %v520 = vpop.f32.mrf.mxu0
    %v521 = vadd.f32 0.0, %v520
    %v522 = vpop.f32.mrf.mxu0
    %523 = vmatprep.mubr.f32.mxu0 0.0
    %524 = vmatmul.mubr.f32.gmra.mxu0 %v206
    %v525 = vpop.f32.mrf.mxu0
    %v526 = vadd.f32 0.0, %v525
    %v527 = vpop.f32.mrf.mxu0
    %528 = vmatprep.mubr.f32.mxu0 0.0
    %529 = vmatmul.mubr.f32.gmra.mxu0 %v209
    %v530 = vpop.f32.mrf.mxu0
    %v531 = vadd.f32 0.0, %v530
    %v532 = vpop.f32.mrf.mxu0
    %533 = vmatprep.mubr.f32.mxu0 0.0
    %534 = vmatmul.mubr.f32.gmra.mxu0 %v212
    %v535 = vpop.f32.mrf.mxu0
    %v536 = vadd.f32 0.0, %v535
    %v537 = vpop.f32.mrf.mxu0
    %538 = vmatprep.mubr.f32.mxu0 0.0
    %539 = vmatmul.mubr.f32.gmra.mxu0 %v215
    %v540 = vpop.f32.mrf.mxu0
    %v541 = vadd.f32 0.0, %v540
    %v542 = vpop.f32.mrf.mxu0
    %543 = vmatprep.mubr.f32.mxu0 0.0
    %544 = vmatmul.mubr.f32.gmra.mxu0 %v218
    %v545 = vpop.f32.mrf.mxu0
    %v546 = vadd.f32 0.0, %v545
    %v547 = vpop.f32.mrf.mxu0
    %548 = vmatprep.mubr.f32.mxu0 0.0
    %549 = vmatmul.mubr.f32.gmra.mxu0 %v221
    %v550 = vpop.f32.mrf.mxu0
    %v551 = vadd.f32 0.0, %v550
    %v552 = vpop.f32.mrf.mxu0
    %553 = vmatprep.mubr.f32.mxu0 0.0
    %554 = vmatmul.mubr.f32.gmra.mxu0 %v224
    %v555 = vpop.f32.mrf.mxu0
    %v556 = vadd.f32 0.0, %v555
    %v557 = vpop.f32.mrf.mxu0
    %558 = vmatprep.mubr.f32.mxu0 0.0
    %559 = vmatmul.mubr.f32.gmra.mxu0 %v227
    %v560 = vpop.f32.mrf.mxu0
    %v561 = vadd.f32 0.0, %v560
    %v562 = vpop.f32.mrf.mxu0
    %563 = vmatprep.mubr.f32.mxu0 0.0
    %564 = vmatmul.mubr.f32.gmra.mxu0 %v230
    %v565 = vpop.f32.mrf.mxu0
    %v566 = vadd.f32 0.0, %v565
    %v567 = vpop.f32.mrf.mxu0
    %568 = vmatprep.mubr.f32.mxu0 0.0
    %569 = vmatmul.mubr.f32.gmra.mxu0 %v233
    %v570 = vpop.f32.mrf.mxu0
    %v571 = vadd.f32 0.0, %v570
    %v572 = vpop.f32.mrf.mxu0
    %573 = vmatprep.mubr.f32.mxu0 0.0
    %574 = vmatmul.mubr.f32.gmra.mxu0 %v236
    %v575 = vpop.f32.mrf.mxu0
    %v576 = vadd.f32 0.0, %v575
    %v577 = vpop.f32.mrf.mxu0
    %578 = vmatprep.mubr.f32.mxu0 0.0
    %579 = vmatmul.mubr.f32.gmra.mxu0 %v239
    %v580 = vpop.f32.mrf.mxu0
    %v581 = vadd.f32 0.0, %v580
    %v582 = vpop.f32.mrf.mxu0
    %583 = vmatprep.mubr.f32.mxu0 0.0
    %584 = vmatmul.mubr.f32.gmra.mxu0 %v242
    %v585 = vpop.f32.mrf.mxu0
    %v586 = vadd.f32 0.0, %v585
    %v587 = vpop.f32.mrf.mxu0
    %588 = vmatprep.mubr.f32.mxu0 0.0
    %589 = vmatmul.mubr.f32.gmra.mxu0 %v245
    %v590 = vpop.f32.mrf.mxu0
    %v591 = vadd.f32 0.0, %v590
    %v592 = vpop.f32.mrf.mxu0
    %593 = vmatprep.mubr.f32.mxu0 0.0
    %594 = vmatmul.mubr.f32.gmra.mxu0 %v248
    %v595 = vpop.f32.mrf.mxu0
    %v596 = vadd.f32 0.0, %v595
    %v597 = vpop.f32.mrf.mxu0
    %598 = vmatprep.mubr.f32.mxu0 0.0
    %599 = vmatmul.mubr.f32.gmra.mxu0 %v251
    %v600 = vpop.f32.mrf.mxu0
    %v601 = vadd.f32 0.0, %v600
    %v602 = vpop.f32.mrf.mxu0
    %603 = vmatprep.mubr.f32.mxu0 0.0
    %604 = vmatmul.mubr.f32.gmra.mxu0 %v254
    %v605 = vpop.f32.mrf.mxu0
    %v606 = vadd.f32 0.0, %v605
    %v607 = vpop.f32.mrf.mxu0
    %608 = vmatprep.mubr.f32.mxu0 0.0
    %609 = vmatmul.mubr.f32.gmra.mxu0 %v257
    %v610 = vpop.f32.mrf.mxu0
    %v611 = vadd.f32 0.0, %v610
    %v612 = vpop.f32.mrf.mxu0
    %613 = vmatprep.mubr.f32.mxu0 0.0
    %614 = vmatmul.mubr.f32.gmra.mxu0 %v260
    %v615 = vpop.f32.mrf.mxu0
    %v616 = vadd.f32 0.0, %v615
    %v617 = vpop.f32.mrf.mxu0
    %618 = vmatprep.mubr.f32.mxu0 0.0
    %619 = vmatmul.mubr.f32.gmra.mxu0 %v263
    %v620 = vpop.f32.mrf.mxu0
    %v621 = vadd.f32 0.0, %v620
    %v622 = vpop.f32.mrf.mxu0
    %623 = vmatprep.mubr.f32.mxu0 0.0
    %624 = vmatmul.mubr.f32.gmra.mxu0 %v266
    %v625 = vpop.f32.mrf.mxu0
    %v626 = vadd.f32 0.0, %v625
    %v627 = vpop.f32.mrf.mxu0
    %628 = vmatprep.mubr.f32.mxu0 0.0
    %629 = vmatmul.mubr.f32.gmra.mxu0 %v269
    %v630 = vpop.f32.mrf.mxu0
    %v631 = vadd.f32 0.0, %v630
    %v632 = vpop.f32.mrf.mxu0
    %633 = vmatprep.mubr.f32.mxu0 0.0
    %634 = vmatmul.mubr.f32.gmra.mxu0 %v272
    %v635 = vpop.f32.mrf.mxu0
    %v636 = vadd.f32 0.0, %v635
    %v637 = vpop.f32.mrf.mxu0
    %638 = vmatprep.mubr.f32.mxu0 0.0
    %639 = vmatmul.mubr.f32.gmra.mxu0 %v275
    %v640 = vpop.f32.mrf.mxu0
    %v641 = vadd.f32 0.0, %v640
    %v642 = vpop.f32.mrf.mxu0
    %643 = vmatprep.mubr.f32.mxu0 0.0
    %644 = vmatmul.mubr.f32.gmra.mxu0 %v278
    %v645 = vpop.f32.mrf.mxu0
    %v646 = vadd.f32 0.0, %v645
    %v647 = vpop.f32.mrf.mxu0
    %648 = vmatprep.mubr.f32.mxu0 0.0
    %649 = vmatmul.mubr.f32.gmra.mxu0 %v281
    %v650 = vpop.f32.mrf.mxu0
    %v651 = vadd.f32 0.0, %v650
    %v652 = vpop.f32.mrf.mxu0
    %653 = vmatprep.mubr.f32.mxu0 0.0
    %654 = vmatmul.mubr.f32.gmra.mxu0 %v284
    %v655 = vpop.f32.mrf.mxu0
    %v656 = vadd.f32 0.0, %v655
    %v657 = vpop.f32.mrf.mxu0
    %658 = vmatprep.mubr.f32.mxu0 0.0
    %659 = vmatmul.mubr.f32.gmra.mxu0 %v287
    %v660 = vpop.f32.mrf.mxu0
    %v661 = vadd.f32 0.0, %v660
    %v662 = vpop.f32.mrf.mxu0
    %663 = vmatprep.mubr.f32.mxu0 0.0
    %664 = vmatmul.mubr.f32.gmra.mxu0 %v290
    %v665 = vpop.f32.mrf.mxu0
    %v666 = vadd.f32 0.0, %v665
    %v667 = vpop.f32.mrf.mxu0
    %668 = vmatprep.mubr.f32.mxu0 0.0
    %669 = vmatmul.mubr.f32.gmra.mxu0 %v293
    %v670 = vpop.f32.mrf.mxu0
    %v671 = vadd.f32 0.0, %v670
    %v672 = vpop.f32.mrf.mxu0
    %673 = vmatprep.mubr.f32.mxu0 0.0
    %674 = vmatmul.mubr.f32.gmra.mxu0 %v296
    %v675 = vpop.f32.mrf.mxu0
    %v676 = vadd.f32 0.0, %v675
    %v677 = vpop.f32.mrf.mxu0
    %678 = vmatprep.mubr.f32.mxu0 0.0
    %679 = vmatmul.mubr.f32.gmra.mxu0 %v299
    %v680 = vpop.f32.mrf.mxu0
    %v681 = vadd.f32 0.0, %v680
    %v682 = vpop.f32.mrf.mxu0
    %683 = vmatprep.mubr.f32.mxu0 0.0
    %684 = vmatmul.mubr.f32.gmra.mxu0 %v302
    %v685 = vpop.f32.mrf.mxu0
    %v686 = vadd.f32 0.0, %v685
    %v687 = vpop.f32.mrf.mxu0
    %688 = vdwg.mxu0
    %vm689 = vcmp.ge.f32.partialorder %v371, 0.0
    %vm690 = vcmp.ge.f32.partialorder %v376, 0.0
    %vm691 = vcmp.ge.f32.partialorder %v381, 0.0
    %vm692 = vcmp.ge.f32.partialorder %v386, 0.0
    %vm693 = vcmp.ge.f32.partialorder %v391, 0.0
    %vm694 = vcmp.ge.f32.partialorder %v396, 0.0
    %vm695 = vcmp.ge.f32.partialorder %v401, 0.0
    %vm696 = vcmp.ge.f32.partialorder %v406, 0.0
    %vm697 = vcmp.ge.f32.partialorder %v411, 0.0
    %vm698 = vcmp.ge.f32.partialorder %v416, 0.0
    %vm699 = vcmp.ge.f32.partialorder %v421, 0.0
    %vm700 = vcmp.ge.f32.partialorder %v426, 0.0
    %vm701 = vcmp.ge.f32.partialorder %v431, 0.0
    %vm702 = vcmp.ge.f32.partialorder %v436, 0.0
    %vm703 = vcmp.ge.f32.partialorder %v441, 0.0
    %vm704 = vcmp.ge.f32.partialorder %v446, 0.0
    %vm705 = vcmp.ge.f32.partialorder %v451, 0.0
    %vm706 = vcmp.ge.f32.partialorder %v456, 0.0
    %vm707 = vcmp.ge.f32.partialorder %v461, 0.0
    %vm708 = vcmp.ge.f32.partialorder %v466, 0.0
    %vm709 = vcmp.ge.f32.partialorder %v471, 0.0
    %vm710 = vcmp.ge.f32.partialorder %v476, 0.0
    %vm711 = vcmp.ge.f32.partialorder %v481, 0.0
    %vm712 = vcmp.ge.f32.partialorder %v486, 0.0
    %vm713 = vcmp.ge.f32.partialorder %v491, 0.0
    %vm714 = vcmp.ge.f32.partialorder %v496, 0.0
    %vm715 = vcmp.ge.f32.partialorder %v501, 0.0
    %vm716 = vcmp.ge.f32.partialorder %v506, 0.0
    %vm717 = vcmp.ge.f32.partialorder %v511, 0.0
    %vm718 = vcmp.ge.f32.partialorder %v516, 0.0
    %vm719 = vcmp.ge.f32.partialorder %v521, 0.0
    %vm720 = vcmp.ge.f32.partialorder %v526, 0.0
    %vm721 = vcmp.ge.f32.partialorder %v531, 0.0
    %vm722 = vcmp.ge.f32.partialorder %v536, 0.0
    %vm723 = vcmp.ge.f32.partialorder %v541, 0.0
    %vm724 = vcmp.ge.f32.partialorder %v546, 0.0
    %vm725 = vcmp.ge.f32.partialorder %v551, 0.0
    %vm726 = vcmp.ge.f32.partialorder %v556, 0.0
    %vm727 = vcmp.ge.f32.partialorder %v561, 0.0
    %vm728 = vcmp.ge.f32.partialorder %v566, 0.0
    %vm729 = vcmp.ge.f32.partialorder %v571, 0.0
    %vm730 = vcmp.ge.f32.partialorder %v576, 0.0
    %vm731 = vcmp.ge.f32.partialorder %v581, 0.0
    %vm732 = vcmp.ge.f32.partialorder %v586, 0.0
    %vm733 = vcmp.ge.f32.partialorder %v591, 0.0
    %vm734 = vcmp.ge.f32.partialorder %v596, 0.0
    %vm735 = vcmp.ge.f32.partialorder %v601, 0.0
    %vm736 = vcmp.ge.f32.partialorder %v606, 0.0
    %vm737 = vcmp.ge.f32.partialorder %v611, 0.0
    %vm738 = vcmp.ge.f32.partialorder %v616, 0.0
    %vm739 = vcmp.ge.f32.partialorder %v621, 0.0
    %vm740 = vcmp.ge.f32.partialorder %v626, 0.0
    %vm741 = vcmp.ge.f32.partialorder %v631, 0.0
    %vm742 = vcmp.ge.f32.partialorder %v636, 0.0
    %vm743 = vcmp.ge.f32.partialorder %v641, 0.0
    %vm744 = vcmp.ge.f32.partialorder %v646, 0.0
    %vm745 = vcmp.ge.f32.partialorder %v651, 0.0
    %vm746 = vcmp.ge.f32.partialorder %v656, 0.0
    %vm747 = vcmp.ge.f32.partialorder %v661, 0.0
    %vm748 = vcmp.ge.f32.partialorder %v666, 0.0
    %vm749 = vcmp.ge.f32.partialorder %v671, 0.0
    %vm750 = vcmp.ge.f32.partialorder %v676, 0.0
    %vm751 = vcmp.ge.f32.partialorder %v681, 0.0
    %vm752 = vcmp.ge.f32.partialorder %v686, 0.0
    %v753 = vstv %s42
    %v754 = vmul.f32 %v753, %v371
    %v755 = vmul.f32 %v753, %v376
    %v756 = vmul.f32 %v753, %v381
    %v757 = vmul.f32 %v753, %v386
    %v758 = vmul.f32 %v753, %v391
    %v759 = vmul.f32 %v753, %v396
    %v760 = vmul.f32 %v753, %v401
    %v761 = vmul.f32 %v753, %v406
    %v762 = vmul.f32 %v753, %v411
    %v763 = vmul.f32 %v753, %v416
    %v764 = vmul.f32 %v753, %v421
    %v765 = vmul.f32 %v753, %v426
    %v766 = vmul.f32 %v753, %v431
    %v767 = vmul.f32 %v753, %v436
    %v768 = vmul.f32 %v753, %v441
    %v769 = vmul.f32 %v753, %v446
    %v770 = vmul.f32 %v753, %v451
    %v771 = vmul.f32 %v753, %v456
    %v772 = vmul.f32 %v753, %v461
    %v773 = vmul.f32 %v753, %v466
    %v774 = vmul.f32 %v753, %v471
    %v775 = vmul.f32 %v753, %v476
    %v776 = vmul.f32 %v753, %v481
    %v777 = vmul.f32 %v753, %v486
    %v778 = vmul.f32 %v753, %v491
    %v779 = vmul.f32 %v753, %v496
    %v780 = vmul.f32 %v753, %v501
    %v781 = vmul.f32 %v753, %v506
    %v782 = vmul.f32 %v753, %v511
    %v783 = vmul.f32 %v753, %v516
    %v784 = vmul.f32 %v753, %v521
    %v785 = vmul.f32 %v753, %v526
    %v786 = vmul.f32 %v753, %v531
    %v787 = vmul.f32 %v753, %v536
    %v788 = vmul.f32 %v753, %v541
    %v789 = vmul.f32 %v753, %v546
    %v790 = vmul.f32 %v753, %v551
    %v791 = vmul.f32 %v753, %v556
    %v792 = vmul.f32 %v753, %v561
    %v793 = vmul.f32 %v753, %v566
    %v794 = vmul.f32 %v753, %v571
    %v795 = vmul.f32 %v753, %v576
    %v796 = vmul.f32 %v753, %v581
    %v797 = vmul.f32 %v753, %v586
    %v798 = vmul.f32 %v753, %v591
    %v799 = vmul.f32 %v753, %v596
    %v800 = vmul.f32 %v753, %v601
    %v801 = vmul.f32 %v753, %v606
    %v802 = vmul.f32 %v753, %v611
    %v803 = vmul.f32 %v753, %v616
    %v804 = vmul.f32 %v753, %v621
    %v805 = vmul.f32 %v753, %v626
    %v806 = vmul.f32 %v753, %v631
    %v807 = vmul.f32 %v753, %v636
    %v808 = vmul.f32 %v753, %v641
    %v809 = vmul.f32 %v753, %v646
    %v810 = vmul.f32 %v753, %v651
    %v811 = vmul.f32 %v753, %v656
    %v812 = vmul.f32 %v753, %v661
    %v813 = vmul.f32 %v753, %v666
    %v814 = vmul.f32 %v753, %v671
    %v815 = vmul.f32 %v753, %v676
    %v816 = vmul.f32 %v753, %v681
    %v817 = vmul.f32 %v753, %v686
    %v818 = vsel %vm689, %v371, %v754
    %v819 = vsel %vm690, %v376, %v755
    %v820 = vsel %vm691, %v381, %v756
    %v821 = vsel %vm692, %v386, %v757
    %v822 = vsel %vm693, %v391, %v758
    %v823 = vsel %vm694, %v396, %v759
    %v824 = vsel %vm695, %v401, %v760
    %v825 = vsel %vm696, %v406, %v761
    %v826 = vsel %vm697, %v411, %v762
    %v827 = vsel %vm698, %v416, %v763
    %v828 = vsel %vm699, %v421, %v764
    %v829 = vsel %vm700, %v426, %v765
    %v830 = vsel %vm701, %v431, %v766
    %v831 = vsel %vm702, %v436, %v767
    %v832 = vsel %vm703, %v441, %v768
    %v833 = vsel %vm704, %v446, %v769
    %v834 = vsel %vm705, %v451, %v770
    %v835 = vsel %vm706, %v456, %v771
    %v836 = vsel %vm707, %v461, %v772
    %v837 = vsel %vm708, %v466, %v773
    %v838 = vsel %vm709, %v471, %v774
    %v839 = vsel %vm710, %v476, %v775
    %v840 = vsel %vm711, %v481, %v776
    %v841 = vsel %vm712, %v486, %v777
    %v842 = vsel %vm713, %v491, %v778
    %v843 = vsel %vm714, %v496, %v779
    %v844 = vsel %vm715, %v501, %v780
    %v845 = vsel %vm716, %v506, %v781
    %v846 = vsel %vm717, %v511, %v782
    %v847 = vsel %vm718, %v516, %v783
    %v848 = vsel %vm719, %v521, %v784
    %v849 = vsel %vm720, %v526, %v785
    %v850 = vsel %vm721, %v531, %v786
    %v851 = vsel %vm722, %v536, %v787
    %v852 = vsel %vm723, %v541, %v788
    %v853 = vsel %vm724, %v546, %v789
    %v854 = vsel %vm725, %v551, %v790
    %v855 = vsel %vm726, %v556, %v791
    %v856 = vsel %vm727, %v561, %v792
    %v857 = vsel %vm728, %v566, %v793
    %v858 = vsel %vm729, %v571, %v794
    %v859 = vsel %vm730, %v576, %v795
    %v860 = vsel %vm731, %v581, %v796
    %v861 = vsel %vm732, %v586, %v797
    %v862 = vsel %vm733, %v591, %v798
    %v863 = vsel %vm734, %v596, %v799
    %v864 = vsel %vm735, %v601, %v800
    %v865 = vsel %vm736, %v606, %v801
    %v866 = vsel %vm737, %v611, %v802
    %v867 = vsel %vm738, %v616, %v803
    %v868 = vsel %vm739, %v621, %v804
    %v869 = vsel %vm740, %v626, %v805
    %v870 = vsel %vm741, %v631, %v806
    %v871 = vsel %vm742, %v636, %v807
    %v872 = vsel %vm743, %v641, %v808
    %v873 = vsel %vm744, %v646, %v809
    %v874 = vsel %vm745, %v651, %v810
    %v875 = vsel %vm746, %v656, %v811
    %v876 = vsel %vm747, %v661, %v812
    %v877 = vsel %vm748, %v666, %v813
    %v878 = vsel %vm749, %v671, %v814
    %v879 = vsel %vm750, %v676, %v815
    %v880 = vsel %vm751, %v681, %v816
    %v881 = vsel %vm752, %v686, %v817
    %v882 = vld [vmem:[%s2] sm:$0xff]
    %v883 = vld [vmem:[%s2 + $0x8] sm:$0xff]
    %v884 = vld [vmem:[%s2 + $0x10] sm:$0xff]
    %v885 = vld [vmem:[%s2 + $0x18] sm:$0xff]
    %v886 = vld [vmem:[%s4] sm:$0x1]
    %v888 = vlaneseq
    %v889 = vshrl.u32 %v888, 7
    %v890 = vsub.s32 0, %v889
    %v891 = vrot.slane %v886, %v890
    %vm893 = vcmask 261120
    %v895 = vsel %vm893, %v818, 0
    %v898 = vsel %vm893, %v819, 0
    %v901 = vsel %vm893, %v820, 0
    %v904 = vsel %vm893, %v821, 0
    %v907 = vsel %vm893, %v822, 0
    %v910 = vsel %vm893, %v823, 0
    %v913 = vsel %vm893, %v824, 0
    %v916 = vsel %vm893, %v825, 0
    %v919 = vsel %vm893, %v826, 0
    %v922 = vsel %vm893, %v827, 0
    %v925 = vsel %vm893, %v828, 0
    %v928 = vsel %vm893, %v829, 0
    %v931 = vsel %vm893, %v830, 0
    %v934 = vsel %vm893, %v831, 0
    %v937 = vsel %vm893, %v832, 0
    %v940 = vsel %vm893, %v833, 0
    %v943 = vsel %vm893, %v834, 0
    %v946 = vsel %vm893, %v835, 0
    %v949 = vsel %vm893, %v836, 0
    %v952 = vsel %vm893, %v837, 0
    %v955 = vsel %vm893, %v838, 0
    %v958 = vsel %vm893, %v839, 0
    %v961 = vsel %vm893, %v840, 0
    %v964 = vsel %vm893, %v841, 0
    %v967 = vsel %vm893, %v842, 0
    %v970 = vsel %vm893, %v843, 0
    %v973 = vsel %vm893, %v844, 0
    %v976 = vsel %vm893, %v845, 0
    %v979 = vsel %vm893, %v846, 0
    %v982 = vsel %vm893, %v847, 0
    %v985 = vsel %vm893, %v848, 0
    %v988 = vsel %vm893, %v849, 0
    %v991 = vsel %vm893, %v850, 0
    %v994 = vsel %vm893, %v851, 0
    %v997 = vsel %vm893, %v852, 0
    %v1000 = vsel %vm893, %v853, 0
    %v1003 = vsel %vm893, %v854, 0
    %v1006 = vsel %vm893, %v855, 0
    %v1009 = vsel %vm893, %v856, 0
    %v1012 = vsel %vm893, %v857, 0
    %v1015 = vsel %vm893, %v858, 0
    %v1018 = vsel %vm893, %v859, 0
    %v1021 = vsel %vm893, %v860, 0
    %v1024 = vsel %vm893, %v861, 0
    %v1027 = vsel %vm893, %v862, 0
    %v1030 = vsel %vm893, %v863, 0
    %v1033 = vsel %vm893, %v864, 0
    %v1036 = vsel %vm893, %v865, 0
    %v1039 = vsel %vm893, %v866, 0
    %v1042 = vsel %vm893, %v867, 0
    %v1045 = vsel %vm893, %v868, 0
    %v1048 = vsel %vm893, %v869, 0
    %v1051 = vsel %vm893, %v870, 0
    %v1054 = vsel %vm893, %v871, 0
    %v1057 = vsel %vm893, %v872, 0
    %v1060 = vsel %vm893, %v873, 0
    %v1063 = vsel %vm893, %v874, 0
    %v1066 = vsel %vm893, %v875, 0
    %v1069 = vsel %vm893, %v876, 0
    %v1072 = vsel %vm893, %v877, 0
    %v1075 = vsel %vm893, %v878, 0
    %v1078 = vsel %vm893, %v879, 0
    %v1081 = vsel %vm893, %v880, 0
    %v1084 = vsel %vm893, %v881, 0
    %1086 = vmatprep.subr.mxu0 0.0
    %1087 = vmatpush1.msra.mxu0 0.0
    %1088 = vmatprep.subr.mxu0 0.0
    %1089 = vmatpush1.msra.mxu0 0.0
    %1090 = vmatprep.subr.mxu0 0.0
    %1091 = vmatpush1.msra.mxu0 0.0
    %1092 = vmatprep.subr.mxu0 0.0
    %1093 = vmatpush1.msra.mxu0 0.0
    %1094 = vmatprep.subr.mxu0 0.0
    %1095 = vmatpush1.msra.mxu0 0.0
    %1096 = vmatprep.subr.mxu0 0.0
    %1097 = vmatpush1.msra.mxu0 0.0
    %1098 = vmatprep.subr.mxu0 0.0
    %1099 = vmatpush1.msra.mxu0 0.0
    %1100 = vmatprep.subr.mxu0 0.0
    %1101 = vmatpush1.msra.mxu0 0.0
    %1102 = vmatprep.subr.mxu0 0.0
    %1103 = vmatpush1.msra.mxu0 0.0
    %1104 = vmatprep.subr.mxu0 0.0
    %1105 = vmatpush1.msra.mxu0 0.0
    %1106 = vmatprep.subr.mxu0 0.0
    %1107 = vmatpush1.msra.mxu0 0.0
    %1108 = vmatprep.subr.mxu0 0.0
    %1109 = vmatpush1.msra.mxu0 0.0
    %1110 = vmatprep.subr.mxu0 0.0
    %1111 = vmatpush1.msra.mxu0 %v885
    %1112 = vmatprep.subr.mxu0 0.0
    %1113 = vmatpush1.msra.mxu0 %v884
    %1114 = vmatprep.subr.mxu0 0.0
    %1115 = vmatpush1.msra.mxu0 %v883
    %1116 = vmatprep.subr.mxu0 0.0
    %1117 = vmatpush1.msra.mxu0 %v882
    %1118 = vmatprep.subr.mxu0 0.0
    %1119 = vmatpush2.msra.mxu0 0.0
    %1120 = vmatprep.subr.mxu0 0.0
    %1121 = vmatpush2.msra.mxu0 0.0
    %1122 = vmatprep.subr.mxu0 0.0
    %1123 = vmatpush2.msra.mxu0 0.0
    %1124 = vmatprep.subr.mxu0 0.0
    %1125 = vmatpush2.msra.mxu0 0.0
    %1126 = vmatprep.subr.mxu0 0.0
    %1127 = vmatpush2.msra.mxu0 0.0
    %1128 = vmatprep.subr.mxu0 0.0
    %1129 = vmatpush2.msra.mxu0 0.0
    %1130 = vmatprep.subr.mxu0 0.0
    %1131 = vmatpush2.msra.mxu0 0.0
    %1132 = vmatprep.subr.mxu0 0.0
    %1133 = vmatpush2.msra.mxu0 0.0
    %1134 = vmatprep.subr.mxu0 0.0
    %1135 = vmatpush2.msra.mxu0 0.0
    %1136 = vmatprep.subr.mxu0 0.0
    %1137 = vmatpush2.msra.mxu0 0.0
    %1138 = vmatprep.subr.mxu0 0.0
    %1139 = vmatpush2.msra.mxu0 0.0
    %1140 = vmatprep.subr.mxu0 0.0
    %1141 = vmatpush2.msra.mxu0 0.0
    %1142 = vmatprep.subr.mxu0 0.0
    %1143 = vmatpush2.msra.mxu0 0.0
    %1144 = vmatprep.subr.mxu0 0.0
    %1145 = vmatpush2.msra.mxu0 0.0
    %1146 = vmatprep.subr.mxu0 0.0
    %1147 = vmatpush2.msra.mxu0 0.0
    %1148 = vmatprep.subr.mxu0 0.0
    %1149 = vmatpush2.msra.mxu0 0.0
    %1150 = vmatprep.mubr.f32.mxu0 0.0
    %1151 = vmatmul.mubr.f32.gmra.mxu0 %v895
    %v1152 = vpop.f32.mrf.mxu0
    %v1153 = vadd.f32 %v891, %v1152
    %v1154 = vpop.f32.mrf.mxu0
    %1155 = vmatprep.mubr.f32.mxu0 0.0
    %1156 = vmatmul.mubr.f32.gmra.mxu0 %v898
    %v1157 = vpop.f32.mrf.mxu0
    %v1158 = vadd.f32 %v891, %v1157
    %v1159 = vpop.f32.mrf.mxu0
    %1160 = vmatprep.mubr.f32.mxu0 0.0
    %1161 = vmatmul.mubr.f32.gmra.mxu0 %v901
    %v1162 = vpop.f32.mrf.mxu0
    %v1163 = vadd.f32 %v891, %v1162
    %v1164 = vpop.f32.mrf.mxu0
    %1165 = vmatprep.mubr.f32.mxu0 0.0
    %1166 = vmatmul.mubr.f32.gmra.mxu0 %v904
    %v1167 = vpop.f32.mrf.mxu0
    %v1168 = vadd.f32 %v891, %v1167
    %v1169 = vpop.f32.mrf.mxu0
    %1170 = vmatprep.mubr.f32.mxu0 0.0
    %1171 = vmatmul.mubr.f32.gmra.mxu0 %v907
    %v1172 = vpop.f32.mrf.mxu0
    %v1173 = vadd.f32 %v891, %v1172
    %v1174 = vpop.f32.mrf.mxu0
    %1175 = vmatprep.mubr.f32.mxu0 0.0
    %1176 = vmatmul.mubr.f32.gmra.mxu0 %v910
    %v1177 = vpop.f32.mrf.mxu0
    %v1178 = vadd.f32 %v891, %v1177
    %v1179 = vpop.f32.mrf.mxu0
    %1180 = vmatprep.mubr.f32.mxu0 0.0
    %1181 = vmatmul.mubr.f32.gmra.mxu0 %v913
    %v1182 = vpop.f32.mrf.mxu0
    %v1183 = vadd.f32 %v891, %v1182
    %v1184 = vpop.f32.mrf.mxu0
    %1185 = vmatprep.mubr.f32.mxu0 0.0
    %1186 = vmatmul.mubr.f32.gmra.mxu0 %v916
    %v1187 = vpop.f32.mrf.mxu0
    %v1188 = vadd.f32 %v891, %v1187
    %v1189 = vpop.f32.mrf.mxu0
    %1190 = vmatprep.mubr.f32.mxu0 0.0
    %1191 = vmatmul.mubr.f32.gmra.mxu0 %v919
    %v1192 = vpop.f32.mrf.mxu0
    %v1193 = vadd.f32 %v891, %v1192
    %v1194 = vpop.f32.mrf.mxu0
    %1195 = vmatprep.mubr.f32.mxu0 0.0
    %1196 = vmatmul.mubr.f32.gmra.mxu0 %v922
    %v1197 = vpop.f32.mrf.mxu0
    %v1198 = vadd.f32 %v891, %v1197
    %v1199 = vpop.f32.mrf.mxu0
    %1200 = vmatprep.mubr.f32.mxu0 0.0
    %1201 = vmatmul.mubr.f32.gmra.mxu0 %v925
    %v1202 = vpop.f32.mrf.mxu0
    %v1203 = vadd.f32 %v891, %v1202
    %v1204 = vpop.f32.mrf.mxu0
    %1205 = vmatprep.mubr.f32.mxu0 0.0
    %1206 = vmatmul.mubr.f32.gmra.mxu0 %v928
    %v1207 = vpop.f32.mrf.mxu0
    %v1208 = vadd.f32 %v891, %v1207
    %v1209 = vpop.f32.mrf.mxu0
    %1210 = vmatprep.mubr.f32.mxu0 0.0
    %1211 = vmatmul.mubr.f32.gmra.mxu0 %v931
    %v1212 = vpop.f32.mrf.mxu0
    %v1213 = vadd.f32 %v891, %v1212
    %v1214 = vpop.f32.mrf.mxu0
    %1215 = vmatprep.mubr.f32.mxu0 0.0
    %1216 = vmatmul.mubr.f32.gmra.mxu0 %v934
    %v1217 = vpop.f32.mrf.mxu0
    %v1218 = vadd.f32 %v891, %v1217
    %v1219 = vpop.f32.mrf.mxu0
    %1220 = vmatprep.mubr.f32.mxu0 0.0
    %1221 = vmatmul.mubr.f32.gmra.mxu0 %v937
    %v1222 = vpop.f32.mrf.mxu0
    %v1223 = vadd.f32 %v891, %v1222
    %v1224 = vpop.f32.mrf.mxu0
    %1225 = vmatprep.mubr.f32.mxu0 0.0
    %1226 = vmatmul.mubr.f32.gmra.mxu0 %v940
    %v1227 = vpop.f32.mrf.mxu0
    %v1228 = vadd.f32 %v891, %v1227
    %v1229 = vpop.f32.mrf.mxu0
    %1230 = vmatprep.mubr.f32.mxu0 0.0
    %1231 = vmatmul.mubr.f32.gmra.mxu0 %v943
    %v1232 = vpop.f32.mrf.mxu0
    %v1233 = vadd.f32 %v891, %v1232
    %v1234 = vpop.f32.mrf.mxu0
    %1235 = vmatprep.mubr.f32.mxu0 0.0
    %1236 = vmatmul.mubr.f32.gmra.mxu0 %v946
    %v1237 = vpop.f32.mrf.mxu0
    %v1238 = vadd.f32 %v891, %v1237
    %v1239 = vpop.f32.mrf.mxu0
    %1240 = vmatprep.mubr.f32.mxu0 0.0
    %1241 = vmatmul.mubr.f32.gmra.mxu0 %v949
    %v1242 = vpop.f32.mrf.mxu0
    %v1243 = vadd.f32 %v891, %v1242
    %v1244 = vpop.f32.mrf.mxu0
    %1245 = vmatprep.mubr.f32.mxu0 0.0
    %1246 = vmatmul.mubr.f32.gmra.mxu0 %v952
    %v1247 = vpop.f32.mrf.mxu0
    %v1248 = vadd.f32 %v891, %v1247
    %v1249 = vpop.f32.mrf.mxu0
    %1250 = vmatprep.mubr.f32.mxu0 0.0
    %1251 = vmatmul.mubr.f32.gmra.mxu0 %v955
    %v1252 = vpop.f32.mrf.mxu0
    %v1253 = vadd.f32 %v891, %v1252
    %v1254 = vpop.f32.mrf.mxu0
    %1255 = vmatprep.mubr.f32.mxu0 0.0
    %1256 = vmatmul.mubr.f32.gmra.mxu0 %v958
    %v1257 = vpop.f32.mrf.mxu0
    %v1258 = vadd.f32 %v891, %v1257
    %v1259 = vpop.f32.mrf.mxu0
    %1260 = vmatprep.mubr.f32.mxu0 0.0
    %1261 = vmatmul.mubr.f32.gmra.mxu0 %v961
    %v1262 = vpop.f32.mrf.mxu0
    %v1263 = vadd.f32 %v891, %v1262
    %v1264 = vpop.f32.mrf.mxu0
    %1265 = vmatprep.mubr.f32.mxu0 0.0
    %1266 = vmatmul.mubr.f32.gmra.mxu0 %v964
    %v1267 = vpop.f32.mrf.mxu0
    %v1268 = vadd.f32 %v891, %v1267
    %v1269 = vpop.f32.mrf.mxu0
    %1270 = vmatprep.mubr.f32.mxu0 0.0
    %1271 = vmatmul.mubr.f32.gmra.mxu0 %v967
    %v1272 = vpop.f32.mrf.mxu0
    %v1273 = vadd.f32 %v891, %v1272
    %v1274 = vpop.f32.mrf.mxu0
    %1275 = vmatprep.mubr.f32.mxu0 0.0
    %1276 = vmatmul.mubr.f32.gmra.mxu0 %v970
    %v1277 = vpop.f32.mrf.mxu0
    %v1278 = vadd.f32 %v891, %v1277
    %v1279 = vpop.f32.mrf.mxu0
    %1280 = vmatprep.mubr.f32.mxu0 0.0
    %1281 = vmatmul.mubr.f32.gmra.mxu0 %v973
    %v1282 = vpop.f32.mrf.mxu0
    %v1283 = vadd.f32 %v891, %v1282
    %v1284 = vpop.f32.mrf.mxu0
    %1285 = vmatprep.mubr.f32.mxu0 0.0
    %1286 = vmatmul.mubr.f32.gmra.mxu0 %v976
    %v1287 = vpop.f32.mrf.mxu0
    %v1288 = vadd.f32 %v891, %v1287
    %v1289 = vpop.f32.mrf.mxu0
    %1290 = vmatprep.mubr.f32.mxu0 0.0
    %1291 = vmatmul.mubr.f32.gmra.mxu0 %v979
    %v1292 = vpop.f32.mrf.mxu0
    %v1293 = vadd.f32 %v891, %v1292
    %v1294 = vpop.f32.mrf.mxu0
    %1295 = vmatprep.mubr.f32.mxu0 0.0
    %1296 = vmatmul.mubr.f32.gmra.mxu0 %v982
    %v1297 = vpop.f32.mrf.mxu0
    %v1298 = vadd.f32 %v891, %v1297
    %v1299 = vpop.f32.mrf.mxu0
    %1300 = vmatprep.mubr.f32.mxu0 0.0
    %1301 = vmatmul.mubr.f32.gmra.mxu0 %v985
    %v1302 = vpop.f32.mrf.mxu0
    %v1303 = vadd.f32 %v891, %v1302
    %v1304 = vpop.f32.mrf.mxu0
    %1305 = vmatprep.mubr.f32.mxu0 0.0
    %1306 = vmatmul.mubr.f32.gmra.mxu0 %v988
    %v1307 = vpop.f32.mrf.mxu0
    %v1308 = vadd.f32 %v891, %v1307
    %v1309 = vpop.f32.mrf.mxu0
    %1310 = vmatprep.mubr.f32.mxu0 0.0
    %1311 = vmatmul.mubr.f32.gmra.mxu0 %v991
    %v1312 = vpop.f32.mrf.mxu0
    %v1313 = vadd.f32 %v891, %v1312
    %v1314 = vpop.f32.mrf.mxu0
    %1315 = vmatprep.mubr.f32.mxu0 0.0
    %1316 = vmatmul.mubr.f32.gmra.mxu0 %v994
    %v1317 = vpop.f32.mrf.mxu0
    %v1318 = vadd.f32 %v891, %v1317
    %v1319 = vpop.f32.mrf.mxu0
    %1320 = vmatprep.mubr.f32.mxu0 0.0
    %1321 = vmatmul.mubr.f32.gmra.mxu0 %v997
    %v1322 = vpop.f32.mrf.mxu0
    %v1323 = vadd.f32 %v891, %v1322
    %v1324 = vpop.f32.mrf.mxu0
    %1325 = vmatprep.mubr.f32.mxu0 0.0
    %1326 = vmatmul.mubr.f32.gmra.mxu0 %v1000
    %v1327 = vpop.f32.mrf.mxu0
    %v1328 = vadd.f32 %v891, %v1327
    %v1329 = vpop.f32.mrf.mxu0
    %1330 = vmatprep.mubr.f32.mxu0 0.0
    %1331 = vmatmul.mubr.f32.gmra.mxu0 %v1003
    %v1332 = vpop.f32.mrf.mxu0
    %v1333 = vadd.f32 %v891, %v1332
    %v1334 = vpop.f32.mrf.mxu0
    %1335 = vmatprep.mubr.f32.mxu0 0.0
    %1336 = vmatmul.mubr.f32.gmra.mxu0 %v1006
    %v1337 = vpop.f32.mrf.mxu0
    %v1338 = vadd.f32 %v891, %v1337
    %v1339 = vpop.f32.mrf.mxu0
    %1340 = vmatprep.mubr.f32.mxu0 0.0
    %1341 = vmatmul.mubr.f32.gmra.mxu0 %v1009
    %v1342 = vpop.f32.mrf.mxu0
    %v1343 = vadd.f32 %v891, %v1342
    %v1344 = vpop.f32.mrf.mxu0
    %1345 = vmatprep.mubr.f32.mxu0 0.0
    %1346 = vmatmul.mubr.f32.gmra.mxu0 %v1012
    %v1347 = vpop.f32.mrf.mxu0
    %v1348 = vadd.f32 %v891, %v1347
    %v1349 = vpop.f32.mrf.mxu0
    %1350 = vmatprep.mubr.f32.mxu0 0.0
    %1351 = vmatmul.mubr.f32.gmra.mxu0 %v1015
    %v1352 = vpop.f32.mrf.mxu0
    %v1353 = vadd.f32 %v891, %v1352
    %v1354 = vpop.f32.mrf.mxu0
    %1355 = vmatprep.mubr.f32.mxu0 0.0
    %1356 = vmatmul.mubr.f32.gmra.mxu0 %v1018
    %v1357 = vpop.f32.mrf.mxu0
    %v1358 = vadd.f32 %v891, %v1357
    %v1359 = vpop.f32.mrf.mxu0
    %1360 = vmatprep.mubr.f32.mxu0 0.0
    %1361 = vmatmul.mubr.f32.gmra.mxu0 %v1021
    %v1362 = vpop.f32.mrf.mxu0
    %v1363 = vadd.f32 %v891, %v1362
    %v1364 = vpop.f32.mrf.mxu0
    %1365 = vmatprep.mubr.f32.mxu0 0.0
    %1366 = vmatmul.mubr.f32.gmra.mxu0 %v1024
    %v1367 = vpop.f32.mrf.mxu0
    %v1368 = vadd.f32 %v891, %v1367
    %v1369 = vpop.f32.mrf.mxu0
    %1370 = vmatprep.mubr.f32.mxu0 0.0
    %1371 = vmatmul.mubr.f32.gmra.mxu0 %v1027
    %v1372 = vpop.f32.mrf.mxu0
    %v1373 = vadd.f32 %v891, %v1372
    %v1374 = vpop.f32.mrf.mxu0
    %1375 = vmatprep.mubr.f32.mxu0 0.0
    %1376 = vmatmul.mubr.f32.gmra.mxu0 %v1030
    %v1377 = vpop.f32.mrf.mxu0
    %v1378 = vadd.f32 %v891, %v1377
    %v1379 = vpop.f32.mrf.mxu0
    %1380 = vmatprep.mubr.f32.mxu0 0.0
    %1381 = vmatmul.mubr.f32.gmra.mxu0 %v1033
    %v1382 = vpop.f32.mrf.mxu0
    %v1383 = vadd.f32 %v891, %v1382
    %v1384 = vpop.f32.mrf.mxu0
    %1385 = vmatprep.mubr.f32.mxu0 0.0
    %1386 = vmatmul.mubr.f32.gmra.mxu0 %v1036
    %v1387 = vpop.f32.mrf.mxu0
    %v1388 = vadd.f32 %v891, %v1387
    %v1389 = vpop.f32.mrf.mxu0
    %1390 = vmatprep.mubr.f32.mxu0 0.0
    %1391 = vmatmul.mubr.f32.gmra.mxu0 %v1039
    %v1392 = vpop.f32.mrf.mxu0
    %v1393 = vadd.f32 %v891, %v1392
    %v1394 = vpop.f32.mrf.mxu0
    %1395 = vmatprep.mubr.f32.mxu0 0.0
    %1396 = vmatmul.mubr.f32.gmra.mxu0 %v1042
    %v1397 = vpop.f32.mrf.mxu0
    %v1398 = vadd.f32 %v891, %v1397
    %v1399 = vpop.f32.mrf.mxu0
    %1400 = vmatprep.mubr.f32.mxu0 0.0
    %1401 = vmatmul.mubr.f32.gmra.mxu0 %v1045
    %v1402 = vpop.f32.mrf.mxu0
    %v1403 = vadd.f32 %v891, %v1402
    %v1404 = vpop.f32.mrf.mxu0
    %1405 = vmatprep.mubr.f32.mxu0 0.0
    %1406 = vmatmul.mubr.f32.gmra.mxu0 %v1048
    %v1407 = vpop.f32.mrf.mxu0
    %v1408 = vadd.f32 %v891, %v1407
    %v1409 = vpop.f32.mrf.mxu0
    %1410 = vmatprep.mubr.f32.mxu0 0.0
    %1411 = vmatmul.mubr.f32.gmra.mxu0 %v1051
    %v1412 = vpop.f32.mrf.mxu0
    %v1413 = vadd.f32 %v891, %v1412
    %v1414 = vpop.f32.mrf.mxu0
    %1415 = vmatprep.mubr.f32.mxu0 0.0
    %1416 = vmatmul.mubr.f32.gmra.mxu0 %v1054
    %v1417 = vpop.f32.mrf.mxu0
    %v1418 = vadd.f32 %v891, %v1417
    %v1419 = vpop.f32.mrf.mxu0
    %1420 = vmatprep.mubr.f32.mxu0 0.0
    %1421 = vmatmul.mubr.f32.gmra.mxu0 %v1057
    %v1422 = vpop.f32.mrf.mxu0
    %v1423 = vadd.f32 %v891, %v1422
    %v1424 = vpop.f32.mrf.mxu0
    %1425 = vmatprep.mubr.f32.mxu0 0.0
    %1426 = vmatmul.mubr.f32.gmra.mxu0 %v1060
    %v1427 = vpop.f32.mrf.mxu0
    %v1428 = vadd.f32 %v891, %v1427
    %v1429 = vpop.f32.mrf.mxu0
    %1430 = vmatprep.mubr.f32.mxu0 0.0
    %1431 = vmatmul.mubr.f32.gmra.mxu0 %v1063
    %v1432 = vpop.f32.mrf.mxu0
    %v1433 = vadd.f32 %v891, %v1432
    %v1434 = vpop.f32.mrf.mxu0
    %1435 = vmatprep.mubr.f32.mxu0 0.0
    %1436 = vmatmul.mubr.f32.gmra.mxu0 %v1066
    %v1437 = vpop.f32.mrf.mxu0
    %v1438 = vadd.f32 %v891, %v1437
    %v1439 = vpop.f32.mrf.mxu0
    %1440 = vmatprep.mubr.f32.mxu0 0.0
    %1441 = vmatmul.mubr.f32.gmra.mxu0 %v1069
    %v1442 = vpop.f32.mrf.mxu0
    %v1443 = vadd.f32 %v891, %v1442
    %v1444 = vpop.f32.mrf.mxu0
    %1445 = vmatprep.mubr.f32.mxu0 0.0
    %1446 = vmatmul.mubr.f32.gmra.mxu0 %v1072
    %v1447 = vpop.f32.mrf.mxu0
    %v1448 = vadd.f32 %v891, %v1447
    %v1449 = vpop.f32.mrf.mxu0
    %1450 = vmatprep.mubr.f32.mxu0 0.0
    %1451 = vmatmul.mubr.f32.gmra.mxu0 %v1075
    %v1452 = vpop.f32.mrf.mxu0
    %v1453 = vadd.f32 %v891, %v1452
    %v1454 = vpop.f32.mrf.mxu0
    %1455 = vmatprep.mubr.f32.mxu0 0.0
    %1456 = vmatmul.mubr.f32.gmra.mxu0 %v1078
    %v1457 = vpop.f32.mrf.mxu0
    %v1458 = vadd.f32 %v891, %v1457
    %v1459 = vpop.f32.mrf.mxu0
    %1460 = vmatprep.mubr.f32.mxu0 0.0
    %1461 = vmatmul.mubr.f32.gmra.mxu0 %v1081
    %v1462 = vpop.f32.mrf.mxu0
    %v1463 = vadd.f32 %v891, %v1462
    %v1464 = vpop.f32.mrf.mxu0
    %1465 = vmatprep.mubr.f32.mxu0 0.0
    %1466 = vmatmul.mubr.f32.gmra.mxu0 %v1084
    %v1467 = vpop.f32.mrf.mxu0
    %v1468 = vadd.f32 %v891, %v1467
    %v1469 = vpop.f32.mrf.mxu0
    %1470 = vdwg.mxu0
    %v1471 = vld [vmem:[%s3] sm:$0xff]
    %v1472 = vld [vmem:[%s3 + $0x8] sm:$0xff]
    %v1473 = vld [vmem:[%s3 + $0x10] sm:$0xff]
    %v1474 = vld [vmem:[%s3 + $0x18] sm:$0xff]
    %v1476 = vsel %vm893, 0.0, 0
    %1478 = vmatprep.subr.mxu0 0.0
    %1479 = vmatpush1.msra.mxu0 0.0
    %1480 = vmatprep.subr.mxu0 0.0
    %1481 = vmatpush1.msra.mxu0 0.0
    %1482 = vmatprep.subr.mxu0 0.0
    %1483 = vmatpush1.msra.mxu0 0.0
    %1484 = vmatprep.subr.mxu0 0.0
    %1485 = vmatpush1.msra.mxu0 0.0
    %1486 = vmatprep.subr.mxu0 0.0
    %1487 = vmatpush1.msra.mxu0 0.0
    %1488 = vmatprep.subr.mxu0 0.0
    %1489 = vmatpush1.msra.mxu0 0.0
    %1490 = vmatprep.subr.mxu0 0.0
    %1491 = vmatpush1.msra.mxu0 0.0
    %1492 = vmatprep.subr.mxu0 0.0
    %1493 = vmatpush1.msra.mxu0 0.0
    %1494 = vmatprep.subr.mxu0 0.0
    %1495 = vmatpush1.msra.mxu0 0.0
    %1496 = vmatprep.subr.mxu0 0.0
    %1497 = vmatpush1.msra.mxu0 0.0
    %1498 = vmatprep.subr.mxu0 0.0
    %1499 = vmatpush1.msra.mxu0 0.0
    %1500 = vmatprep.subr.mxu0 0.0
    %1501 = vmatpush1.msra.mxu0 0.0
    %1502 = vmatprep.subr.mxu0 0.0
    %1503 = vmatpush1.msra.mxu0 %v1474
    %1504 = vmatprep.subr.mxu0 0.0
    %1505 = vmatpush1.msra.mxu0 %v1473
    %1506 = vmatprep.subr.mxu0 0.0
    %1507 = vmatpush1.msra.mxu0 %v1472
    %1508 = vmatprep.subr.mxu0 0.0
    %1509 = vmatpush1.msra.mxu0 %v1471
    %1510 = vmatprep.subr.mxu0 0.0
    %1511 = vmatpush2.msra.mxu0 0.0
    %1512 = vmatprep.subr.mxu0 0.0
    %1513 = vmatpush2.msra.mxu0 0.0
    %1514 = vmatprep.subr.mxu0 0.0
    %1515 = vmatpush2.msra.mxu0 0.0
    %1516 = vmatprep.subr.mxu0 0.0
    %1517 = vmatpush2.msra.mxu0 0.0
    %1518 = vmatprep.subr.mxu0 0.0
    %1519 = vmatpush2.msra.mxu0 0.0
    %1520 = vmatprep.subr.mxu0 0.0
    %1521 = vmatpush2.msra.mxu0 0.0
    %1522 = vmatprep.subr.mxu0 0.0
    %1523 = vmatpush2.msra.mxu0 0.0
    %1524 = vmatprep.subr.mxu0 0.0
    %1525 = vmatpush2.msra.mxu0 0.0
    %1526 = vmatprep.subr.mxu0 0.0
    %1527 = vmatpush2.msra.mxu0 0.0
    %1528 = vmatprep.subr.mxu0 0.0
    %1529 = vmatpush2.msra.mxu0 0.0
    %1530 = vmatprep.subr.mxu0 0.0
    %1531 = vmatpush2.msra.mxu0 0.0
    %1532 = vmatprep.subr.mxu0 0.0
    %1533 = vmatpush2.msra.mxu0 0.0
    %1534 = vmatprep.subr.mxu0 0.0
    %1535 = vmatpush2.msra.mxu0 0.0
    %1536 = vmatprep.subr.mxu0 0.0
    %1537 = vmatpush2.msra.mxu0 0.0
    %1538 = vmatprep.subr.mxu0 0.0
    %1539 = vmatpush2.msra.mxu0 0.0
    %1540 = vmatprep.subr.mxu0 0.0
    %1541 = vmatpush2.msra.mxu0 0.0
    %1542 = vmatprep.mubr.f32.mxu0 0.0
    %1543 = vmatmul.mubr.f32.gmra.mxu0 %v1476
    %v1544 = vpop.f32.mrf.mxu0
    %v1545 = vadd.f32 0.0, %v1544
    %v1546 = vpop.f32.mrf.mxu0
    %1547 = vmatprep.mubr.f32.mxu0 0.0
    %1548 = vmatmul.mubr.f32.gmra.mxu0 %v1476
    %v1549 = vpop.f32.mrf.mxu0
    %v1550 = vadd.f32 0.0, %v1549
    %v1551 = vpop.f32.mrf.mxu0
    %1552 = vmatprep.mubr.f32.mxu0 0.0
    %1553 = vmatmul.mubr.f32.gmra.mxu0 %v1476
    %v1554 = vpop.f32.mrf.mxu0
    %v1555 = vadd.f32 0.0, %v1554
    %v1556 = vpop.f32.mrf.mxu0
    %1557 = vmatprep.mubr.f32.mxu0 0.0
    %1558 = vmatmul.mubr.f32.gmra.mxu0 %v1476
    %v1559 = vpop.f32.mrf.mxu0
    %v1560 = vadd.f32 0.0, %v1559
    %v1561 = vpop.f32.mrf.mxu0
    %1562 = vmatprep.mubr.f32.mxu0 0.0
    %1563 = vmatmul.mubr.f32.gmra.mxu0 %v1476
    %v1564 = vpop.f32.mrf.mxu0
    %v1565 = vadd.f32 0.0, %v1564
    %v1566 = vpop.f32.mrf.mxu0
    %1567 = vmatprep.mubr.f32.mxu0 0.0
    %1568 = vmatmul.mubr.f32.gmra.mxu0 %v1476
    %v1569 = vpop.f32.mrf.mxu0
    %v1570 = vadd.f32 0.0, %v1569
    %v1571 = vpop.f32.mrf.mxu0
    %1572 = vmatprep.mubr.f32.mxu0 0.0
    %1573 = vmatmul.mubr.f32.gmra.mxu0 %v1476
    %v1574 = vpop.f32.mrf.mxu0
    %v1575 = vadd.f32 0.0, %v1574
    %v1576 = vpop.f32.mrf.mxu0
    %1577 = vmatprep.mubr.f32.mxu0 0.0
    %1578 = vmatmul.mubr.f32.gmra.mxu0 %v1476
    %v1579 = vpop.f32.mrf.mxu0
    %v1580 = vadd.f32 0.0, %v1579
    %v1581 = vpop.f32.mrf.mxu0
    %1582 = vdwg.mxu0
    %v1583 = vadd.f32 %v1153, %v1545
    %v1584 = vadd.f32 %v1158, %v1550
    %v1585 = vadd.f32 %v1163, %v1555
    %v1586 = vadd.f32 %v1168, %v1560
    %v1587 = vadd.f32 %v1173, %v1565
    %v1588 = vadd.f32 %v1178, %v1570
    %v1589 = vadd.f32 %v1183, %v1575
    %v1590 = vadd.f32 %v1188, %v1580
    %v1591 = vxor.u32 %v1583, 2147483648
    %v1592 = vxor.u32 %v1584, 2147483648
    %v1593 = vxor.u32 %v1585, 2147483648
    %v1594 = vxor.u32 %v1586, 2147483648
    %v1595 = vxor.u32 %v1587, 2147483648
    %v1596 = vxor.u32 %v1588, 2147483648
    %v1597 = vxor.u32 %v1589, 2147483648
    %v1598 = vxor.u32 %v1590, 2147483648
    %v1599 = vmul.f32 %v1591, 1.442695
    %v1600 = vpow.pop %v1599
    %v1601 = vmul.f32 %v1592, 1.442695
    %v1602 = vpow.pop %v1601
    %v1603 = vmul.f32 %v1593, 1.442695
    %v1604 = vpow.pop %v1603
    %v1605 = vmul.f32 %v1594, 1.442695
    %v1606 = vpow.pop %v1605
    %v1607 = vmul.f32 %v1595, 1.442695
    %v1608 = vpow.pop %v1607
    %v1609 = vmul.f32 %v1596, 1.442695
    %v1610 = vpow.pop %v1609
    %v1611 = vmul.f32 %v1597, 1.442695
    %v1612 = vpow.pop %v1611
    %v1613 = vmul.f32 %v1598, 1.442695
    %v1614 = vpow.pop %v1613
    %v1615 = vadd.f32 %v1600, 1.0
    %v1616 = vadd.f32 %v1602, 1.0
    %v1617 = vadd.f32 %v1604, 1.0
    %v1618 = vadd.f32 %v1606, 1.0
    %v1619 = vadd.f32 %v1608, 1.0
    %v1620 = vadd.f32 %v1610, 1.0
    %v1621 = vadd.f32 %v1612, 1.0
    %v1622 = vadd.f32 %v1614, 1.0
    %v1623 = vrcp.pop %v1615
    %v1624 = vmul.f32 1.0, %v1623
    %v1625 = vrcp.pop %v1616
    %v1626 = vmul.f32 1.0, %v1625
    %v1627 = vrcp.pop %v1617
    %v1628 = vmul.f32 1.0, %v1627
    %v1629 = vrcp.pop %v1618
    %v1630 = vmul.f32 1.0, %v1629
    %v1631 = vrcp.pop %v1619
    %v1632 = vmul.f32 1.0, %v1631
    %v1633 = vrcp.pop %v1620
    %v1634 = vmul.f32 1.0, %v1633
    %v1635 = vrcp.pop %v1621
    %v1636 = vmul.f32 1.0, %v1635
    %v1637 = vrcp.pop %v1622
    %v1638 = vmul.f32 1.0, %v1637
    %v1639 = vtanh.pop %v1583
    %v1640 = vtanh.pop %v1584
    %v1641 = vtanh.pop %v1585
    %v1642 = vtanh.pop %v1586
    %v1643 = vtanh.pop %v1587
    %v1644 = vtanh.pop %v1588
    %v1645 = vtanh.pop %v1589
    %v1646 = vtanh.pop %v1590
    %v1647 = vmul.f32 %v1624, 0.0
    %v1648 = vmul.f32 %v1626, 0.0
    %v1649 = vmul.f32 %v1628, 0.0
    %v1650 = vmul.f32 %v1630, 0.0
    %v1651 = vmul.f32 %v1632, 0.0
    %v1652 = vmul.f32 %v1634, 0.0
    %v1653 = vmul.f32 %v1636, 0.0
    %v1654 = vmul.f32 %v1638, 0.0
    %1663 = vrot.lane.b32.xlu0 %v1639, 32
    %v1664 = vpop.permute.xlu0 %1663
    %1665 = vrot.lane.b32.xlu0 %v1640, 32
    %v1666 = vpop.permute.xlu0 %1665
    %1667 = vrot.lane.b32.xlu0 %v1641, 32
    %v1668 = vpop.permute.xlu0 %1667
    %1669 = vrot.lane.b32.xlu0 %v1642, 32
    %v1670 = vpop.permute.xlu0 %1669
    %1671 = vrot.lane.b32.xlu0 %v1643, 32
    %v1672 = vpop.permute.xlu0 %1671
    %1673 = vrot.lane.b32.xlu0 %v1644, 32
    %v1674 = vpop.permute.xlu0 %1673
    %1675 = vrot.lane.b32.xlu0 %v1645, 32
    %v1676 = vpop.permute.xlu0 %1675
    %1677 = vrot.lane.b32.xlu0 %v1646, 32
    %v1678 = vpop.permute.xlu0 %1677
    %v1687 = vmul.f32 %v1624, %v1664
    %v1688 = vmul.f32 %v1626, %v1666
    %v1689 = vmul.f32 %v1628, %v1668
    %v1690 = vmul.f32 %v1630, %v1670
    %v1691 = vmul.f32 %v1632, %v1672
    %v1692 = vmul.f32 %v1634, %v1674
    %v1693 = vmul.f32 %v1636, %v1676
    %v1694 = vmul.f32 %v1638, %v1678
    %1703 = vrot.lane.b32.xlu0 %v1687, 32
    %v1704 = vpop.permute.xlu0 %1703
    %1705 = vrot.lane.b32.xlu0 %v1688, 32
    %v1706 = vpop.permute.xlu0 %1705
    %1707 = vrot.lane.b32.xlu0 %v1689, 32
    %v1708 = vpop.permute.xlu0 %1707
    %1709 = vrot.lane.b32.xlu0 %v1690, 32
    %v1710 = vpop.permute.xlu0 %1709
    %1711 = vrot.lane.b32.xlu0 %v1691, 32
    %v1712 = vpop.permute.xlu0 %1711
    %1713 = vrot.lane.b32.xlu0 %v1692, 32
    %v1714 = vpop.permute.xlu0 %1713
    %1715 = vrot.lane.b32.xlu0 %v1693, 32
    %v1716 = vpop.permute.xlu0 %1715
    %1717 = vrot.lane.b32.xlu0 %v1694, 32
    %v1718 = vpop.permute.xlu0 %1717
    %v1727 = vadd.f32 %v1647, %v1704
    %v1728 = vadd.f32 %v1648, %v1706
    %v1729 = vadd.f32 %v1649, %v1708
    %v1730 = vadd.f32 %v1650, %v1710
    %v1731 = vadd.f32 %v1651, %v1712
    %v1732 = vadd.f32 %v1652, %v1714
    %v1733 = vadd.f32 %v1653, %v1716
    %v1734 = vadd.f32 %v1654, %v1718
    %v1735 = vtanh.pop %v1727
    %v1736 = vtanh.pop %v1728
    %v1737 = vtanh.pop %v1729
    %v1738 = vtanh.pop %v1730
    %v1739 = vtanh.pop %v1731
    %v1740 = vtanh.pop %v1732
    %v1741 = vtanh.pop %v1733
    %v1742 = vtanh.pop %v1734
    %1751 = vrot.lane.b32.xlu0 %v1735, 32
    %v1752 = vpop.permute.xlu0 %1751
    %1753 = vrot.lane.b32.xlu0 %v1736, 32
    %v1754 = vpop.permute.xlu0 %1753
    %1755 = vrot.lane.b32.xlu0 %v1737, 32
    %v1756 = vpop.permute.xlu0 %1755
    %1757 = vrot.lane.b32.xlu0 %v1738, 32
    %v1758 = vpop.permute.xlu0 %1757
    %1759 = vrot.lane.b32.xlu0 %v1739, 32
    %v1760 = vpop.permute.xlu0 %1759
    %1761 = vrot.lane.b32.xlu0 %v1740, 32
    %v1762 = vpop.permute.xlu0 %1761
    %1763 = vrot.lane.b32.xlu0 %v1741, 32
    %v1764 = vpop.permute.xlu0 %1763
    %1765 = vrot.lane.b32.xlu0 %v1742, 32
    %v1766 = vpop.permute.xlu0 %1765
    %v1775 = vmul.f32 %v1624, %v1752
    %v1776 = vmul.f32 %v1626, %v1754
    %v1777 = vmul.f32 %v1628, %v1756
    %v1778 = vmul.f32 %v1630, %v1758
    %v1779 = vmul.f32 %v1632, %v1760
    %v1780 = vmul.f32 %v1634, %v1762
    %v1781 = vmul.f32 %v1636, %v1764
    %v1782 = vmul.f32 %v1638, %v1766
    %vm1783 = vcmp.ge.f32.partialorder %v1775, 0.0
    %vm1784 = vcmp.ge.f32.partialorder %v1776, 0.0
    %vm1785 = vcmp.ge.f32.partialorder %v1777, 0.0
    %vm1786 = vcmp.ge.f32.partialorder %v1778, 0.0
    %vm1787 = vcmp.ge.f32.partialorder %v1779, 0.0
    %vm1788 = vcmp.ge.f32.partialorder %v1780, 0.0
    %vm1789 = vcmp.ge.f32.partialorder %v1781, 0.0
    %vm1790 = vcmp.ge.f32.partialorder %v1782, 0.0
    %v1791 = vstv %s43
    %v1792 = vmul.f32 %v1791, %v1775
    %v1793 = vmul.f32 %v1791, %v1776
    %v1794 = vmul.f32 %v1791, %v1777
    %v1795 = vmul.f32 %v1791, %v1778
    %v1796 = vmul.f32 %v1791, %v1779
    %v1797 = vmul.f32 %v1791, %v1780
    %v1798 = vmul.f32 %v1791, %v1781
    %v1799 = vmul.f32 %v1791, %v1782
    %v1800 = vsel %vm1783, %v1775, %v1792
    %v1801 = vsel %vm1784, %v1776, %v1793
    %v1802 = vsel %vm1785, %v1777, %v1794
    %v1803 = vsel %vm1786, %v1778, %v1795
    %v1804 = vsel %vm1787, %v1779, %v1796
    %v1805 = vsel %vm1788, %v1780, %v1797
    %v1806 = vsel %vm1789, %v1781, %v1798
    %v1807 = vsel %vm1790, %v1782, %v1799
    %1816 = vrot.lane.b32.xlu0 %v1775, 64
    %v1817 = vpop.permute.xlu0 %1816
    %1818 = vrot.lane.b32.xlu0 %v1776, 64
    %v1819 = vpop.permute.xlu0 %1818
    %1820 = vrot.lane.b32.xlu0 %v1777, 64
    %v1821 = vpop.permute.xlu0 %1820
    %1822 = vrot.lane.b32.xlu0 %v1778, 64
    %v1823 = vpop.permute.xlu0 %1822
    %1824 = vrot.lane.b32.xlu0 %v1779, 64
    %v1825 = vpop.permute.xlu0 %1824
    %1826 = vrot.lane.b32.xlu0 %v1780, 64
    %v1827 = vpop.permute.xlu0 %1826
    %1828 = vrot.lane.b32.xlu0 %v1781, 64
    %v1829 = vpop.permute.xlu0 %1828
    %1830 = vrot.lane.b32.xlu0 %v1782, 64
    %v1831 = vpop.permute.xlu0 %1830
    %v1832 = vsel %vm893, %v1817, 0
    %v1834 = vsel %vm893, %v1819, 0
    %v1836 = vsel %vm893, %v1821, 0
    %v1838 = vsel %vm893, %v1823, 0
    %v1840 = vsel %vm893, %v1825, 0
    %v1842 = vsel %vm893, %v1827, 0
    %v1844 = vsel %vm893, %v1829, 0
    %v1846 = vsel %vm893, %v1831, 0
    %1848 = vmatprep.subr.mxu0 0.0
    %1849 = vmatpush1.msra.mxu0 0.0
    %1850 = vmatprep.subr.mxu0 0.0
    %1851 = vmatpush1.msra.mxu0 0.0
    %1852 = vmatprep.subr.mxu0 0.0
    %1853 = vmatpush1.msra.mxu0 0.0
    %1854 = vmatprep.subr.mxu0 0.0
    %1855 = vmatpush1.msra.mxu0 0.0
    %1856 = vmatprep.subr.mxu0 0.0
    %1857 = vmatpush1.msra.mxu0 0.0
    %1858 = vmatprep.subr.mxu0 0.0
    %1859 = vmatpush1.msra.mxu0 0.0
    %1860 = vmatprep.subr.mxu0 0.0
    %1861 = vmatpush1.msra.mxu0 0.0
    %1862 = vmatprep.subr.mxu0 0.0
    %1863 = vmatpush1.msra.mxu0 0.0
    %1864 = vmatprep.subr.mxu0 0.0
    %1865 = vmatpush1.msra.mxu0 0.0
    %1866 = vmatprep.subr.mxu0 0.0
    %1867 = vmatpush1.msra.mxu0 0.0
    %1868 = vmatprep.subr.mxu0 0.0
    %1869 = vmatpush1.msra.mxu0 0.0
    %1870 = vmatprep.subr.mxu0 0.0
    %1871 = vmatpush1.msra.mxu0 0.0
    %1872 = vmatprep.subr.mxu0 0.0
    %1873 = vmatpush1.msra.mxu0 %v1474
    %1874 = vmatprep.subr.mxu0 0.0
    %1875 = vmatpush1.msra.mxu0 %v1473
    %1876 = vmatprep.subr.mxu0 0.0
    %1877 = vmatpush1.msra.mxu0 %v1472
    %1878 = vmatprep.subr.mxu0 0.0
    %1879 = vmatpush1.msra.mxu0 %v1471
    %1880 = vmatprep.subr.mxu0 0.0
    %1881 = vmatpush2.msra.mxu0 0.0
    %1882 = vmatprep.subr.mxu0 0.0
    %1883 = vmatpush2.msra.mxu0 0.0
    %1884 = vmatprep.subr.mxu0 0.0
    %1885 = vmatpush2.msra.mxu0 0.0
    %1886 = vmatprep.subr.mxu0 0.0
    %1887 = vmatpush2.msra.mxu0 0.0
    %1888 = vmatprep.subr.mxu0 0.0
    %1889 = vmatpush2.msra.mxu0 0.0
    %1890 = vmatprep.subr.mxu0 0.0
    %1891 = vmatpush2.msra.mxu0 0.0
    %1892 = vmatprep.subr.mxu0 0.0
    %1893 = vmatpush2.msra.mxu0 0.0
    %1894 = vmatprep.subr.mxu0 0.0
    %1895 = vmatpush2.msra.mxu0 0.0
    %1896 = vmatprep.subr.mxu0 0.0
    %1897 = vmatpush2.msra.mxu0 0.0
    %1898 = vmatprep.subr.mxu0 0.0
    %1899 = vmatpush2.msra.mxu0 0.0
    %1900 = vmatprep.subr.mxu0 0.0
    %1901 = vmatpush2.msra.mxu0 0.0
    %1902 = vmatprep.subr.mxu0 0.0
    %1903 = vmatpush2.msra.mxu0 0.0
    %1904 = vmatprep.subr.mxu0 0.0
    %1905 = vmatpush2.msra.mxu0 0.0
    %1906 = vmatprep.subr.mxu0 0.0
    %1907 = vmatpush2.msra.mxu0 0.0
    %1908 = vmatprep.subr.mxu0 0.0
    %1909 = vmatpush2.msra.mxu0 0.0
    %1910 = vmatprep.subr.mxu0 0.0
    %1911 = vmatpush2.msra.mxu0 0.0
    %1912 = vmatprep.mubr.f32.mxu0 0.0
    %1913 = vmatmul.mubr.f32.gmra.mxu0 %v1832
    %v1914 = vpop.f32.mrf.mxu0
    %v1915 = vadd.f32 0.0, %v1914
    %v1916 = vpop.f32.mrf.mxu0
    %1917 = vmatprep.mubr.f32.mxu0 0.0
    %1918 = vmatmul.mubr.f32.gmra.mxu0 %v1834
    %v1919 = vpop.f32.mrf.mxu0
    %v1920 = vadd.f32 0.0, %v1919
    %v1921 = vpop.f32.mrf.mxu0
    %1922 = vmatprep.mubr.f32.mxu0 0.0
    %1923 = vmatmul.mubr.f32.gmra.mxu0 %v1836
    %v1924 = vpop.f32.mrf.mxu0
    %v1925 = vadd.f32 0.0, %v1924
    %v1926 = vpop.f32.mrf.mxu0
    %1927 = vmatprep.mubr.f32.mxu0 0.0
    %1928 = vmatmul.mubr.f32.gmra.mxu0 %v1838
    %v1929 = vpop.f32.mrf.mxu0
    %v1930 = vadd.f32 0.0, %v1929
    %v1931 = vpop.f32.mrf.mxu0
    %1932 = vmatprep.mubr.f32.mxu0 0.0
    %1933 = vmatmul.mubr.f32.gmra.mxu0 %v1840
    %v1934 = vpop.f32.mrf.mxu0
    %v1935 = vadd.f32 0.0, %v1934
    %v1936 = vpop.f32.mrf.mxu0
    %1937 = vmatprep.mubr.f32.mxu0 0.0
    %1938 = vmatmul.mubr.f32.gmra.mxu0 %v1842
    %v1939 = vpop.f32.mrf.mxu0
    %v1940 = vadd.f32 0.0, %v1939
    %v1941 = vpop.f32.mrf.mxu0
    %1942 = vmatprep.mubr.f32.mxu0 0.0
    %1943 = vmatmul.mubr.f32.gmra.mxu0 %v1844
    %v1944 = vpop.f32.mrf.mxu0
    %v1945 = vadd.f32 0.0, %v1944
    %v1946 = vpop.f32.mrf.mxu0
    %1947 = vmatprep.mubr.f32.mxu0 0.0
    %1948 = vmatmul.mubr.f32.gmra.mxu0 %v1846
    %v1949 = vpop.f32.mrf.mxu0
    %v1950 = vadd.f32 0.0, %v1949
    %v1951 = vpop.f32.mrf.mxu0
    %1952 = vdwg.mxu0
    %v1953 = vadd.f32 %v1193, %v1915
    %v1954 = vadd.f32 %v1198, %v1920
    %v1955 = vadd.f32 %v1203, %v1925
    %v1956 = vadd.f32 %v1208, %v1930
    %v1957 = vadd.f32 %v1213, %v1935
    %v1958 = vadd.f32 %v1218, %v1940
    %v1959 = vadd.f32 %v1223, %v1945
    %v1960 = vadd.f32 %v1228, %v1950
    %v1961 = vxor.u32 %v1953, 2147483648
    %v1962 = vxor.u32 %v1954, 2147483648
    %v1963 = vxor.u32 %v1955, 2147483648
    %v1964 = vxor.u32 %v1956, 2147483648
    %v1965 = vxor.u32 %v1957, 2147483648
    %v1966 = vxor.u32 %v1958, 2147483648
    %v1967 = vxor.u32 %v1959, 2147483648
    %v1968 = vxor.u32 %v1960, 2147483648
    %v1969 = vmul.f32 %v1961, 1.442695
    %v1970 = vpow.pop %v1969
    %v1971 = vmul.f32 %v1962, 1.442695
    %v1972 = vpow.pop %v1971
    %v1973 = vmul.f32 %v1963, 1.442695
    %v1974 = vpow.pop %v1973
    %v1975 = vmul.f32 %v1964, 1.442695
    %v1976 = vpow.pop %v1975
    %v1977 = vmul.f32 %v1965, 1.442695
    %v1978 = vpow.pop %v1977
    %v1979 = vmul.f32 %v1966, 1.442695
    %v1980 = vpow.pop %v1979
    %v1981 = vmul.f32 %v1967, 1.442695
    %v1982 = vpow.pop %v1981
    %v1983 = vmul.f32 %v1968, 1.442695
    %v1984 = vpow.pop %v1983
    %v1985 = vadd.f32 %v1970, 1.0
    %v1986 = vadd.f32 %v1972, 1.0
    %v1987 = vadd.f32 %v1974, 1.0
    %v1988 = vadd.f32 %v1976, 1.0
    %v1989 = vadd.f32 %v1978, 1.0
    %v1990 = vadd.f32 %v1980, 1.0
    %v1991 = vadd.f32 %v1982, 1.0
    %v1992 = vadd.f32 %v1984, 1.0
    %v1993 = vrcp.pop %v1985
    %v1994 = vmul.f32 1.0, %v1993
    %v1995 = vrcp.pop %v1986
    %v1996 = vmul.f32 1.0, %v1995
    %v1997 = vrcp.pop %v1987
    %v1998 = vmul.f32 1.0, %v1997
    %v1999 = vrcp.pop %v1988
    %v2000 = vmul.f32 1.0, %v1999
    %v2001 = vrcp.pop %v1989
    %v2002 = vmul.f32 1.0, %v2001
    %v2003 = vrcp.pop %v1990
    %v2004 = vmul.f32 1.0, %v2003
    %v2005 = vrcp.pop %v1991
    %v2006 = vmul.f32 1.0, %v2005
    %v2007 = vrcp.pop %v1992
    %v2008 = vmul.f32 1.0, %v2007
    %v2009 = vtanh.pop %v1953
    %v2010 = vtanh.pop %v1954
    %v2011 = vtanh.pop %v1955
    %v2012 = vtanh.pop %v1956
    %v2013 = vtanh.pop %v1957
    %v2014 = vtanh.pop %v1958
    %v2015 = vtanh.pop %v1959
    %v2016 = vtanh.pop %v1960
    %v2017 = vmul.f32 %v1994, %v1727
    %v2018 = vmul.f32 %v1996, %v1728
    %v2019 = vmul.f32 %v1998, %v1729
    %v2020 = vmul.f32 %v2000, %v1730
    %v2021 = vmul.f32 %v2002, %v1731
    %v2022 = vmul.f32 %v2004, %v1732
    %v2023 = vmul.f32 %v2006, %v1733
    %v2024 = vmul.f32 %v2008, %v1734
    %2033 = vrot.lane.b32.xlu0 %v2009, 32
    %v2034 = vpop.permute.xlu0 %2033
    %2035 = vrot.lane.b32.xlu0 %v2010, 32
    %v2036 = vpop.permute.xlu0 %2035
    %2037 = vrot.lane.b32.xlu0 %v2011, 32
    %v2038 = vpop.permute.xlu0 %2037
    %2039 = vrot.lane.b32.xlu0 %v2012, 32
    %v2040 = vpop.permute.xlu0 %2039
    %2041 = vrot.lane.b32.xlu0 %v2013, 32
    %v2042 = vpop.permute.xlu0 %2041
    %2043 = vrot.lane.b32.xlu0 %v2014, 32
    %v2044 = vpop.permute.xlu0 %2043
    %2045 = vrot.lane.b32.xlu0 %v2015, 32
    %v2046 = vpop.permute.xlu0 %2045
    %2047 = vrot.lane.b32.xlu0 %v2016, 32
    %v2048 = vpop.permute.xlu0 %2047
    %v2057 = vmul.f32 %v1994, %v2034
    %v2058 = vmul.f32 %v1996, %v2036
    %v2059 = vmul.f32 %v1998, %v2038
    %v2060 = vmul.f32 %v2000, %v2040
    %v2061 = vmul.f32 %v2002, %v2042
    %v2062 = vmul.f32 %v2004, %v2044
    %v2063 = vmul.f32 %v2006, %v2046
    %v2064 = vmul.f32 %v2008, %v2048
    %2073 = vrot.lane.b32.xlu0 %v2057, 32
    %v2074 = vpop.permute.xlu0 %2073
    %2075 = vrot.lane.b32.xlu0 %v2058, 32
    %v2076 = vpop.permute.xlu0 %2075
    %2077 = vrot.lane.b32.xlu0 %v2059, 32
    %v2078 = vpop.permute.xlu0 %2077
    %2079 = vrot.lane.b32.xlu0 %v2060, 32
    %v2080 = vpop.permute.xlu0 %2079
    %2081 = vrot.lane.b32.xlu0 %v2061, 32
    %v2082 = vpop.permute.xlu0 %2081
    %2083 = vrot.lane.b32.xlu0 %v2062, 32
    %v2084 = vpop.permute.xlu0 %2083
    %2085 = vrot.lane.b32.xlu0 %v2063, 32
    %v2086 = vpop.permute.xlu0 %2085
    %2087 = vrot.lane.b32.xlu0 %v2064, 32
    %v2088 = vpop.permute.xlu0 %2087
    %v2097 = vadd.f32 %v2017, %v2074
    %v2098 = vadd.f32 %v2018, %v2076
    %v2099 = vadd.f32 %v2019, %v2078
    %v2100 = vadd.f32 %v2020, %v2080
    %v2101 = vadd.f32 %v2021, %v2082
    %v2102 = vadd.f32 %v2022, %v2084
    %v2103 = vadd.f32 %v2023, %v2086
    %v2104 = vadd.f32 %v2024, %v2088
    %v2105 = vtanh.pop %v2097
    %v2106 = vtanh.pop %v2098
    %v2107 = vtanh.pop %v2099
    %v2108 = vtanh.pop %v2100
    %v2109 = vtanh.pop %v2101
    %v2110 = vtanh.pop %v2102
    %v2111 = vtanh.pop %v2103
    %v2112 = vtanh.pop %v2104
    %2121 = vrot.lane.b32.xlu0 %v2105, 32
    %v2122 = vpop.permute.xlu0 %2121
    %2123 = vrot.lane.b32.xlu0 %v2106, 32
    %v2124 = vpop.permute.xlu0 %2123
    %2125 = vrot.lane.b32.xlu0 %v2107, 32
    %v2126 = vpop.permute.xlu0 %2125
    %2127 = vrot.lane.b32.xlu0 %v2108, 32
    %v2128 = vpop.permute.xlu0 %2127
    %2129 = vrot.lane.b32.xlu0 %v2109, 32
    %v2130 = vpop.permute.xlu0 %2129
    %2131 = vrot.lane.b32.xlu0 %v2110, 32
    %v2132 = vpop.permute.xlu0 %2131
    %2133 = vrot.lane.b32.xlu0 %v2111, 32
    %v2134 = vpop.permute.xlu0 %2133
    %2135 = vrot.lane.b32.xlu0 %v2112, 32
    %v2136 = vpop.permute.xlu0 %2135
    %v2145 = vmul.f32 %v1994, %v2122
    %v2146 = vmul.f32 %v1996, %v2124
    %v2147 = vmul.f32 %v1998, %v2126
    %v2148 = vmul.f32 %v2000, %v2128
    %v2149 = vmul.f32 %v2002, %v2130
    %v2150 = vmul.f32 %v2004, %v2132
    %v2151 = vmul.f32 %v2006, %v2134
    %v2152 = vmul.f32 %v2008, %v2136
    %vm2153 = vcmp.ge.f32.partialorder %v2145, 0.0
    %vm2154 = vcmp.ge.f32.partialorder %v2146, 0.0
    %vm2155 = vcmp.ge.f32.partialorder %v2147, 0.0
    %vm2156 = vcmp.ge.f32.partialorder %v2148, 0.0
    %vm2157 = vcmp.ge.f32.partialorder %v2149, 0.0
    %vm2158 = vcmp.ge.f32.partialorder %v2150, 0.0
    %vm2159 = vcmp.ge.f32.partialorder %v2151, 0.0
    %vm2160 = vcmp.ge.f32.partialorder %v2152, 0.0
    %v2161 = vmul.f32 %v1791, %v2145
    %v2162 = vmul.f32 %v1791, %v2146
    %v2163 = vmul.f32 %v1791, %v2147
    %v2164 = vmul.f32 %v1791, %v2148
    %v2165 = vmul.f32 %v1791, %v2149
    %v2166 = vmul.f32 %v1791, %v2150
    %v2167 = vmul.f32 %v1791, %v2151
    %v2168 = vmul.f32 %v1791, %v2152
    %v2169 = vsel %vm2153, %v2145, %v2161
    %v2170 = vsel %vm2154, %v2146, %v2162
    %v2171 = vsel %vm2155, %v2147, %v2163
    %v2172 = vsel %vm2156, %v2148, %v2164
    %v2173 = vsel %vm2157, %v2149, %v2165
    %v2174 = vsel %vm2158, %v2150, %v2166
    %v2175 = vsel %vm2159, %v2151, %v2167
    %v2176 = vsel %vm2160, %v2152, %v2168
    %2185 = vrot.lane.b32.xlu0 %v2145, 64
    %v2186 = vpop.permute.xlu0 %2185
    %2187 = vrot.lane.b32.xlu0 %v2146, 64
    %v2188 = vpop.permute.xlu0 %2187
    %2189 = vrot.lane.b32.xlu0 %v2147, 64
    %v2190 = vpop.permute.xlu0 %2189
    %2191 = vrot.lane.b32.xlu0 %v2148, 64
    %v2192 = vpop.permute.xlu0 %2191
    %2193 = vrot.lane.b32.xlu0 %v2149, 64
    %v2194 = vpop.permute.xlu0 %2193
    %2195 = vrot.lane.b32.xlu0 %v2150, 64
    %v2196 = vpop.permute.xlu0 %2195
    %2197 = vrot.lane.b32.xlu0 %v2151, 64
    %v2198 = vpop.permute.xlu0 %2197
    %2199 = vrot.lane.b32.xlu0 %v2152, 64
    %v2200 = vpop.permute.xlu0 %2199
    %v2201 = vsel %vm893, %v2186, 0
    %v2203 = vsel %vm893, %v2188, 0
    %v2205 = vsel %vm893, %v2190, 0
    %v2207 = vsel %vm893, %v2192, 0
    %v2209 = vsel %vm893, %v2194, 0
    %v2211 = vsel %vm893, %v2196, 0
    %v2213 = vsel %vm893, %v2198, 0
    %v2215 = vsel %vm893, %v2200, 0
    %2217 = vmatprep.subr.mxu0 0.0
    %2218 = vmatpush1.msra.mxu0 0.0
    %2219 = vmatprep.subr.mxu0 0.0
    %2220 = vmatpush1.msra.mxu0 0.0
    %2221 = vmatprep.subr.mxu0 0.0
    %2222 = vmatpush1.msra.mxu0 0.0
    %2223 = vmatprep.subr.mxu0 0.0
    %2224 = vmatpush1.msra.mxu0 0.0
    %2225 = vmatprep.subr.mxu0 0.0
    %2226 = vmatpush1.msra.mxu0 0.0
    %2227 = vmatprep.subr.mxu0 0.0
    %2228 = vmatpush1.msra.mxu0 0.0
    %2229 = vmatprep.subr.mxu0 0.0
    %2230 = vmatpush1.msra.mxu0 0.0
    %2231 = vmatprep.subr.mxu0 0.0
    %2232 = vmatpush1.msra.mxu0 0.0
    %2233 = vmatprep.subr.mxu0 0.0
    %2234 = vmatpush1.msra.mxu0 0.0
    %2235 = vmatprep.subr.mxu0 0.0
    %2236 = vmatpush1.msra.mxu0 0.0
    %2237 = vmatprep.subr.mxu0 0.0
    %2238 = vmatpush1.msra.mxu0 0.0
    %2239 = vmatprep.subr.mxu0 0.0
    %2240 = vmatpush1.msra.mxu0 0.0
    %2241 = vmatprep.subr.mxu0 0.0
    %2242 = vmatpush1.msra.mxu0 %v1474
    %2243 = vmatprep.subr.mxu0 0.0
    %2244 = vmatpush1.msra.mxu0 %v1473
    %2245 = vmatprep.subr.mxu0 0.0
    %2246 = vmatpush1.msra.mxu0 %v1472
    %2247 = vmatprep.subr.mxu0 0.0
    %2248 = vmatpush1.msra.mxu0 %v1471
    %2249 = vmatprep.subr.mxu0 0.0
    %2250 = vmatpush2.msra.mxu0 0.0
    %2251 = vmatprep.subr.mxu0 0.0
    %2252 = vmatpush2.msra.mxu0 0.0
    %2253 = vmatprep.subr.mxu0 0.0
    %2254 = vmatpush2.msra.mxu0 0.0
    %2255 = vmatprep.subr.mxu0 0.0
    %2256 = vmatpush2.msra.mxu0 0.0
    %2257 = vmatprep.subr.mxu0 0.0
    %2258 = vmatpush2.msra.mxu0 0.0
    %2259 = vmatprep.subr.mxu0 0.0
    %2260 = vmatpush2.msra.mxu0 0.0
    %2261 = vmatprep.subr.mxu0 0.0
    %2262 = vmatpush2.msra.mxu0 0.0
    %2263 = vmatprep.subr.mxu0 0.0
    %2264 = vmatpush2.msra.mxu0 0.0
    %2265 = vmatprep.subr.mxu0 0.0
    %2266 = vmatpush2.msra.mxu0 0.0
    %2267 = vmatprep.subr.mxu0 0.0
    %2268 = vmatpush2.msra.mxu0 0.0
    %2269 = vmatprep.subr.mxu0 0.0
    %2270 = vmatpush2.msra.mxu0 0.0
    %2271 = vmatprep.subr.mxu0 0.0
    %2272 = vmatpush2.msra.mxu0 0.0
    %2273 = vmatprep.subr.mxu0 0.0
    %2274 = vmatpush2.msra.mxu0 0.0
    %2275 = vmatprep.subr.mxu0 0.0
    %2276 = vmatpush2.msra.mxu0 0.0
    %2277 = vmatprep.subr.mxu0 0.0
    %2278 = vmatpush2.msra.mxu0 0.0
    %2279 = vmatprep.subr.mxu0 0.0
    %2280 = vmatpush2.msra.mxu0 0.0
    %2281 = vmatprep.mubr.f32.mxu0 0.0
    %2282 = vmatmul.mubr.f32.gmra.mxu0 %v2201
    %v2283 = vpop.f32.mrf.mxu0
    %v2284 = vadd.f32 0.0, %v2283
    %v2285 = vpop.f32.mrf.mxu0
    %2286 = vmatprep.mubr.f32.mxu0 0.0
    %2287 = vmatmul.mubr.f32.gmra.mxu0 %v2203
    %v2288 = vpop.f32.mrf.mxu0
    %v2289 = vadd.f32 0.0, %v2288
    %v2290 = vpop.f32.mrf.mxu0
    %2291 = vmatprep.mubr.f32.mxu0 0.0
    %2292 = vmatmul.mubr.f32.gmra.mxu0 %v2205
    %v2293 = vpop.f32.mrf.mxu0
    %v2294 = vadd.f32 0.0, %v2293
    %v2295 = vpop.f32.mrf.mxu0
    %2296 = vmatprep.mubr.f32.mxu0 0.0
    %2297 = vmatmul.mubr.f32.gmra.mxu0 %v2207
    %v2298 = vpop.f32.mrf.mxu0
    %v2299 = vadd.f32 0.0, %v2298
    %v2300 = vpop.f32.mrf.mxu0
    %2301 = vmatprep.mubr.f32.mxu0 0.0
    %2302 = vmatmul.mubr.f32.gmra.mxu0 %v2209
    %v2303 = vpop.f32.mrf.mxu0
    %v2304 = vadd.f32 0.0, %v2303
    %v2305 = vpop.f32.mrf.mxu0
    %2306 = vmatprep.mubr.f32.mxu0 0.0
    %2307 = vmatmul.mubr.f32.gmra.mxu0 %v2211
    %v2308 = vpop.f32.mrf.mxu0
    %v2309 = vadd.f32 0.0, %v2308
    %v2310 = vpop.f32.mrf.mxu0
    %2311 = vmatprep.mubr.f32.mxu0 0.0
    %2312 = vmatmul.mubr.f32.gmra.mxu0 %v2213
    %v2313 = vpop.f32.mrf.mxu0
    %v2314 = vadd.f32 0.0, %v2313
    %v2315 = vpop.f32.mrf.mxu0
    %2316 = vmatprep.mubr.f32.mxu0 0.0
    %2317 = vmatmul.mubr.f32.gmra.mxu0 %v2215
    %v2318 = vpop.f32.mrf.mxu0
    %v2319 = vadd.f32 0.0, %v2318
    %v2320 = vpop.f32.mrf.mxu0
    %2321 = vdwg.mxu0
    %v2322 = vadd.f32 %v1233, %v2284
    %v2323 = vadd.f32 %v1238, %v2289
    %v2324 = vadd.f32 %v1243, %v2294
    %v2325 = vadd.f32 %v1248, %v2299
    %v2326 = vadd.f32 %v1253, %v2304
    %v2327 = vadd.f32 %v1258, %v2309
    %v2328 = vadd.f32 %v1263, %v2314
    %v2329 = vadd.f32 %v1268, %v2319
    %v2330 = vxor.u32 %v2322, 2147483648
    %v2331 = vxor.u32 %v2323, 2147483648
    %v2332 = vxor.u32 %v2324, 2147483648
    %v2333 = vxor.u32 %v2325, 2147483648
    %v2334 = vxor.u32 %v2326, 2147483648
    %v2335 = vxor.u32 %v2327, 2147483648
    %v2336 = vxor.u32 %v2328, 2147483648
    %v2337 = vxor.u32 %v2329, 2147483648
    %v2338 = vmul.f32 %v2330, 1.442695
    %v2339 = vpow.pop %v2338
    %v2340 = vmul.f32 %v2331, 1.442695
    %v2341 = vpow.pop %v2340
    %v2342 = vmul.f32 %v2332, 1.442695
    %v2343 = vpow.pop %v2342
    %v2344 = vmul.f32 %v2333, 1.442695
    %v2345 = vpow.pop %v2344
    %v2346 = vmul.f32 %v2334, 1.442695
    %v2347 = vpow.pop %v2346
    %v2348 = vmul.f32 %v2335, 1.442695
    %v2349 = vpow.pop %v2348
    %v2350 = vmul.f32 %v2336, 1.442695
    %v2351 = vpow.pop %v2350
    %v2352 = vmul.f32 %v2337, 1.442695
    %v2353 = vpow.pop %v2352
    %v2354 = vadd.f32 %v2339, 1.0
    %v2355 = vadd.f32 %v2341, 1.0
    %v2356 = vadd.f32 %v2343, 1.0
    %v2357 = vadd.f32 %v2345, 1.0
    %v2358 = vadd.f32 %v2347, 1.0
    %v2359 = vadd.f32 %v2349, 1.0
    %v2360 = vadd.f32 %v2351, 1.0
    %v2361 = vadd.f32 %v2353, 1.0
    %v2362 = vrcp.pop %v2354
    %v2363 = vmul.f32 1.0, %v2362
    %v2364 = vrcp.pop %v2355
    %v2365 = vmul.f32 1.0, %v2364
    %v2366 = vrcp.pop %v2356
    %v2367 = vmul.f32 1.0, %v2366
    %v2368 = vrcp.pop %v2357
    %v2369 = vmul.f32 1.0, %v2368
    %v2370 = vrcp.pop %v2358
    %v2371 = vmul.f32 1.0, %v2370
    %v2372 = vrcp.pop %v2359
    %v2373 = vmul.f32 1.0, %v2372
    %v2374 = vrcp.pop %v2360
    %v2375 = vmul.f32 1.0, %v2374
    %v2376 = vrcp.pop %v2361
    %v2377 = vmul.f32 1.0, %v2376
    %v2378 = vtanh.pop %v2322
    %v2379 = vtanh.pop %v2323
    %v2380 = vtanh.pop %v2324
    %v2381 = vtanh.pop %v2325
    %v2382 = vtanh.pop %v2326
    %v2383 = vtanh.pop %v2327
    %v2384 = vtanh.pop %v2328
    %v2385 = vtanh.pop %v2329
    %v2386 = vmul.f32 %v2363, %v2097
    %v2387 = vmul.f32 %v2365, %v2098
    %v2388 = vmul.f32 %v2367, %v2099
    %v2389 = vmul.f32 %v2369, %v2100
    %v2390 = vmul.f32 %v2371, %v2101
    %v2391 = vmul.f32 %v2373, %v2102
    %v2392 = vmul.f32 %v2375, %v2103
    %v2393 = vmul.f32 %v2377, %v2104
    %2402 = vrot.lane.b32.xlu0 %v2378, 32
    %v2403 = vpop.permute.xlu0 %2402
    %2404 = vrot.lane.b32.xlu0 %v2379, 32
    %v2405 = vpop.permute.xlu0 %2404
    %2406 = vrot.lane.b32.xlu0 %v2380, 32
    %v2407 = vpop.permute.xlu0 %2406
    %2408 = vrot.lane.b32.xlu0 %v2381, 32
    %v2409 = vpop.permute.xlu0 %2408
    %2410 = vrot.lane.b32.xlu0 %v2382, 32
    %v2411 = vpop.permute.xlu0 %2410
    %2412 = vrot.lane.b32.xlu0 %v2383, 32
    %v2413 = vpop.permute.xlu0 %2412
    %2414 = vrot.lane.b32.xlu0 %v2384, 32
    %v2415 = vpop.permute.xlu0 %2414
    %2416 = vrot.lane.b32.xlu0 %v2385, 32
    %v2417 = vpop.permute.xlu0 %2416
    %v2426 = vmul.f32 %v2363, %v2403
    %v2427 = vmul.f32 %v2365, %v2405
    %v2428 = vmul.f32 %v2367, %v2407
    %v2429 = vmul.f32 %v2369, %v2409
    %v2430 = vmul.f32 %v2371, %v2411
    %v2431 = vmul.f32 %v2373, %v2413
    %v2432 = vmul.f32 %v2375, %v2415
    %v2433 = vmul.f32 %v2377, %v2417
    %2442 = vrot.lane.b32.xlu0 %v2426, 32
    %v2443 = vpop.permute.xlu0 %2442
    %2444 = vrot.lane.b32.xlu0 %v2427, 32
    %v2445 = vpop.permute.xlu0 %2444
    %2446 = vrot.lane.b32.xlu0 %v2428, 32
    %v2447 = vpop.permute.xlu0 %2446
    %2448 = vrot.lane.b32.xlu0 %v2429, 32
    %v2449 = vpop.permute.xlu0 %2448
    %2450 = vrot.lane.b32.xlu0 %v2430, 32
    %v2451 = vpop.permute.xlu0 %2450
    %2452 = vrot.lane.b32.xlu0 %v2431, 32
    %v2453 = vpop.permute.xlu0 %2452
    %2454 = vrot.lane.b32.xlu0 %v2432, 32
    %v2455 = vpop.permute.xlu0 %2454
    %2456 = vrot.lane.b32.xlu0 %v2433, 32
    %v2457 = vpop.permute.xlu0 %2456
    %v2466 = vadd.f32 %v2386, %v2443
    %v2467 = vadd.f32 %v2387, %v2445
    %v2468 = vadd.f32 %v2388, %v2447
    %v2469 = vadd.f32 %v2389, %v2449
    %v2470 = vadd.f32 %v2390, %v2451
    %v2471 = vadd.f32 %v2391, %v2453
    %v2472 = vadd.f32 %v2392, %v2455
    %v2473 = vadd.f32 %v2393, %v2457
    %v2474 = vtanh.pop %v2466
    %v2475 = vtanh.pop %v2467
    %v2476 = vtanh.pop %v2468
    %v2477 = vtanh.pop %v2469
    %v2478 = vtanh.pop %v2470
    %v2479 = vtanh.pop %v2471
    %v2480 = vtanh.pop %v2472
    %v2481 = vtanh.pop %v2473
    %2490 = vrot.lane.b32.xlu0 %v2474, 32
    %v2491 = vpop.permute.xlu0 %2490
    %2492 = vrot.lane.b32.xlu0 %v2475, 32
    %v2493 = vpop.permute.xlu0 %2492
    %2494 = vrot.lane.b32.xlu0 %v2476, 32
    %v2495 = vpop.permute.xlu0 %2494
    %2496 = vrot.lane.b32.xlu0 %v2477, 32
    %v2497 = vpop.permute.xlu0 %2496
    %2498 = vrot.lane.b32.xlu0 %v2478, 32
    %v2499 = vpop.permute.xlu0 %2498
    %2500 = vrot.lane.b32.xlu0 %v2479, 32
    %v2501 = vpop.permute.xlu0 %2500
    %2502 = vrot.lane.b32.xlu0 %v2480, 32
    %v2503 = vpop.permute.xlu0 %2502
    %2504 = vrot.lane.b32.xlu0 %v2481, 32
    %v2505 = vpop.permute.xlu0 %2504
    %v2514 = vmul.f32 %v2363, %v2491
    %v2515 = vmul.f32 %v2365, %v2493
    %v2516 = vmul.f32 %v2367, %v2495
    %v2517 = vmul.f32 %v2369, %v2497
    %v2518 = vmul.f32 %v2371, %v2499
    %v2519 = vmul.f32 %v2373, %v2501
    %v2520 = vmul.f32 %v2375, %v2503
    %v2521 = vmul.f32 %v2377, %v2505
    %vm2522 = vcmp.ge.f32.partialorder %v2514, 0.0
    %vm2523 = vcmp.ge.f32.partialorder %v2515, 0.0
    %vm2524 = vcmp.ge.f32.partialorder %v2516, 0.0
    %vm2525 = vcmp.ge.f32.partialorder %v2517, 0.0
    %vm2526 = vcmp.ge.f32.partialorder %v2518, 0.0
    %vm2527 = vcmp.ge.f32.partialorder %v2519, 0.0
    %vm2528 = vcmp.ge.f32.partialorder %v2520, 0.0
    %vm2529 = vcmp.ge.f32.partialorder %v2521, 0.0
    %v2530 = vmul.f32 %v1791, %v2514
    %v2531 = vmul.f32 %v1791, %v2515
    %v2532 = vmul.f32 %v1791, %v2516
    %v2533 = vmul.f32 %v1791, %v2517
    %v2534 = vmul.f32 %v1791, %v2518
    %v2535 = vmul.f32 %v1791, %v2519
    %v2536 = vmul.f32 %v1791, %v2520
    %v2537 = vmul.f32 %v1791, %v2521
    %v2538 = vsel %vm2522, %v2514, %v2530
    %v2539 = vsel %vm2523, %v2515, %v2531
    %v2540 = vsel %vm2524, %v2516, %v2532
    %v2541 = vsel %vm2525, %v2517, %v2533
    %v2542 = vsel %vm2526, %v2518, %v2534
    %v2543 = vsel %vm2527, %v2519, %v2535
    %v2544 = vsel %vm2528, %v2520, %v2536
    %v2545 = vsel %vm2529, %v2521, %v2537
    %2554 = vrot.lane.b32.xlu0 %v2514, 64
    %v2555 = vpop.permute.xlu0 %2554
    %2556 = vrot.lane.b32.xlu0 %v2515, 64
    %v2557 = vpop.permute.xlu0 %2556
    %2558 = vrot.lane.b32.xlu0 %v2516, 64
    %v2559 = vpop.permute.xlu0 %2558
    %2560 = vrot.lane.b32.xlu0 %v2517, 64
    %v2561 = vpop.permute.xlu0 %2560
    %2562 = vrot.lane.b32.xlu0 %v2518, 64
    %v2563 = vpop.permute.xlu0 %2562
    %2564 = vrot.lane.b32.xlu0 %v2519, 64
    %v2565 = vpop.permute.xlu0 %2564
    %2566 = vrot.lane.b32.xlu0 %v2520, 64
    %v2567 = vpop.permute.xlu0 %2566
    %2568 = vrot.lane.b32.xlu0 %v2521, 64
    %v2569 = vpop.permute.xlu0 %2568
    %v2570 = vsel %vm893, %v2555, 0
    %v2572 = vsel %vm893, %v2557, 0
    %v2574 = vsel %vm893, %v2559, 0
    %v2576 = vsel %vm893, %v2561, 0
    %v2578 = vsel %vm893, %v2563, 0
    %v2580 = vsel %vm893, %v2565, 0
    %v2582 = vsel %vm893, %v2567, 0
    %v2584 = vsel %vm893, %v2569, 0
    %2586 = vmatprep.subr.mxu0 0.0
    %2587 = vmatpush1.msra.mxu0 0.0
    %2588 = vmatprep.subr.mxu0 0.0
    %2589 = vmatpush1.msra.mxu0 0.0
    %2590 = vmatprep.subr.mxu0 0.0
    %2591 = vmatpush1.msra.mxu0 0.0
    %2592 = vmatprep.subr.mxu0 0.0
    %2593 = vmatpush1.msra.mxu0 0.0
    %2594 = vmatprep.subr.mxu0 0.0
    %2595 = vmatpush1.msra.mxu0 0.0
    %2596 = vmatprep.subr.mxu0 0.0
    %2597 = vmatpush1.msra.mxu0 0.0
    %2598 = vmatprep.subr.mxu0 0.0
    %2599 = vmatpush1.msra.mxu0 0.0
    %2600 = vmatprep.subr.mxu0 0.0
    %2601 = vmatpush1.msra.mxu0 0.0
    %2602 = vmatprep.subr.mxu0 0.0
    %2603 = vmatpush1.msra.mxu0 0.0
    %2604 = vmatprep.subr.mxu0 0.0
    %2605 = vmatpush1.msra.mxu0 0.0
    %2606 = vmatprep.subr.mxu0 0.0
    %2607 = vmatpush1.msra.mxu0 0.0
    %2608 = vmatprep.subr.mxu0 0.0
    %2609 = vmatpush1.msra.mxu0 0.0
    %2610 = vmatprep.subr.mxu0 0.0
    %2611 = vmatpush1.msra.mxu0 %v1474
    %2612 = vmatprep.subr.mxu0 0.0
    %2613 = vmatpush1.msra.mxu0 %v1473
    %2614 = vmatprep.subr.mxu0 0.0
    %2615 = vmatpush1.msra.mxu0 %v1472
    %2616 = vmatprep.subr.mxu0 0.0
    %2617 = vmatpush1.msra.mxu0 %v1471
    %2618 = vmatprep.subr.mxu0 0.0
    %2619 = vmatpush2.msra.mxu0 0.0
    %2620 = vmatprep.subr.mxu0 0.0
    %2621 = vmatpush2.msra.mxu0 0.0
    %2622 = vmatprep.subr.mxu0 0.0
    %2623 = vmatpush2.msra.mxu0 0.0
    %2624 = vmatprep.subr.mxu0 0.0
    %2625 = vmatpush2.msra.mxu0 0.0
    %2626 = vmatprep.subr.mxu0 0.0
    %2627 = vmatpush2.msra.mxu0 0.0
    %2628 = vmatprep.subr.mxu0 0.0
    %2629 = vmatpush2.msra.mxu0 0.0
    %2630 = vmatprep.subr.mxu0 0.0
    %2631 = vmatpush2.msra.mxu0 0.0
    %2632 = vmatprep.subr.mxu0 0.0
    %2633 = vmatpush2.msra.mxu0 0.0
    %2634 = vmatprep.subr.mxu0 0.0
    %2635 = vmatpush2.msra.mxu0 0.0
    %2636 = vmatprep.subr.mxu0 0.0
    %2637 = vmatpush2.msra.mxu0 0.0
    %2638 = vmatprep.subr.mxu0 0.0
    %2639 = vmatpush2.msra.mxu0 0.0
    %2640 = vmatprep.subr.mxu0 0.0
    %2641 = vmatpush2.msra.mxu0 0.0
    %2642 = vmatprep.subr.mxu0 0.0
    %2643 = vmatpush2.msra.mxu0 0.0
    %2644 = vmatprep.subr.mxu0 0.0
    %2645 = vmatpush2.msra.mxu0 0.0
    %2646 = vmatprep.subr.mxu0 0.0
    %2647 = vmatpush2.msra.mxu0 0.0
    %2648 = vmatprep.subr.mxu0 0.0
    %2649 = vmatpush2.msra.mxu0 0.0
    %2650 = vmatprep.mubr.f32.mxu0 0.0
    %2651 = vmatmul.mubr.f32.gmra.mxu0 %v2570
    %v2652 = vpop.f32.mrf.mxu0
    %v2653 = vadd.f32 0.0, %v2652
    %v2654 = vpop.f32.mrf.mxu0
    %2655 = vmatprep.mubr.f32.mxu0 0.0
    %2656 = vmatmul.mubr.f32.gmra.mxu0 %v2572
    %v2657 = vpop.f32.mrf.mxu0
    %v2658 = vadd.f32 0.0, %v2657
    %v2659 = vpop.f32.mrf.mxu0
    %2660 = vmatprep.mubr.f32.mxu0 0.0
    %2661 = vmatmul.mubr.f32.gmra.mxu0 %v2574
    %v2662 = vpop.f32.mrf.mxu0
    %v2663 = vadd.f32 0.0, %v2662
    %v2664 = vpop.f32.mrf.mxu0
    %2665 = vmatprep.mubr.f32.mxu0 0.0
    %2666 = vmatmul.mubr.f32.gmra.mxu0 %v2576
    %v2667 = vpop.f32.mrf.mxu0
    %v2668 = vadd.f32 0.0, %v2667
    %v2669 = vpop.f32.mrf.mxu0
    %2670 = vmatprep.mubr.f32.mxu0 0.0
    %2671 = vmatmul.mubr.f32.gmra.mxu0 %v2578
    %v2672 = vpop.f32.mrf.mxu0
    %v2673 = vadd.f32 0.0, %v2672
    %v2674 = vpop.f32.mrf.mxu0
    %2675 = vmatprep.mubr.f32.mxu0 0.0
    %2676 = vmatmul.mubr.f32.gmra.mxu0 %v2580
    %v2677 = vpop.f32.mrf.mxu0
    %v2678 = vadd.f32 0.0, %v2677
    %v2679 = vpop.f32.mrf.mxu0
    %2680 = vmatprep.mubr.f32.mxu0 0.0
    %2681 = vmatmul.mubr.f32.gmra.mxu0 %v2582
    %v2682 = vpop.f32.mrf.mxu0
    %v2683 = vadd.f32 0.0, %v2682
    %v2684 = vpop.f32.mrf.mxu0
    %2685 = vmatprep.mubr.f32.mxu0 0.0
    %2686 = vmatmul.mubr.f32.gmra.mxu0 %v2584
    %v2687 = vpop.f32.mrf.mxu0
    %v2688 = vadd.f32 0.0, %v2687
    %v2689 = vpop.f32.mrf.mxu0
    %2690 = vdwg.mxu0
    %v2691 = vadd.f32 %v1273, %v2653
    %v2692 = vadd.f32 %v1278, %v2658
    %v2693 = vadd.f32 %v1283, %v2663
    %v2694 = vadd.f32 %v1288, %v2668
    %v2695 = vadd.f32 %v1293, %v2673
    %v2696 = vadd.f32 %v1298, %v2678
    %v2697 = vadd.f32 %v1303, %v2683
    %v2698 = vadd.f32 %v1308, %v2688
    %v2699 = vxor.u32 %v2691, 2147483648
    %v2700 = vxor.u32 %v2692, 2147483648
    %v2701 = vxor.u32 %v2693, 2147483648
    %v2702 = vxor.u32 %v2694, 2147483648
    %v2703 = vxor.u32 %v2695, 2147483648
    %v2704 = vxor.u32 %v2696, 2147483648
    %v2705 = vxor.u32 %v2697, 2147483648
    %v2706 = vxor.u32 %v2698, 2147483648
    %v2707 = vmul.f32 %v2699, 1.442695
    %v2708 = vpow.pop %v2707
    %v2709 = vmul.f32 %v2700, 1.442695
    %v2710 = vpow.pop %v2709
    %v2711 = vmul.f32 %v2701, 1.442695
    %v2712 = vpow.pop %v2711
    %v2713 = vmul.f32 %v2702, 1.442695
    %v2714 = vpow.pop %v2713
    %v2715 = vmul.f32 %v2703, 1.442695
    %v2716 = vpow.pop %v2715
    %v2717 = vmul.f32 %v2704, 1.442695
    %v2718 = vpow.pop %v2717
    %v2719 = vmul.f32 %v2705, 1.442695
    %v2720 = vpow.pop %v2719
    %v2721 = vmul.f32 %v2706, 1.442695
    %v2722 = vpow.pop %v2721
    %v2723 = vadd.f32 %v2708, 1.0
    %v2724 = vadd.f32 %v2710, 1.0
    %v2725 = vadd.f32 %v2712, 1.0
    %v2726 = vadd.f32 %v2714, 1.0
    %v2727 = vadd.f32 %v2716, 1.0
    %v2728 = vadd.f32 %v2718, 1.0
    %v2729 = vadd.f32 %v2720, 1.0
    %v2730 = vadd.f32 %v2722, 1.0
    %v2731 = vrcp.pop %v2723
    %v2732 = vmul.f32 1.0, %v2731
    %v2733 = vrcp.pop %v2724
    %v2734 = vmul.f32 1.0, %v2733
    %v2735 = vrcp.pop %v2725
    %v2736 = vmul.f32 1.0, %v2735
    %v2737 = vrcp.pop %v2726
    %v2738 = vmul.f32 1.0, %v2737
    %v2739 = vrcp.pop %v2727
    %v2740 = vmul.f32 1.0, %v2739
    %v2741 = vrcp.pop %v2728
    %v2742 = vmul.f32 1.0, %v2741
    %v2743 = vrcp.pop %v2729
    %v2744 = vmul.f32 1.0, %v2743
    %v2745 = vrcp.pop %v2730
    %v2746 = vmul.f32 1.0, %v2745
    %v2747 = vtanh.pop %v2691
    %v2748 = vtanh.pop %v2692
    %v2749 = vtanh.pop %v2693
    %v2750 = vtanh.pop %v2694
    %v2751 = vtanh.pop %v2695
    %v2752 = vtanh.pop %v2696
    %v2753 = vtanh.pop %v2697
    %v2754 = vtanh.pop %v2698
    %v2755 = vmul.f32 %v2732, %v2466
    %v2756 = vmul.f32 %v2734, %v2467
    %v2757 = vmul.f32 %v2736, %v2468
    %v2758 = vmul.f32 %v2738, %v2469
    %v2759 = vmul.f32 %v2740, %v2470
    %v2760 = vmul.f32 %v2742, %v2471
    %v2761 = vmul.f32 %v2744, %v2472
    %v2762 = vmul.f32 %v2746, %v2473
    %2771 = vrot.lane.b32.xlu0 %v2747, 32
    %v2772 = vpop.permute.xlu0 %2771
    %2773 = vrot.lane.b32.xlu0 %v2748, 32
    %v2774 = vpop.permute.xlu0 %2773
    %2775 = vrot.lane.b32.xlu0 %v2749, 32
    %v2776 = vpop.permute.xlu0 %2775
    %2777 = vrot.lane.b32.xlu0 %v2750, 32
    %v2778 = vpop.permute.xlu0 %2777
    %2779 = vrot.lane.b32.xlu0 %v2751, 32
    %v2780 = vpop.permute.xlu0 %2779
    %2781 = vrot.lane.b32.xlu0 %v2752, 32
    %v2782 = vpop.permute.xlu0 %2781
    %2783 = vrot.lane.b32.xlu0 %v2753, 32
    %v2784 = vpop.permute.xlu0 %2783
    %2785 = vrot.lane.b32.xlu0 %v2754, 32
    %v2786 = vpop.permute.xlu0 %2785
    %v2795 = vmul.f32 %v2732, %v2772
    %v2796 = vmul.f32 %v2734, %v2774
    %v2797 = vmul.f32 %v2736, %v2776
    %v2798 = vmul.f32 %v2738, %v2778
    %v2799 = vmul.f32 %v2740, %v2780
    %v2800 = vmul.f32 %v2742, %v2782
    %v2801 = vmul.f32 %v2744, %v2784
    %v2802 = vmul.f32 %v2746, %v2786
    %2811 = vrot.lane.b32.xlu0 %v2795, 32
    %v2812 = vpop.permute.xlu0 %2811
    %2813 = vrot.lane.b32.xlu0 %v2796, 32
    %v2814 = vpop.permute.xlu0 %2813
    %2815 = vrot.lane.b32.xlu0 %v2797, 32
    %v2816 = vpop.permute.xlu0 %2815
    %2817 = vrot.lane.b32.xlu0 %v2798, 32
    %v2818 = vpop.permute.xlu0 %2817
    %2819 = vrot.lane.b32.xlu0 %v2799, 32
    %v2820 = vpop.permute.xlu0 %2819
    %2821 = vrot.lane.b32.xlu0 %v2800, 32
    %v2822 = vpop.permute.xlu0 %2821
    %2823 = vrot.lane.b32.xlu0 %v2801, 32
    %v2824 = vpop.permute.xlu0 %2823
    %2825 = vrot.lane.b32.xlu0 %v2802, 32
    %v2826 = vpop.permute.xlu0 %2825
    %v2835 = vadd.f32 %v2755, %v2812
    %v2836 = vadd.f32 %v2756, %v2814
    %v2837 = vadd.f32 %v2757, %v2816
    %v2838 = vadd.f32 %v2758, %v2818
    %v2839 = vadd.f32 %v2759, %v2820
    %v2840 = vadd.f32 %v2760, %v2822
    %v2841 = vadd.f32 %v2761, %v2824
    %v2842 = vadd.f32 %v2762, %v2826
    %v2843 = vtanh.pop %v2835
    %v2844 = vtanh.pop %v2836
    %v2845 = vtanh.pop %v2837
    %v2846 = vtanh.pop %v2838
    %v2847 = vtanh.pop %v2839
    %v2848 = vtanh.pop %v2840
    %v2849 = vtanh.pop %v2841
    %v2850 = vtanh.pop %v2842
    %2859 = vrot.lane.b32.xlu0 %v2843, 32
    %v2860 = vpop.permute.xlu0 %2859
    %2861 = vrot.lane.b32.xlu0 %v2844, 32
    %v2862 = vpop.permute.xlu0 %2861
    %2863 = vrot.lane.b32.xlu0 %v2845, 32
    %v2864 = vpop.permute.xlu0 %2863
    %2865 = vrot.lane.b32.xlu0 %v2846, 32
    %v2866 = vpop.permute.xlu0 %2865
    %2867 = vrot.lane.b32.xlu0 %v2847, 32
    %v2868 = vpop.permute.xlu0 %2867
    %2869 = vrot.lane.b32.xlu0 %v2848, 32
    %v2870 = vpop.permute.xlu0 %2869
    %2871 = vrot.lane.b32.xlu0 %v2849, 32
    %v2872 = vpop.permute.xlu0 %2871
    %2873 = vrot.lane.b32.xlu0 %v2850, 32
    %v2874 = vpop.permute.xlu0 %2873
    %v2883 = vmul.f32 %v2732, %v2860
    %v2884 = vmul.f32 %v2734, %v2862
    %v2885 = vmul.f32 %v2736, %v2864
    %v2886 = vmul.f32 %v2738, %v2866
    %v2887 = vmul.f32 %v2740, %v2868
    %v2888 = vmul.f32 %v2742, %v2870
    %v2889 = vmul.f32 %v2744, %v2872
    %v2890 = vmul.f32 %v2746, %v2874
    %vm2891 = vcmp.ge.f32.partialorder %v2883, 0.0
    %vm2892 = vcmp.ge.f32.partialorder %v2884, 0.0
    %vm2893 = vcmp.ge.f32.partialorder %v2885, 0.0
    %vm2894 = vcmp.ge.f32.partialorder %v2886, 0.0
    %vm2895 = vcmp.ge.f32.partialorder %v2887, 0.0
    %vm2896 = vcmp.ge.f32.partialorder %v2888, 0.0
    %vm2897 = vcmp.ge.f32.partialorder %v2889, 0.0
    %vm2898 = vcmp.ge.f32.partialorder %v2890, 0.0
    %v2899 = vmul.f32 %v1791, %v2883
    %v2900 = vmul.f32 %v1791, %v2884
    %v2901 = vmul.f32 %v1791, %v2885
    %v2902 = vmul.f32 %v1791, %v2886
    %v2903 = vmul.f32 %v1791, %v2887
    %v2904 = vmul.f32 %v1791, %v2888
    %v2905 = vmul.f32 %v1791, %v2889
    %v2906 = vmul.f32 %v1791, %v2890
    %v2907 = vsel %vm2891, %v2883, %v2899
    %v2908 = vsel %vm2892, %v2884, %v2900
    %v2909 = vsel %vm2893, %v2885, %v2901
    %v2910 = vsel %vm2894, %v2886, %v2902
    %v2911 = vsel %vm2895, %v2887, %v2903
    %v2912 = vsel %vm2896, %v2888, %v2904
    %v2913 = vsel %vm2897, %v2889, %v2905
    %v2914 = vsel %vm2898, %v2890, %v2906
    %2923 = vrot.lane.b32.xlu0 %v2883, 64
    %v2924 = vpop.permute.xlu0 %2923
    %2925 = vrot.lane.b32.xlu0 %v2884, 64
    %v2926 = vpop.permute.xlu0 %2925
    %2927 = vrot.lane.b32.xlu0 %v2885, 64
    %v2928 = vpop.permute.xlu0 %2927
    %2929 = vrot.lane.b32.xlu0 %v2886, 64
    %v2930 = vpop.permute.xlu0 %2929
    %2931 = vrot.lane.b32.xlu0 %v2887, 64
    %v2932 = vpop.permute.xlu0 %2931
    %2933 = vrot.lane.b32.xlu0 %v2888, 64
    %v2934 = vpop.permute.xlu0 %2933
    %2935 = vrot.lane.b32.xlu0 %v2889, 64
    %v2936 = vpop.permute.xlu0 %2935
    %2937 = vrot.lane.b32.xlu0 %v2890, 64
    %v2938 = vpop.permute.xlu0 %2937
    %v2939 = vsel %vm893, %v2924, 0
    %v2941 = vsel %vm893, %v2926, 0
    %v2943 = vsel %vm893, %v2928, 0
    %v2945 = vsel %vm893, %v2930, 0
    %v2947 = vsel %vm893, %v2932, 0
    %v2949 = vsel %vm893, %v2934, 0
    %v2951 = vsel %vm893, %v2936, 0
    %v2953 = vsel %vm893, %v2938, 0
    %2955 = vmatprep.subr.mxu0 0.0
    %2956 = vmatpush1.msra.mxu0 0.0
    %2957 = vmatprep.subr.mxu0 0.0
    %2958 = vmatpush1.msra.mxu0 0.0
    %2959 = vmatprep.subr.mxu0 0.0
    %2960 = vmatpush1.msra.mxu0 0.0
    %2961 = vmatprep.subr.mxu0 0.0
    %2962 = vmatpush1.msra.mxu0 0.0
    %2963 = vmatprep.subr.mxu0 0.0
    %2964 = vmatpush1.msra.mxu0 0.0
    %2965 = vmatprep.subr.mxu0 0.0
    %2966 = vmatpush1.msra.mxu0 0.0
    %2967 = vmatprep.subr.mxu0 0.0
    %2968 = vmatpush1.msra.mxu0 0.0
    %2969 = vmatprep.subr.mxu0 0.0
    %2970 = vmatpush1.msra.mxu0 0.0
    %2971 = vmatprep.subr.mxu0 0.0
    %2972 = vmatpush1.msra.mxu0 0.0
    %2973 = vmatprep.subr.mxu0 0.0
    %2974 = vmatpush1.msra.mxu0 0.0
    %2975 = vmatprep.subr.mxu0 0.0
    %2976 = vmatpush1.msra.mxu0 0.0
    %2977 = vmatprep.subr.mxu0 0.0
    %2978 = vmatpush1.msra.mxu0 0.0
    %2979 = vmatprep.subr.mxu0 0.0
    %2980 = vmatpush1.msra.mxu0 %v1474
    %2981 = vmatprep.subr.mxu0 0.0
    %2982 = vmatpush1.msra.mxu0 %v1473
    %2983 = vmatprep.subr.mxu0 0.0
    %2984 = vmatpush1.msra.mxu0 %v1472
    %2985 = vmatprep.subr.mxu0 0.0
    %2986 = vmatpush1.msra.mxu0 %v1471
    %2987 = vmatprep.subr.mxu0 0.0
    %2988 = vmatpush2.msra.mxu0 0.0
    %2989 = vmatprep.subr.mxu0 0.0
    %2990 = vmatpush2.msra.mxu0 0.0
    %2991 = vmatprep.subr.mxu0 0.0
    %2992 = vmatpush2.msra.mxu0 0.0
    %2993 = vmatprep.subr.mxu0 0.0
    %2994 = vmatpush2.msra.mxu0 0.0
    %2995 = vmatprep.subr.mxu0 0.0
    %2996 = vmatpush2.msra.mxu0 0.0
    %2997 = vmatprep.subr.mxu0 0.0
    %2998 = vmatpush2.msra.mxu0 0.0
    %2999 = vmatprep.subr.mxu0 0.0
    %3000 = vmatpush2.msra.mxu0 0.0
    %3001 = vmatprep.subr.mxu0 0.0
    %3002 = vmatpush2.msra.mxu0 0.0
    %3003 = vmatprep.subr.mxu0 0.0
    %3004 = vmatpush2.msra.mxu0 0.0
    %3005 = vmatprep.subr.mxu0 0.0
    %3006 = vmatpush2.msra.mxu0 0.0
    %3007 = vmatprep.subr.mxu0 0.0
    %3008 = vmatpush2.msra.mxu0 0.0
    %3009 = vmatprep.subr.mxu0 0.0
    %3010 = vmatpush2.msra.mxu0 0.0
    %3011 = vmatprep.subr.mxu0 0.0
    %3012 = vmatpush2.msra.mxu0 0.0
    %3013 = vmatprep.subr.mxu0 0.0
    %3014 = vmatpush2.msra.mxu0 0.0
    %3015 = vmatprep.subr.mxu0 0.0
    %3016 = vmatpush2.msra.mxu0 0.0
    %3017 = vmatprep.subr.mxu0 0.0
    %3018 = vmatpush2.msra.mxu0 0.0
    %3019 = vmatprep.mubr.f32.mxu0 0.0
    %3020 = vmatmul.mubr.f32.gmra.mxu0 %v2939
    %v3021 = vpop.f32.mrf.mxu0
    %v3022 = vadd.f32 0.0, %v3021
    %v3023 = vpop.f32.mrf.mxu0
    %3024 = vmatprep.mubr.f32.mxu0 0.0
    %3025 = vmatmul.mubr.f32.gmra.mxu0 %v2941
    %v3026 = vpop.f32.mrf.mxu0
    %v3027 = vadd.f32 0.0, %v3026
    %v3028 = vpop.f32.mrf.mxu0
    %3029 = vmatprep.mubr.f32.mxu0 0.0
    %3030 = vmatmul.mubr.f32.gmra.mxu0 %v2943
    %v3031 = vpop.f32.mrf.mxu0
    %v3032 = vadd.f32 0.0, %v3031
    %v3033 = vpop.f32.mrf.mxu0
    %3034 = vmatprep.mubr.f32.mxu0 0.0
    %3035 = vmatmul.mubr.f32.gmra.mxu0 %v2945
    %v3036 = vpop.f32.mrf.mxu0
    %v3037 = vadd.f32 0.0, %v3036
    %v3038 = vpop.f32.mrf.mxu0
    %3039 = vmatprep.mubr.f32.mxu0 0.0
    %3040 = vmatmul.mubr.f32.gmra.mxu0 %v2947
    %v3041 = vpop.f32.mrf.mxu0
    %v3042 = vadd.f32 0.0, %v3041
    %v3043 = vpop.f32.mrf.mxu0
    %3044 = vmatprep.mubr.f32.mxu0 0.0
    %3045 = vmatmul.mubr.f32.gmra.mxu0 %v2949
    %v3046 = vpop.f32.mrf.mxu0
    %v3047 = vadd.f32 0.0, %v3046
    %v3048 = vpop.f32.mrf.mxu0
    %3049 = vmatprep.mubr.f32.mxu0 0.0
    %3050 = vmatmul.mubr.f32.gmra.mxu0 %v2951
    %v3051 = vpop.f32.mrf.mxu0
    %v3052 = vadd.f32 0.0, %v3051
    %v3053 = vpop.f32.mrf.mxu0
    %3054 = vmatprep.mubr.f32.mxu0 0.0
    %3055 = vmatmul.mubr.f32.gmra.mxu0 %v2953
    %v3056 = vpop.f32.mrf.mxu0
    %v3057 = vadd.f32 0.0, %v3056
    %v3058 = vpop.f32.mrf.mxu0
    %3059 = vdwg.mxu0
    %v3060 = vadd.f32 %v1313, %v3022
    %v3061 = vadd.f32 %v1318, %v3027
    %v3062 = vadd.f32 %v1323, %v3032
    %v3063 = vadd.f32 %v1328, %v3037
    %v3064 = vadd.f32 %v1333, %v3042
    %v3065 = vadd.f32 %v1338, %v3047
    %v3066 = vadd.f32 %v1343, %v3052
    %v3067 = vadd.f32 %v1348, %v3057
    %v3068 = vxor.u32 %v3060, 2147483648
    %v3069 = vxor.u32 %v3061, 2147483648
    %v3070 = vxor.u32 %v3062, 2147483648
    %v3071 = vxor.u32 %v3063, 2147483648
    %v3072 = vxor.u32 %v3064, 2147483648
    %v3073 = vxor.u32 %v3065, 2147483648
    %v3074 = vxor.u32 %v3066, 2147483648
    %v3075 = vxor.u32 %v3067, 2147483648
    %v3076 = vmul.f32 %v3068, 1.442695
    %v3077 = vpow.pop %v3076
    %v3078 = vmul.f32 %v3069, 1.442695
    %v3079 = vpow.pop %v3078
    %v3080 = vmul.f32 %v3070, 1.442695
    %v3081 = vpow.pop %v3080
    %v3082 = vmul.f32 %v3071, 1.442695
    %v3083 = vpow.pop %v3082
    %v3084 = vmul.f32 %v3072, 1.442695
    %v3085 = vpow.pop %v3084
    %v3086 = vmul.f32 %v3073, 1.442695
    %v3087 = vpow.pop %v3086
    %v3088 = vmul.f32 %v3074, 1.442695
    %v3089 = vpow.pop %v3088
    %v3090 = vmul.f32 %v3075, 1.442695
    %v3091 = vpow.pop %v3090
    %v3092 = vadd.f32 %v3077, 1.0
    %v3093 = vadd.f32 %v3079, 1.0
    %v3094 = vadd.f32 %v3081, 1.0
    %v3095 = vadd.f32 %v3083, 1.0
    %v3096 = vadd.f32 %v3085, 1.0
    %v3097 = vadd.f32 %v3087, 1.0
    %v3098 = vadd.f32 %v3089, 1.0
    %v3099 = vadd.f32 %v3091, 1.0
    %v3100 = vrcp.pop %v3092
    %v3101 = vmul.f32 1.0, %v3100
    %v3102 = vrcp.pop %v3093
    %v3103 = vmul.f32 1.0, %v3102
    %v3104 = vrcp.pop %v3094
    %v3105 = vmul.f32 1.0, %v3104
    %v3106 = vrcp.pop %v3095
    %v3107 = vmul.f32 1.0, %v3106
    %v3108 = vrcp.pop %v3096
    %v3109 = vmul.f32 1.0, %v3108
    %v3110 = vrcp.pop %v3097
    %v3111 = vmul.f32 1.0, %v3110
    %v3112 = vrcp.pop %v3098
    %v3113 = vmul.f32 1.0, %v3112
    %v3114 = vrcp.pop %v3099
    %v3115 = vmul.f32 1.0, %v3114
    %v3116 = vtanh.pop %v3060
    %v3117 = vtanh.pop %v3061
    %v3118 = vtanh.pop %v3062
    %v3119 = vtanh.pop %v3063
    %v3120 = vtanh.pop %v3064
    %v3121 = vtanh.pop %v3065
    %v3122 = vtanh.pop %v3066
    %v3123 = vtanh.pop %v3067
    %v3124 = vmul.f32 %v3101, %v2835
    %v3125 = vmul.f32 %v3103, %v2836
    %v3126 = vmul.f32 %v3105, %v2837
    %v3127 = vmul.f32 %v3107, %v2838
    %v3128 = vmul.f32 %v3109, %v2839
    %v3129 = vmul.f32 %v3111, %v2840
    %v3130 = vmul.f32 %v3113, %v2841
    %v3131 = vmul.f32 %v3115, %v2842
    %3140 = vrot.lane.b32.xlu0 %v3116, 32
    %v3141 = vpop.permute.xlu0 %3140
    %3142 = vrot.lane.b32.xlu0 %v3117, 32
    %v3143 = vpop.permute.xlu0 %3142
    %3144 = vrot.lane.b32.xlu0 %v3118, 32
    %v3145 = vpop.permute.xlu0 %3144
    %3146 = vrot.lane.b32.xlu0 %v3119, 32
    %v3147 = vpop.permute.xlu0 %3146
    %3148 = vrot.lane.b32.xlu0 %v3120, 32
    %v3149 = vpop.permute.xlu0 %3148
    %3150 = vrot.lane.b32.xlu0 %v3121, 32
    %v3151 = vpop.permute.xlu0 %3150
    %3152 = vrot.lane.b32.xlu0 %v3122, 32
    %v3153 = vpop.permute.xlu0 %3152
    %3154 = vrot.lane.b32.xlu0 %v3123, 32
    %v3155 = vpop.permute.xlu0 %3154
    %v3164 = vmul.f32 %v3101, %v3141
    %v3165 = vmul.f32 %v3103, %v3143
    %v3166 = vmul.f32 %v3105, %v3145
    %v3167 = vmul.f32 %v3107, %v3147
    %v3168 = vmul.f32 %v3109, %v3149
    %v3169 = vmul.f32 %v3111, %v3151
    %v3170 = vmul.f32 %v3113, %v3153
    %v3171 = vmul.f32 %v3115, %v3155
    %3180 = vrot.lane.b32.xlu0 %v3164, 32
    %v3181 = vpop.permute.xlu0 %3180
    %3182 = vrot.lane.b32.xlu0 %v3165, 32
    %v3183 = vpop.permute.xlu0 %3182
    %3184 = vrot.lane.b32.xlu0 %v3166, 32
    %v3185 = vpop.permute.xlu0 %3184
    %3186 = vrot.lane.b32.xlu0 %v3167, 32
    %v3187 = vpop.permute.xlu0 %3186
    %3188 = vrot.lane.b32.xlu0 %v3168, 32
    %v3189 = vpop.permute.xlu0 %3188
    %3190 = vrot.lane.b32.xlu0 %v3169, 32
    %v3191 = vpop.permute.xlu0 %3190
    %3192 = vrot.lane.b32.xlu0 %v3170, 32
    %v3193 = vpop.permute.xlu0 %3192
    %3194 = vrot.lane.b32.xlu0 %v3171, 32
    %v3195 = vpop.permute.xlu0 %3194
    %v3204 = vadd.f32 %v3124, %v3181
    %v3205 = vadd.f32 %v3125, %v3183
    %v3206 = vadd.f32 %v3126, %v3185
    %v3207 = vadd.f32 %v3127, %v3187
    %v3208 = vadd.f32 %v3128, %v3189
    %v3209 = vadd.f32 %v3129, %v3191
    %v3210 = vadd.f32 %v3130, %v3193
    %v3211 = vadd.f32 %v3131, %v3195
    %v3212 = vtanh.pop %v3204
    %v3213 = vtanh.pop %v3205
    %v3214 = vtanh.pop %v3206
    %v3215 = vtanh.pop %v3207
    %v3216 = vtanh.pop %v3208
    %v3217 = vtanh.pop %v3209
    %v3218 = vtanh.pop %v3210
    %v3219 = vtanh.pop %v3211
    %3228 = vrot.lane.b32.xlu0 %v3212, 32
    %v3229 = vpop.permute.xlu0 %3228
    %3230 = vrot.lane.b32.xlu0 %v3213, 32
    %v3231 = vpop.permute.xlu0 %3230
    %3232 = vrot.lane.b32.xlu0 %v3214, 32
    %v3233 = vpop.permute.xlu0 %3232
    %3234 = vrot.lane.b32.xlu0 %v3215, 32
    %v3235 = vpop.permute.xlu0 %3234
    %3236 = vrot.lane.b32.xlu0 %v3216, 32
    %v3237 = vpop.permute.xlu0 %3236
    %3238 = vrot.lane.b32.xlu0 %v3217, 32
    %v3239 = vpop.permute.xlu0 %3238
    %3240 = vrot.lane.b32.xlu0 %v3218, 32
    %v3241 = vpop.permute.xlu0 %3240
    %3242 = vrot.lane.b32.xlu0 %v3219, 32
    %v3243 = vpop.permute.xlu0 %3242
    %v3252 = vmul.f32 %v3101, %v3229
    %v3253 = vmul.f32 %v3103, %v3231
    %v3254 = vmul.f32 %v3105, %v3233
    %v3255 = vmul.f32 %v3107, %v3235
    %v3256 = vmul.f32 %v3109, %v3237
    %v3257 = vmul.f32 %v3111, %v3239
    %v3258 = vmul.f32 %v3113, %v3241
    %v3259 = vmul.f32 %v3115, %v3243
    %vm3260 = vcmp.ge.f32.partialorder %v3252, 0.0
    %vm3261 = vcmp.ge.f32.partialorder %v3253, 0.0
    %vm3262 = vcmp.ge.f32.partialorder %v3254, 0.0
    %vm3263 = vcmp.ge.f32.partialorder %v3255, 0.0
    %vm3264 = vcmp.ge.f32.partialorder %v3256, 0.0
    %vm3265 = vcmp.ge.f32.partialorder %v3257, 0.0
    %vm3266 = vcmp.ge.f32.partialorder %v3258, 0.0
    %vm3267 = vcmp.ge.f32.partialorder %v3259, 0.0
    %v3268 = vmul.f32 %v1791, %v3252
    %v3269 = vmul.f32 %v1791, %v3253
    %v3270 = vmul.f32 %v1791, %v3254
    %v3271 = vmul.f32 %v1791, %v3255
    %v3272 = vmul.f32 %v1791, %v3256
    %v3273 = vmul.f32 %v1791, %v3257
    %v3274 = vmul.f32 %v1791, %v3258
    %v3275 = vmul.f32 %v1791, %v3259
    %v3276 = vsel %vm3260, %v3252, %v3268
    %v3277 = vsel %vm3261, %v3253, %v3269
    %v3278 = vsel %vm3262, %v3254, %v3270
    %v3279 = vsel %vm3263, %v3255, %v3271
    %v3280 = vsel %vm3264, %v3256, %v3272
    %v3281 = vsel %vm3265, %v3257, %v3273
    %v3282 = vsel %vm3266, %v3258, %v3274
    %v3283 = vsel %vm3267, %v3259, %v3275
    %3292 = vrot.lane.b32.xlu0 %v3252, 64
    %v3293 = vpop.permute.xlu0 %3292
    %3294 = vrot.lane.b32.xlu0 %v3253, 64
    %v3295 = vpop.permute.xlu0 %3294
    %3296 = vrot.lane.b32.xlu0 %v3254, 64
    %v3297 = vpop.permute.xlu0 %3296
    %3298 = vrot.lane.b32.xlu0 %v3255, 64
    %v3299 = vpop.permute.xlu0 %3298
    %3300 = vrot.lane.b32.xlu0 %v3256, 64
    %v3301 = vpop.permute.xlu0 %3300
    %3302 = vrot.lane.b32.xlu0 %v3257, 64
    %v3303 = vpop.permute.xlu0 %3302
    %3304 = vrot.lane.b32.xlu0 %v3258, 64
    %v3305 = vpop.permute.xlu0 %3304
    %3306 = vrot.lane.b32.xlu0 %v3259, 64
    %v3307 = vpop.permute.xlu0 %3306
    %v3308 = vsel %vm893, %v3293, 0
    %v3310 = vsel %vm893, %v3295, 0
    %v3312 = vsel %vm893, %v3297, 0
    %v3314 = vsel %vm893, %v3299, 0
    %v3316 = vsel %vm893, %v3301, 0
    %v3318 = vsel %vm893, %v3303, 0
    %v3320 = vsel %vm893, %v3305, 0
    %v3322 = vsel %vm893, %v3307, 0
    %3324 = vmatprep.subr.mxu0 0.0
    %3325 = vmatpush1.msra.mxu0 0.0
    %3326 = vmatprep.subr.mxu0 0.0
    %3327 = vmatpush1.msra.mxu0 0.0
    %3328 = vmatprep.subr.mxu0 0.0
    %3329 = vmatpush1.msra.mxu0 0.0
    %3330 = vmatprep.subr.mxu0 0.0
    %3331 = vmatpush1.msra.mxu0 0.0
    %3332 = vmatprep.subr.mxu0 0.0
    %3333 = vmatpush1.msra.mxu0 0.0
    %3334 = vmatprep.subr.mxu0 0.0
    %3335 = vmatpush1.msra.mxu0 0.0
    %3336 = vmatprep.subr.mxu0 0.0
    %3337 = vmatpush1.msra.mxu0 0.0
    %3338 = vmatprep.subr.mxu0 0.0
    %3339 = vmatpush1.msra.mxu0 0.0
    %3340 = vmatprep.subr.mxu0 0.0
    %3341 = vmatpush1.msra.mxu0 0.0
    %3342 = vmatprep.subr.mxu0 0.0
    %3343 = vmatpush1.msra.mxu0 0.0
    %3344 = vmatprep.subr.mxu0 0.0
    %3345 = vmatpush1.msra.mxu0 0.0
    %3346 = vmatprep.subr.mxu0 0.0
    %3347 = vmatpush1.msra.mxu0 0.0
    %3348 = vmatprep.subr.mxu0 0.0
    %3349 = vmatpush1.msra.mxu0 %v1474
    %3350 = vmatprep.subr.mxu0 0.0
    %3351 = vmatpush1.msra.mxu0 %v1473
    %3352 = vmatprep.subr.mxu0 0.0
    %3353 = vmatpush1.msra.mxu0 %v1472
    %3354 = vmatprep.subr.mxu0 0.0
    %3355 = vmatpush1.msra.mxu0 %v1471
    %3356 = vmatprep.subr.mxu0 0.0
    %3357 = vmatpush2.msra.mxu0 0.0
    %3358 = vmatprep.subr.mxu0 0.0
    %3359 = vmatpush2.msra.mxu0 0.0
    %3360 = vmatprep.subr.mxu0 0.0
    %3361 = vmatpush2.msra.mxu0 0.0
    %3362 = vmatprep.subr.mxu0 0.0
    %3363 = vmatpush2.msra.mxu0 0.0
    %3364 = vmatprep.subr.mxu0 0.0
    %3365 = vmatpush2.msra.mxu0 0.0
    %3366 = vmatprep.subr.mxu0 0.0
    %3367 = vmatpush2.msra.mxu0 0.0
    %3368 = vmatprep.subr.mxu0 0.0
    %3369 = vmatpush2.msra.mxu0 0.0
    %3370 = vmatprep.subr.mxu0 0.0
    %3371 = vmatpush2.msra.mxu0 0.0
    %3372 = vmatprep.subr.mxu0 0.0
    %3373 = vmatpush2.msra.mxu0 0.0
    %3374 = vmatprep.subr.mxu0 0.0
    %3375 = vmatpush2.msra.mxu0 0.0
    %3376 = vmatprep.subr.mxu0 0.0
    %3377 = vmatpush2.msra.mxu0 0.0
    %3378 = vmatprep.subr.mxu0 0.0
    %3379 = vmatpush2.msra.mxu0 0.0
    %3380 = vmatprep.subr.mxu0 0.0
    %3381 = vmatpush2.msra.mxu0 0.0
    %3382 = vmatprep.subr.mxu0 0.0
    %3383 = vmatpush2.msra.mxu0 0.0
    %3384 = vmatprep.subr.mxu0 0.0
    %3385 = vmatpush2.msra.mxu0 0.0
    %3386 = vmatprep.subr.mxu0 0.0
    %3387 = vmatpush2.msra.mxu0 0.0
    %3388 = vmatprep.mubr.f32.mxu0 0.0
    %3389 = vmatmul.mubr.f32.gmra.mxu0 %v3308
    %v3390 = vpop.f32.mrf.mxu0
    %v3391 = vadd.f32 0.0, %v3390
    %v3392 = vpop.f32.mrf.mxu0
    %3393 = vmatprep.mubr.f32.mxu0 0.0
    %3394 = vmatmul.mubr.f32.gmra.mxu0 %v3310
    %v3395 = vpop.f32.mrf.mxu0
    %v3396 = vadd.f32 0.0, %v3395
    %v3397 = vpop.f32.mrf.mxu0
    %3398 = vmatprep.mubr.f32.mxu0 0.0
    %3399 = vmatmul.mubr.f32.gmra.mxu0 %v3312
    %v3400 = vpop.f32.mrf.mxu0
    %v3401 = vadd.f32 0.0, %v3400
    %v3402 = vpop.f32.mrf.mxu0
    %3403 = vmatprep.mubr.f32.mxu0 0.0
    %3404 = vmatmul.mubr.f32.gmra.mxu0 %v3314
    %v3405 = vpop.f32.mrf.mxu0
    %v3406 = vadd.f32 0.0, %v3405
    %v3407 = vpop.f32.mrf.mxu0
    %3408 = vmatprep.mubr.f32.mxu0 0.0
    %3409 = vmatmul.mubr.f32.gmra.mxu0 %v3316
    %v3410 = vpop.f32.mrf.mxu0
    %v3411 = vadd.f32 0.0, %v3410
    %v3412 = vpop.f32.mrf.mxu0
    %3413 = vmatprep.mubr.f32.mxu0 0.0
    %3414 = vmatmul.mubr.f32.gmra.mxu0 %v3318
    %v3415 = vpop.f32.mrf.mxu0
    %v3416 = vadd.f32 0.0, %v3415
    %v3417 = vpop.f32.mrf.mxu0
    %3418 = vmatprep.mubr.f32.mxu0 0.0
    %3419 = vmatmul.mubr.f32.gmra.mxu0 %v3320
    %v3420 = vpop.f32.mrf.mxu0
    %v3421 = vadd.f32 0.0, %v3420
    %v3422 = vpop.f32.mrf.mxu0
    %3423 = vmatprep.mubr.f32.mxu0 0.0
    %3424 = vmatmul.mubr.f32.gmra.mxu0 %v3322
    %v3425 = vpop.f32.mrf.mxu0
    %v3426 = vadd.f32 0.0, %v3425
    %v3427 = vpop.f32.mrf.mxu0
    %3428 = vdwg.mxu0
    %v3429 = vadd.f32 %v1353, %v3391
    %v3430 = vadd.f32 %v1358, %v3396
    %v3431 = vadd.f32 %v1363, %v3401
    %v3432 = vadd.f32 %v1368, %v3406
    %v3433 = vadd.f32 %v1373, %v3411
    %v3434 = vadd.f32 %v1378, %v3416
    %v3435 = vadd.f32 %v1383, %v3421
    %v3436 = vadd.f32 %v1388, %v3426
    %v3437 = vxor.u32 %v3429, 2147483648
    %v3438 = vxor.u32 %v3430, 2147483648
    %v3439 = vxor.u32 %v3431, 2147483648
    %v3440 = vxor.u32 %v3432, 2147483648
    %v3441 = vxor.u32 %v3433, 2147483648
    %v3442 = vxor.u32 %v3434, 2147483648
    %v3443 = vxor.u32 %v3435, 2147483648
    %v3444 = vxor.u32 %v3436, 2147483648
    %v3445 = vmul.f32 %v3437, 1.442695
    %v3446 = vpow.pop %v3445
    %v3447 = vmul.f32 %v3438, 1.442695
    %v3448 = vpow.pop %v3447
    %v3449 = vmul.f32 %v3439, 1.442695
    %v3450 = vpow.pop %v3449
    %v3451 = vmul.f32 %v3440, 1.442695
    %v3452 = vpow.pop %v3451
    %v3453 = vmul.f32 %v3441, 1.442695
    %v3454 = vpow.pop %v3453
    %v3455 = vmul.f32 %v3442, 1.442695
    %v3456 = vpow.pop %v3455
    %v3457 = vmul.f32 %v3443, 1.442695
    %v3458 = vpow.pop %v3457
    %v3459 = vmul.f32 %v3444, 1.442695
    %v3460 = vpow.pop %v3459
    %v3461 = vadd.f32 %v3446, 1.0
    %v3462 = vadd.f32 %v3448, 1.0
    %v3463 = vadd.f32 %v3450, 1.0
    %v3464 = vadd.f32 %v3452, 1.0
    %v3465 = vadd.f32 %v3454, 1.0
    %v3466 = vadd.f32 %v3456, 1.0
    %v3467 = vadd.f32 %v3458, 1.0
    %v3468 = vadd.f32 %v3460, 1.0
    %v3469 = vrcp.pop %v3461
    %v3470 = vmul.f32 1.0, %v3469
    %v3471 = vrcp.pop %v3462
    %v3472 = vmul.f32 1.0, %v3471
    %v3473 = vrcp.pop %v3463
    %v3474 = vmul.f32 1.0, %v3473
    %v3475 = vrcp.pop %v3464
    %v3476 = vmul.f32 1.0, %v3475
    %v3477 = vrcp.pop %v3465
    %v3478 = vmul.f32 1.0, %v3477
    %v3479 = vrcp.pop %v3466
    %v3480 = vmul.f32 1.0, %v3479
    %v3481 = vrcp.pop %v3467
    %v3482 = vmul.f32 1.0, %v3481
    %v3483 = vrcp.pop %v3468
    %v3484 = vmul.f32 1.0, %v3483
    %v3485 = vtanh.pop %v3429
    %v3486 = vtanh.pop %v3430
    %v3487 = vtanh.pop %v3431
    %v3488 = vtanh.pop %v3432
    %v3489 = vtanh.pop %v3433
    %v3490 = vtanh.pop %v3434
    %v3491 = vtanh.pop %v3435
    %v3492 = vtanh.pop %v3436
    %v3493 = vmul.f32 %v3470, %v3204
    %v3494 = vmul.f32 %v3472, %v3205
    %v3495 = vmul.f32 %v3474, %v3206
    %v3496 = vmul.f32 %v3476, %v3207
    %v3497 = vmul.f32 %v3478, %v3208
    %v3498 = vmul.f32 %v3480, %v3209
    %v3499 = vmul.f32 %v3482, %v3210
    %v3500 = vmul.f32 %v3484, %v3211
    %3509 = vrot.lane.b32.xlu0 %v3485, 32
    %v3510 = vpop.permute.xlu0 %3509
    %3511 = vrot.lane.b32.xlu0 %v3486, 32
    %v3512 = vpop.permute.xlu0 %3511
    %3513 = vrot.lane.b32.xlu0 %v3487, 32
    %v3514 = vpop.permute.xlu0 %3513
    %3515 = vrot.lane.b32.xlu0 %v3488, 32
    %v3516 = vpop.permute.xlu0 %3515
    %3517 = vrot.lane.b32.xlu0 %v3489, 32
    %v3518 = vpop.permute.xlu0 %3517
    %3519 = vrot.lane.b32.xlu0 %v3490, 32
    %v3520 = vpop.permute.xlu0 %3519
    %3521 = vrot.lane.b32.xlu0 %v3491, 32
    %v3522 = vpop.permute.xlu0 %3521
    %3523 = vrot.lane.b32.xlu0 %v3492, 32
    %v3524 = vpop.permute.xlu0 %3523
    %v3533 = vmul.f32 %v3470, %v3510
    %v3534 = vmul.f32 %v3472, %v3512
    %v3535 = vmul.f32 %v3474, %v3514
    %v3536 = vmul.f32 %v3476, %v3516
    %v3537 = vmul.f32 %v3478, %v3518
    %v3538 = vmul.f32 %v3480, %v3520
    %v3539 = vmul.f32 %v3482, %v3522
    %v3540 = vmul.f32 %v3484, %v3524
    %3549 = vrot.lane.b32.xlu0 %v3533, 32
    %v3550 = vpop.permute.xlu0 %3549
    %3551 = vrot.lane.b32.xlu0 %v3534, 32
    %v3552 = vpop.permute.xlu0 %3551
    %3553 = vrot.lane.b32.xlu0 %v3535, 32
    %v3554 = vpop.permute.xlu0 %3553
    %3555 = vrot.lane.b32.xlu0 %v3536, 32
    %v3556 = vpop.permute.xlu0 %3555
    %3557 = vrot.lane.b32.xlu0 %v3537, 32
    %v3558 = vpop.permute.xlu0 %3557
    %3559 = vrot.lane.b32.xlu0 %v3538, 32
    %v3560 = vpop.permute.xlu0 %3559
    %3561 = vrot.lane.b32.xlu0 %v3539, 32
    %v3562 = vpop.permute.xlu0 %3561
    %3563 = vrot.lane.b32.xlu0 %v3540, 32
    %v3564 = vpop.permute.xlu0 %3563
    %v3573 = vadd.f32 %v3493, %v3550
    %v3574 = vadd.f32 %v3494, %v3552
    %v3575 = vadd.f32 %v3495, %v3554
    %v3576 = vadd.f32 %v3496, %v3556
    %v3577 = vadd.f32 %v3497, %v3558
    %v3578 = vadd.f32 %v3498, %v3560
    %v3579 = vadd.f32 %v3499, %v3562
    %v3580 = vadd.f32 %v3500, %v3564
    %v3581 = vtanh.pop %v3573
    %v3582 = vtanh.pop %v3574
    %v3583 = vtanh.pop %v3575
    %v3584 = vtanh.pop %v3576
    %v3585 = vtanh.pop %v3577
    %v3586 = vtanh.pop %v3578
    %v3587 = vtanh.pop %v3579
    %v3588 = vtanh.pop %v3580
    %3597 = vrot.lane.b32.xlu0 %v3581, 32
    %v3598 = vpop.permute.xlu0 %3597
    %3599 = vrot.lane.b32.xlu0 %v3582, 32
    %v3600 = vpop.permute.xlu0 %3599
    %3601 = vrot.lane.b32.xlu0 %v3583, 32
    %v3602 = vpop.permute.xlu0 %3601
    %3603 = vrot.lane.b32.xlu0 %v3584, 32
    %v3604 = vpop.permute.xlu0 %3603
    %3605 = vrot.lane.b32.xlu0 %v3585, 32
    %v3606 = vpop.permute.xlu0 %3605
    %3607 = vrot.lane.b32.xlu0 %v3586, 32
    %v3608 = vpop.permute.xlu0 %3607
    %3609 = vrot.lane.b32.xlu0 %v3587, 32
    %v3610 = vpop.permute.xlu0 %3609
    %3611 = vrot.lane.b32.xlu0 %v3588, 32
    %v3612 = vpop.permute.xlu0 %3611
    %v3621 = vmul.f32 %v3470, %v3598
    %v3622 = vmul.f32 %v3472, %v3600
    %v3623 = vmul.f32 %v3474, %v3602
    %v3624 = vmul.f32 %v3476, %v3604
    %v3625 = vmul.f32 %v3478, %v3606
    %v3626 = vmul.f32 %v3480, %v3608
    %v3627 = vmul.f32 %v3482, %v3610
    %v3628 = vmul.f32 %v3484, %v3612
    %vm3629 = vcmp.ge.f32.partialorder %v3621, 0.0
    %vm3630 = vcmp.ge.f32.partialorder %v3622, 0.0
    %vm3631 = vcmp.ge.f32.partialorder %v3623, 0.0
    %vm3632 = vcmp.ge.f32.partialorder %v3624, 0.0
    %vm3633 = vcmp.ge.f32.partialorder %v3625, 0.0
    %vm3634 = vcmp.ge.f32.partialorder %v3626, 0.0
    %vm3635 = vcmp.ge.f32.partialorder %v3627, 0.0
    %vm3636 = vcmp.ge.f32.partialorder %v3628, 0.0
    %v3637 = vmul.f32 %v1791, %v3621
    %v3638 = vmul.f32 %v1791, %v3622
    %v3639 = vmul.f32 %v1791, %v3623
    %v3640 = vmul.f32 %v1791, %v3624
    %v3641 = vmul.f32 %v1791, %v3625
    %v3642 = vmul.f32 %v1791, %v3626
    %v3643 = vmul.f32 %v1791, %v3627
    %v3644 = vmul.f32 %v1791, %v3628
    %v3645 = vsel %vm3629, %v3621, %v3637
    %v3646 = vsel %vm3630, %v3622, %v3638
    %v3647 = vsel %vm3631, %v3623, %v3639
    %v3648 = vsel %vm3632, %v3624, %v3640
    %v3649 = vsel %vm3633, %v3625, %v3641
    %v3650 = vsel %vm3634, %v3626, %v3642
    %v3651 = vsel %vm3635, %v3627, %v3643
    %v3652 = vsel %vm3636, %v3628, %v3644
    %3661 = vrot.lane.b32.xlu0 %v3621, 64
    %v3662 = vpop.permute.xlu0 %3661
    %3663 = vrot.lane.b32.xlu0 %v3622, 64
    %v3664 = vpop.permute.xlu0 %3663
    %3665 = vrot.lane.b32.xlu0 %v3623, 64
    %v3666 = vpop.permute.xlu0 %3665
    %3667 = vrot.lane.b32.xlu0 %v3624, 64
    %v3668 = vpop.permute.xlu0 %3667
    %3669 = vrot.lane.b32.xlu0 %v3625, 64
    %v3670 = vpop.permute.xlu0 %3669
    %3671 = vrot.lane.b32.xlu0 %v3626, 64
    %v3672 = vpop.permute.xlu0 %3671
    %3673 = vrot.lane.b32.xlu0 %v3627, 64
    %v3674 = vpop.permute.xlu0 %3673
    %3675 = vrot.lane.b32.xlu0 %v3628, 64
    %v3676 = vpop.permute.xlu0 %3675
    %v3677 = vsel %vm893, %v3662, 0
    %v3679 = vsel %vm893, %v3664, 0
    %v3681 = vsel %vm893, %v3666, 0
    %v3683 = vsel %vm893, %v3668, 0
    %v3685 = vsel %vm893, %v3670, 0
    %v3687 = vsel %vm893, %v3672, 0
    %v3689 = vsel %vm893, %v3674, 0
    %v3691 = vsel %vm893, %v3676, 0
    %3693 = vmatprep.subr.mxu0 0.0
    %3694 = vmatpush1.msra.mxu0 0.0
    %3695 = vmatprep.subr.mxu0 0.0
    %3696 = vmatpush1.msra.mxu0 0.0
    %3697 = vmatprep.subr.mxu0 0.0
    %3698 = vmatpush1.msra.mxu0 0.0
    %3699 = vmatprep.subr.mxu0 0.0
    %3700 = vmatpush1.msra.mxu0 0.0
    %3701 = vmatprep.subr.mxu0 0.0
    %3702 = vmatpush1.msra.mxu0 0.0
    %3703 = vmatprep.subr.mxu0 0.0
    %3704 = vmatpush1.msra.mxu0 0.0
    %3705 = vmatprep.subr.mxu0 0.0
    %3706 = vmatpush1.msra.mxu0 0.0
    %3707 = vmatprep.subr.mxu0 0.0
    %3708 = vmatpush1.msra.mxu0 0.0
    %3709 = vmatprep.subr.mxu0 0.0
    %3710 = vmatpush1.msra.mxu0 0.0
    %3711 = vmatprep.subr.mxu0 0.0
    %3712 = vmatpush1.msra.mxu0 0.0
    %3713 = vmatprep.subr.mxu0 0.0
    %3714 = vmatpush1.msra.mxu0 0.0
    %3715 = vmatprep.subr.mxu0 0.0
    %3716 = vmatpush1.msra.mxu0 0.0
    %3717 = vmatprep.subr.mxu0 0.0
    %3718 = vmatpush1.msra.mxu0 %v1474
    %3719 = vmatprep.subr.mxu0 0.0
    %3720 = vmatpush1.msra.mxu0 %v1473
    %3721 = vmatprep.subr.mxu0 0.0
    %3722 = vmatpush1.msra.mxu0 %v1472
    %3723 = vmatprep.subr.mxu0 0.0
    %3724 = vmatpush1.msra.mxu0 %v1471
    %3725 = vmatprep.subr.mxu0 0.0
    %3726 = vmatpush2.msra.mxu0 0.0
    %3727 = vmatprep.subr.mxu0 0.0
    %3728 = vmatpush2.msra.mxu0 0.0
    %3729 = vmatprep.subr.mxu0 0.0
    %3730 = vmatpush2.msra.mxu0 0.0
    %3731 = vmatprep.subr.mxu0 0.0
    %3732 = vmatpush2.msra.mxu0 0.0
    %3733 = vmatprep.subr.mxu0 0.0
    %3734 = vmatpush2.msra.mxu0 0.0
    %3735 = vmatprep.subr.mxu0 0.0
    %3736 = vmatpush2.msra.mxu0 0.0
    %3737 = vmatprep.subr.mxu0 0.0
    %3738 = vmatpush2.msra.mxu0 0.0
    %3739 = vmatprep.subr.mxu0 0.0
    %3740 = vmatpush2.msra.mxu0 0.0
    %3741 = vmatprep.subr.mxu0 0.0
    %3742 = vmatpush2.msra.mxu0 0.0
    %3743 = vmatprep.subr.mxu0 0.0
    %3744 = vmatpush2.msra.mxu0 0.0
    %3745 = vmatprep.subr.mxu0 0.0
    %3746 = vmatpush2.msra.mxu0 0.0
    %3747 = vmatprep.subr.mxu0 0.0
    %3748 = vmatpush2.msra.mxu0 0.0
    %3749 = vmatprep.subr.mxu0 0.0
    %3750 = vmatpush2.msra.mxu0 0.0
    %3751 = vmatprep.subr.mxu0 0.0
    %3752 = vmatpush2.msra.mxu0 0.0
    %3753 = vmatprep.subr.mxu0 0.0
    %3754 = vmatpush2.msra.mxu0 0.0
    %3755 = vmatprep.subr.mxu0 0.0
    %3756 = vmatpush2.msra.mxu0 0.0
    %3757 = vmatprep.mubr.f32.mxu0 0.0
    %3758 = vmatmul.mubr.f32.gmra.mxu0 %v3677
    %v3759 = vpop.f32.mrf.mxu0
    %v3760 = vadd.f32 0.0, %v3759
    %v3761 = vpop.f32.mrf.mxu0
    %3762 = vmatprep.mubr.f32.mxu0 0.0
    %3763 = vmatmul.mubr.f32.gmra.mxu0 %v3679
    %v3764 = vpop.f32.mrf.mxu0
    %v3765 = vadd.f32 0.0, %v3764
    %v3766 = vpop.f32.mrf.mxu0
    %3767 = vmatprep.mubr.f32.mxu0 0.0
    %3768 = vmatmul.mubr.f32.gmra.mxu0 %v3681
    %v3769 = vpop.f32.mrf.mxu0
    %v3770 = vadd.f32 0.0, %v3769
    %v3771 = vpop.f32.mrf.mxu0
    %3772 = vmatprep.mubr.f32.mxu0 0.0
    %3773 = vmatmul.mubr.f32.gmra.mxu0 %v3683
    %v3774 = vpop.f32.mrf.mxu0
    %v3775 = vadd.f32 0.0, %v3774
    %v3776 = vpop.f32.mrf.mxu0
    %3777 = vmatprep.mubr.f32.mxu0 0.0
    %3778 = vmatmul.mubr.f32.gmra.mxu0 %v3685
    %v3779 = vpop.f32.mrf.mxu0
    %v3780 = vadd.f32 0.0, %v3779
    %v3781 = vpop.f32.mrf.mxu0
    %3782 = vmatprep.mubr.f32.mxu0 0.0
    %3783 = vmatmul.mubr.f32.gmra.mxu0 %v3687
    %v3784 = vpop.f32.mrf.mxu0
    %v3785 = vadd.f32 0.0, %v3784
    %v3786 = vpop.f32.mrf.mxu0
    %3787 = vmatprep.mubr.f32.mxu0 0.0
    %3788 = vmatmul.mubr.f32.gmra.mxu0 %v3689
    %v3789 = vpop.f32.mrf.mxu0
    %v3790 = vadd.f32 0.0, %v3789
    %v3791 = vpop.f32.mrf.mxu0
    %3792 = vmatprep.mubr.f32.mxu0 0.0
    %3793 = vmatmul.mubr.f32.gmra.mxu0 %v3691
    %v3794 = vpop.f32.mrf.mxu0
    %v3795 = vadd.f32 0.0, %v3794
    %v3796 = vpop.f32.mrf.mxu0
    %3797 = vdwg.mxu0
    %v3798 = vadd.f32 %v1393, %v3760
    %v3799 = vadd.f32 %v1398, %v3765
    %v3800 = vadd.f32 %v1403, %v3770
    %v3801 = vadd.f32 %v1408, %v3775
    %v3802 = vadd.f32 %v1413, %v3780
    %v3803 = vadd.f32 %v1418, %v3785
    %v3804 = vadd.f32 %v1423, %v3790
    %v3805 = vadd.f32 %v1428, %v3795
    %v3806 = vxor.u32 %v3798, 2147483648
    %v3807 = vxor.u32 %v3799, 2147483648
    %v3808 = vxor.u32 %v3800, 2147483648
    %v3809 = vxor.u32 %v3801, 2147483648
    %v3810 = vxor.u32 %v3802, 2147483648
    %v3811 = vxor.u32 %v3803, 2147483648
    %v3812 = vxor.u32 %v3804, 2147483648
    %v3813 = vxor.u32 %v3805, 2147483648
    %v3814 = vmul.f32 %v3806, 1.442695
    %v3815 = vpow.pop %v3814
    %v3816 = vmul.f32 %v3807, 1.442695
    %v3817 = vpow.pop %v3816
    %v3818 = vmul.f32 %v3808, 1.442695
    %v3819 = vpow.pop %v3818
    %v3820 = vmul.f32 %v3809, 1.442695
    %v3821 = vpow.pop %v3820
    %v3822 = vmul.f32 %v3810, 1.442695
    %v3823 = vpow.pop %v3822
    %v3824 = vmul.f32 %v3811, 1.442695
    %v3825 = vpow.pop %v3824
    %v3826 = vmul.f32 %v3812, 1.442695
    %v3827 = vpow.pop %v3826
    %v3828 = vmul.f32 %v3813, 1.442695
    %v3829 = vpow.pop %v3828
    %v3830 = vadd.f32 %v3815, 1.0
    %v3831 = vadd.f32 %v3817, 1.0
    %v3832 = vadd.f32 %v3819, 1.0
    %v3833 = vadd.f32 %v3821, 1.0
    %v3834 = vadd.f32 %v3823, 1.0
    %v3835 = vadd.f32 %v3825, 1.0
    %v3836 = vadd.f32 %v3827, 1.0
    %v3837 = vadd.f32 %v3829, 1.0
    %v3838 = vrcp.pop %v3830
    %v3839 = vmul.f32 1.0, %v3838
    %v3840 = vrcp.pop %v3831
    %v3841 = vmul.f32 1.0, %v3840
    %v3842 = vrcp.pop %v3832
    %v3843 = vmul.f32 1.0, %v3842
    %v3844 = vrcp.pop %v3833
    %v3845 = vmul.f32 1.0, %v3844
    %v3846 = vrcp.pop %v3834
    %v3847 = vmul.f32 1.0, %v3846
    %v3848 = vrcp.pop %v3835
    %v3849 = vmul.f32 1.0, %v3848
    %v3850 = vrcp.pop %v3836
    %v3851 = vmul.f32 1.0, %v3850
    %v3852 = vrcp.pop %v3837
    %v3853 = vmul.f32 1.0, %v3852
    %v3854 = vtanh.pop %v3798
    %v3855 = vtanh.pop %v3799
    %v3856 = vtanh.pop %v3800
    %v3857 = vtanh.pop %v3801
    %v3858 = vtanh.pop %v3802
    %v3859 = vtanh.pop %v3803
    %v3860 = vtanh.pop %v3804
    %v3861 = vtanh.pop %v3805
    %v3862 = vmul.f32 %v3839, %v3573
    %v3863 = vmul.f32 %v3841, %v3574
    %v3864 = vmul.f32 %v3843, %v3575
    %v3865 = vmul.f32 %v3845, %v3576
    %v3866 = vmul.f32 %v3847, %v3577
    %v3867 = vmul.f32 %v3849, %v3578
    %v3868 = vmul.f32 %v3851, %v3579
    %v3869 = vmul.f32 %v3853, %v3580
    %3878 = vrot.lane.b32.xlu0 %v3854, 32
    %v3879 = vpop.permute.xlu0 %3878
    %3880 = vrot.lane.b32.xlu0 %v3855, 32
    %v3881 = vpop.permute.xlu0 %3880
    %3882 = vrot.lane.b32.xlu0 %v3856, 32
    %v3883 = vpop.permute.xlu0 %3882
    %3884 = vrot.lane.b32.xlu0 %v3857, 32
    %v3885 = vpop.permute.xlu0 %3884
    %3886 = vrot.lane.b32.xlu0 %v3858, 32
    %v3887 = vpop.permute.xlu0 %3886
    %3888 = vrot.lane.b32.xlu0 %v3859, 32
    %v3889 = vpop.permute.xlu0 %3888
    %3890 = vrot.lane.b32.xlu0 %v3860, 32
    %v3891 = vpop.permute.xlu0 %3890
    %3892 = vrot.lane.b32.xlu0 %v3861, 32
    %v3893 = vpop.permute.xlu0 %3892
    %v3902 = vmul.f32 %v3839, %v3879
    %v3903 = vmul.f32 %v3841, %v3881
    %v3904 = vmul.f32 %v3843, %v3883
    %v3905 = vmul.f32 %v3845, %v3885
    %v3906 = vmul.f32 %v3847, %v3887
    %v3907 = vmul.f32 %v3849, %v3889
    %v3908 = vmul.f32 %v3851, %v3891
    %v3909 = vmul.f32 %v3853, %v3893
    %3918 = vrot.lane.b32.xlu0 %v3902, 32
    %v3919 = vpop.permute.xlu0 %3918
    %3920 = vrot.lane.b32.xlu0 %v3903, 32
    %v3921 = vpop.permute.xlu0 %3920
    %3922 = vrot.lane.b32.xlu0 %v3904, 32
    %v3923 = vpop.permute.xlu0 %3922
    %3924 = vrot.lane.b32.xlu0 %v3905, 32
    %v3925 = vpop.permute.xlu0 %3924
    %3926 = vrot.lane.b32.xlu0 %v3906, 32
    %v3927 = vpop.permute.xlu0 %3926
    %3928 = vrot.lane.b32.xlu0 %v3907, 32
    %v3929 = vpop.permute.xlu0 %3928
    %3930 = vrot.lane.b32.xlu0 %v3908, 32
    %v3931 = vpop.permute.xlu0 %3930
    %3932 = vrot.lane.b32.xlu0 %v3909, 32
    %v3933 = vpop.permute.xlu0 %3932
    %v3942 = vadd.f32 %v3862, %v3919
    %v3943 = vadd.f32 %v3863, %v3921
    %v3944 = vadd.f32 %v3864, %v3923
    %v3945 = vadd.f32 %v3865, %v3925
    %v3946 = vadd.f32 %v3866, %v3927
    %v3947 = vadd.f32 %v3867, %v3929
    %v3948 = vadd.f32 %v3868, %v3931
    %v3949 = vadd.f32 %v3869, %v3933
    %v3950 = vtanh.pop %v3942
    %v3951 = vtanh.pop %v3943
    %v3952 = vtanh.pop %v3944
    %v3953 = vtanh.pop %v3945
    %v3954 = vtanh.pop %v3946
    %v3955 = vtanh.pop %v3947
    %v3956 = vtanh.pop %v3948
    %v3957 = vtanh.pop %v3949
    %3966 = vrot.lane.b32.xlu0 %v3950, 32
    %v3967 = vpop.permute.xlu0 %3966
    %3968 = vrot.lane.b32.xlu0 %v3951, 32
    %v3969 = vpop.permute.xlu0 %3968
    %3970 = vrot.lane.b32.xlu0 %v3952, 32
    %v3971 = vpop.permute.xlu0 %3970
    %3972 = vrot.lane.b32.xlu0 %v3953, 32
    %v3973 = vpop.permute.xlu0 %3972
    %3974 = vrot.lane.b32.xlu0 %v3954, 32
    %v3975 = vpop.permute.xlu0 %3974
    %3976 = vrot.lane.b32.xlu0 %v3955, 32
    %v3977 = vpop.permute.xlu0 %3976
    %3978 = vrot.lane.b32.xlu0 %v3956, 32
    %v3979 = vpop.permute.xlu0 %3978
    %3980 = vrot.lane.b32.xlu0 %v3957, 32
    %v3981 = vpop.permute.xlu0 %3980
    %v3990 = vmul.f32 %v3839, %v3967
    %v3991 = vmul.f32 %v3841, %v3969
    %v3992 = vmul.f32 %v3843, %v3971
    %v3993 = vmul.f32 %v3845, %v3973
    %v3994 = vmul.f32 %v3847, %v3975
    %v3995 = vmul.f32 %v3849, %v3977
    %v3996 = vmul.f32 %v3851, %v3979
    %v3997 = vmul.f32 %v3853, %v3981
    %vm3998 = vcmp.ge.f32.partialorder %v3990, 0.0
    %vm3999 = vcmp.ge.f32.partialorder %v3991, 0.0
    %vm4000 = vcmp.ge.f32.partialorder %v3992, 0.0
    %vm4001 = vcmp.ge.f32.partialorder %v3993, 0.0
    %vm4002 = vcmp.ge.f32.partialorder %v3994, 0.0
    %vm4003 = vcmp.ge.f32.partialorder %v3995, 0.0
    %vm4004 = vcmp.ge.f32.partialorder %v3996, 0.0
    %vm4005 = vcmp.ge.f32.partialorder %v3997, 0.0
    %v4006 = vmul.f32 %v1791, %v3990
    %v4007 = vmul.f32 %v1791, %v3991
    %v4008 = vmul.f32 %v1791, %v3992
    %v4009 = vmul.f32 %v1791, %v3993
    %v4010 = vmul.f32 %v1791, %v3994
    %v4011 = vmul.f32 %v1791, %v3995
    %v4012 = vmul.f32 %v1791, %v3996
    %v4013 = vmul.f32 %v1791, %v3997
    %v4014 = vsel %vm3998, %v3990, %v4006
    %v4015 = vsel %vm3999, %v3991, %v4007
    %v4016 = vsel %vm4000, %v3992, %v4008
    %v4017 = vsel %vm4001, %v3993, %v4009
    %v4018 = vsel %vm4002, %v3994, %v4010
    %v4019 = vsel %vm4003, %v3995, %v4011
    %v4020 = vsel %vm4004, %v3996, %v4012
    %v4021 = vsel %vm4005, %v3997, %v4013
    %4030 = vrot.lane.b32.xlu0 %v3990, 64
    %v4031 = vpop.permute.xlu0 %4030
    %4032 = vrot.lane.b32.xlu0 %v3991, 64
    %v4033 = vpop.permute.xlu0 %4032
    %4034 = vrot.lane.b32.xlu0 %v3992, 64
    %v4035 = vpop.permute.xlu0 %4034
    %4036 = vrot.lane.b32.xlu0 %v3993, 64
    %v4037 = vpop.permute.xlu0 %4036
    %4038 = vrot.lane.b32.xlu0 %v3994, 64
    %v4039 = vpop.permute.xlu0 %4038
    %4040 = vrot.lane.b32.xlu0 %v3995, 64
    %v4041 = vpop.permute.xlu0 %4040
    %4042 = vrot.lane.b32.xlu0 %v3996, 64
    %v4043 = vpop.permute.xlu0 %4042
    %4044 = vrot.lane.b32.xlu0 %v3997, 64
    %v4045 = vpop.permute.xlu0 %4044
    %v4046 = vsel %vm893, %v4031, 0
    %v4048 = vsel %vm893, %v4033, 0
    %v4050 = vsel %vm893, %v4035, 0
    %v4052 = vsel %vm893, %v4037, 0
    %v4054 = vsel %vm893, %v4039, 0
    %v4056 = vsel %vm893, %v4041, 0
    %v4058 = vsel %vm893, %v4043, 0
    %v4060 = vsel %vm893, %v4045, 0
    %4062 = vmatprep.subr.mxu0 0.0
    %4063 = vmatpush1.msra.mxu0 0.0
    %4064 = vmatprep.subr.mxu0 0.0
    %4065 = vmatpush1.msra.mxu0 0.0
    %4066 = vmatprep.subr.mxu0 0.0
    %4067 = vmatpush1.msra.mxu0 0.0
    %4068 = vmatprep.subr.mxu0 0.0
    %4069 = vmatpush1.msra.mxu0 0.0
    %4070 = vmatprep.subr.mxu0 0.0
    %4071 = vmatpush1.msra.mxu0 0.0
    %4072 = vmatprep.subr.mxu0 0.0
    %4073 = vmatpush1.msra.mxu0 0.0
    %4074 = vmatprep.subr.mxu0 0.0
    %4075 = vmatpush1.msra.mxu0 0.0
    %4076 = vmatprep.subr.mxu0 0.0
    %4077 = vmatpush1.msra.mxu0 0.0
    %4078 = vmatprep.subr.mxu0 0.0
    %4079 = vmatpush1.msra.mxu0 0.0
    %4080 = vmatprep.subr.mxu0 0.0
    %4081 = vmatpush1.msra.mxu0 0.0
    %4082 = vmatprep.subr.mxu0 0.0
    %4083 = vmatpush1.msra.mxu0 0.0
    %4084 = vmatprep.subr.mxu0 0.0
    %4085 = vmatpush1.msra.mxu0 0.0
    %4086 = vmatprep.subr.mxu0 0.0
    %4087 = vmatpush1.msra.mxu0 %v1474
    %4088 = vmatprep.subr.mxu0 0.0
    %4089 = vmatpush1.msra.mxu0 %v1473
    %4090 = vmatprep.subr.mxu0 0.0
    %4091 = vmatpush1.msra.mxu0 %v1472
    %4092 = vmatprep.subr.mxu0 0.0
    %4093 = vmatpush1.msra.mxu0 %v1471
    %4094 = vmatprep.subr.mxu0 0.0
    %4095 = vmatpush2.msra.mxu0 0.0
    %4096 = vmatprep.subr.mxu0 0.0
    %4097 = vmatpush2.msra.mxu0 0.0
    %4098 = vmatprep.subr.mxu0 0.0
    %4099 = vmatpush2.msra.mxu0 0.0
    %4100 = vmatprep.subr.mxu0 0.0
    %4101 = vmatpush2.msra.mxu0 0.0
    %4102 = vmatprep.subr.mxu0 0.0
    %4103 = vmatpush2.msra.mxu0 0.0
    %4104 = vmatprep.subr.mxu0 0.0
    %4105 = vmatpush2.msra.mxu0 0.0
    %4106 = vmatprep.subr.mxu0 0.0
    %4107 = vmatpush2.msra.mxu0 0.0
    %4108 = vmatprep.subr.mxu0 0.0
    %4109 = vmatpush2.msra.mxu0 0.0
    %4110 = vmatprep.subr.mxu0 0.0
    %4111 = vmatpush2.msra.mxu0 0.0
    %4112 = vmatprep.subr.mxu0 0.0
    %4113 = vmatpush2.msra.mxu0 0.0
    %4114 = vmatprep.subr.mxu0 0.0
    %4115 = vmatpush2.msra.mxu0 0.0
    %4116 = vmatprep.subr.mxu0 0.0
    %4117 = vmatpush2.msra.mxu0 0.0
    %4118 = vmatprep.subr.mxu0 0.0
    %4119 = vmatpush2.msra.mxu0 0.0
    %4120 = vmatprep.subr.mxu0 0.0
    %4121 = vmatpush2.msra.mxu0 0.0
    %4122 = vmatprep.subr.mxu0 0.0
    %4123 = vmatpush2.msra.mxu0 0.0
    %4124 = vmatprep.subr.mxu0 0.0
    %4125 = vmatpush2.msra.mxu0 0.0
    %4126 = vmatprep.mubr.f32.mxu0 0.0
    %4127 = vmatmul.mubr.f32.gmra.mxu0 %v4046
    %v4128 = vpop.f32.mrf.mxu0
    %v4129 = vadd.f32 0.0, %v4128
    %v4130 = vpop.f32.mrf.mxu0
    %4131 = vmatprep.mubr.f32.mxu0 0.0
    %4132 = vmatmul.mubr.f32.gmra.mxu0 %v4048
    %v4133 = vpop.f32.mrf.mxu0
    %v4134 = vadd.f32 0.0, %v4133
    %v4135 = vpop.f32.mrf.mxu0
    %4136 = vmatprep.mubr.f32.mxu0 0.0
    %4137 = vmatmul.mubr.f32.gmra.mxu0 %v4050
    %v4138 = vpop.f32.mrf.mxu0
    %v4139 = vadd.f32 0.0, %v4138
    %v4140 = vpop.f32.mrf.mxu0
    %4141 = vmatprep.mubr.f32.mxu0 0.0
    %4142 = vmatmul.mubr.f32.gmra.mxu0 %v4052
    %v4143 = vpop.f32.mrf.mxu0
    %v4144 = vadd.f32 0.0, %v4143
    %v4145 = vpop.f32.mrf.mxu0
    %4146 = vmatprep.mubr.f32.mxu0 0.0
    %4147 = vmatmul.mubr.f32.gmra.mxu0 %v4054
    %v4148 = vpop.f32.mrf.mxu0
    %v4149 = vadd.f32 0.0, %v4148
    %v4150 = vpop.f32.mrf.mxu0
    %4151 = vmatprep.mubr.f32.mxu0 0.0
    %4152 = vmatmul.mubr.f32.gmra.mxu0 %v4056
    %v4153 = vpop.f32.mrf.mxu0
    %v4154 = vadd.f32 0.0, %v4153
    %v4155 = vpop.f32.mrf.mxu0
    %4156 = vmatprep.mubr.f32.mxu0 0.0
    %4157 = vmatmul.mubr.f32.gmra.mxu0 %v4058
    %v4158 = vpop.f32.mrf.mxu0
    %v4159 = vadd.f32 0.0, %v4158
    %v4160 = vpop.f32.mrf.mxu0
    %4161 = vmatprep.mubr.f32.mxu0 0.0
    %4162 = vmatmul.mubr.f32.gmra.mxu0 %v4060
    %v4163 = vpop.f32.mrf.mxu0
    %v4164 = vadd.f32 0.0, %v4163
    %v4165 = vpop.f32.mrf.mxu0
    %4166 = vdwg.mxu0
    %v4167 = vadd.f32 %v1433, %v4129
    %v4168 = vadd.f32 %v1438, %v4134
    %v4169 = vadd.f32 %v1443, %v4139
    %v4170 = vadd.f32 %v1448, %v4144
    %v4171 = vadd.f32 %v1453, %v4149
    %v4172 = vadd.f32 %v1458, %v4154
    %v4173 = vadd.f32 %v1463, %v4159
    %v4174 = vadd.f32 %v1468, %v4164
    %v4175 = vxor.u32 %v4167, 2147483648
    %v4176 = vxor.u32 %v4168, 2147483648
    %v4177 = vxor.u32 %v4169, 2147483648
    %v4178 = vxor.u32 %v4170, 2147483648
    %v4179 = vxor.u32 %v4171, 2147483648
    %v4180 = vxor.u32 %v4172, 2147483648
    %v4181 = vxor.u32 %v4173, 2147483648
    %v4182 = vxor.u32 %v4174, 2147483648
    %v4183 = vmul.f32 %v4175, 1.442695
    %v4184 = vpow.pop %v4183
    %v4185 = vmul.f32 %v4176, 1.442695
    %v4186 = vpow.pop %v4185
    %v4187 = vmul.f32 %v4177, 1.442695
    %v4188 = vpow.pop %v4187
    %v4189 = vmul.f32 %v4178, 1.442695
    %v4190 = vpow.pop %v4189
    %v4191 = vmul.f32 %v4179, 1.442695
    %v4192 = vpow.pop %v4191
    %v4193 = vmul.f32 %v4180, 1.442695
    %v4194 = vpow.pop %v4193
    %v4195 = vmul.f32 %v4181, 1.442695
    %v4196 = vpow.pop %v4195
    %v4197 = vmul.f32 %v4182, 1.442695
    %v4198 = vpow.pop %v4197
    %v4199 = vadd.f32 %v4184, 1.0
    %v4200 = vadd.f32 %v4186, 1.0
    %v4201 = vadd.f32 %v4188, 1.0
    %v4202 = vadd.f32 %v4190, 1.0
    %v4203 = vadd.f32 %v4192, 1.0
    %v4204 = vadd.f32 %v4194, 1.0
    %v4205 = vadd.f32 %v4196, 1.0
    %v4206 = vadd.f32 %v4198, 1.0
    %v4207 = vrcp.pop %v4199
    %v4208 = vmul.f32 1.0, %v4207
    %v4209 = vrcp.pop %v4200
    %v4210 = vmul.f32 1.0, %v4209
    %v4211 = vrcp.pop %v4201
    %v4212 = vmul.f32 1.0, %v4211
    %v4213 = vrcp.pop %v4202
    %v4214 = vmul.f32 1.0, %v4213
    %v4215 = vrcp.pop %v4203
    %v4216 = vmul.f32 1.0, %v4215
    %v4217 = vrcp.pop %v4204
    %v4218 = vmul.f32 1.0, %v4217
    %v4219 = vrcp.pop %v4205
    %v4220 = vmul.f32 1.0, %v4219
    %v4221 = vrcp.pop %v4206
    %v4222 = vmul.f32 1.0, %v4221
    %v4223 = vtanh.pop %v4167
    %v4224 = vtanh.pop %v4168
    %v4225 = vtanh.pop %v4169
    %v4226 = vtanh.pop %v4170
    %v4227 = vtanh.pop %v4171
    %v4228 = vtanh.pop %v4172
    %v4229 = vtanh.pop %v4173
    %v4230 = vtanh.pop %v4174
    %v4231 = vmul.f32 %v4208, %v3942
    %v4232 = vmul.f32 %v4210, %v3943
    %v4233 = vmul.f32 %v4212, %v3944
    %v4234 = vmul.f32 %v4214, %v3945
    %v4235 = vmul.f32 %v4216, %v3946
    %v4236 = vmul.f32 %v4218, %v3947
    %v4237 = vmul.f32 %v4220, %v3948
    %v4238 = vmul.f32 %v4222, %v3949
    %4247 = vrot.lane.b32.xlu0 %v4223, 32
    %v4248 = vpop.permute.xlu0 %4247
    %4249 = vrot.lane.b32.xlu0 %v4224, 32
    %v4250 = vpop.permute.xlu0 %4249
    %4251 = vrot.lane.b32.xlu0 %v4225, 32
    %v4252 = vpop.permute.xlu0 %4251
    %4253 = vrot.lane.b32.xlu0 %v4226, 32
    %v4254 = vpop.permute.xlu0 %4253
    %4255 = vrot.lane.b32.xlu0 %v4227, 32
    %v4256 = vpop.permute.xlu0 %4255
    %4257 = vrot.lane.b32.xlu0 %v4228, 32
    %v4258 = vpop.permute.xlu0 %4257
    %4259 = vrot.lane.b32.xlu0 %v4229, 32
    %v4260 = vpop.permute.xlu0 %4259
    %4261 = vrot.lane.b32.xlu0 %v4230, 32
    %v4262 = vpop.permute.xlu0 %4261
    %v4271 = vmul.f32 %v4208, %v4248
    %v4272 = vmul.f32 %v4210, %v4250
    %v4273 = vmul.f32 %v4212, %v4252
    %v4274 = vmul.f32 %v4214, %v4254
    %v4275 = vmul.f32 %v4216, %v4256
    %v4276 = vmul.f32 %v4218, %v4258
    %v4277 = vmul.f32 %v4220, %v4260
    %v4278 = vmul.f32 %v4222, %v4262
    %4287 = vrot.lane.b32.xlu0 %v4271, 32
    %v4288 = vpop.permute.xlu0 %4287
    %4289 = vrot.lane.b32.xlu0 %v4272, 32
    %v4290 = vpop.permute.xlu0 %4289
    %4291 = vrot.lane.b32.xlu0 %v4273, 32
    %v4292 = vpop.permute.xlu0 %4291
    %4293 = vrot.lane.b32.xlu0 %v4274, 32
    %v4294 = vpop.permute.xlu0 %4293
    %4295 = vrot.lane.b32.xlu0 %v4275, 32
    %v4296 = vpop.permute.xlu0 %4295
    %4297 = vrot.lane.b32.xlu0 %v4276, 32
    %v4298 = vpop.permute.xlu0 %4297
    %4299 = vrot.lane.b32.xlu0 %v4277, 32
    %v4300 = vpop.permute.xlu0 %4299
    %4301 = vrot.lane.b32.xlu0 %v4278, 32
    %v4302 = vpop.permute.xlu0 %4301
    %v4311 = vadd.f32 %v4231, %v4288
    %v4312 = vadd.f32 %v4232, %v4290
    %v4313 = vadd.f32 %v4233, %v4292
    %v4314 = vadd.f32 %v4234, %v4294
    %v4315 = vadd.f32 %v4235, %v4296
    %v4316 = vadd.f32 %v4236, %v4298
    %v4317 = vadd.f32 %v4237, %v4300
    %v4318 = vadd.f32 %v4238, %v4302
    %v4319 = vtanh.pop %v4311
    %v4320 = vtanh.pop %v4312
    %v4321 = vtanh.pop %v4313
    %v4322 = vtanh.pop %v4314
    %v4323 = vtanh.pop %v4315
    %v4324 = vtanh.pop %v4316
    %v4325 = vtanh.pop %v4317
    %v4326 = vtanh.pop %v4318
    %4335 = vrot.lane.b32.xlu0 %v4319, 32
    %v4336 = vpop.permute.xlu0 %4335
    %4337 = vrot.lane.b32.xlu0 %v4320, 32
    %v4338 = vpop.permute.xlu0 %4337
    %4339 = vrot.lane.b32.xlu0 %v4321, 32
    %v4340 = vpop.permute.xlu0 %4339
    %4341 = vrot.lane.b32.xlu0 %v4322, 32
    %v4342 = vpop.permute.xlu0 %4341
    %4343 = vrot.lane.b32.xlu0 %v4323, 32
    %v4344 = vpop.permute.xlu0 %4343
    %4345 = vrot.lane.b32.xlu0 %v4324, 32
    %v4346 = vpop.permute.xlu0 %4345
    %4347 = vrot.lane.b32.xlu0 %v4325, 32
    %v4348 = vpop.permute.xlu0 %4347
    %4349 = vrot.lane.b32.xlu0 %v4326, 32
    %v4350 = vpop.permute.xlu0 %4349
    %v4359 = vmul.f32 %v4208, %v4336
    %v4360 = vmul.f32 %v4210, %v4338
    %v4361 = vmul.f32 %v4212, %v4340
    %v4362 = vmul.f32 %v4214, %v4342
    %v4363 = vmul.f32 %v4216, %v4344
    %v4364 = vmul.f32 %v4218, %v4346
    %v4365 = vmul.f32 %v4220, %v4348
    %v4366 = vmul.f32 %v4222, %v4350
    %vm4367 = vcmp.ge.f32.partialorder %v4359, 0.0
    %vm4368 = vcmp.ge.f32.partialorder %v4360, 0.0
    %vm4369 = vcmp.ge.f32.partialorder %v4361, 0.0
    %vm4370 = vcmp.ge.f32.partialorder %v4362, 0.0
    %vm4371 = vcmp.ge.f32.partialorder %v4363, 0.0
    %vm4372 = vcmp.ge.f32.partialorder %v4364, 0.0
    %vm4373 = vcmp.ge.f32.partialorder %v4365, 0.0
    %vm4374 = vcmp.ge.f32.partialorder %v4366, 0.0
    %v4375 = vmul.f32 %v1791, %v4359
    %v4376 = vmul.f32 %v1791, %v4360
    %v4377 = vmul.f32 %v1791, %v4361
    %v4378 = vmul.f32 %v1791, %v4362
    %v4379 = vmul.f32 %v1791, %v4363
    %v4380 = vmul.f32 %v1791, %v4364
    %v4381 = vmul.f32 %v1791, %v4365
    %v4382 = vmul.f32 %v1791, %v4366
    %v4383 = vsel %vm4367, %v4359, %v4375
    %v4384 = vsel %vm4368, %v4360, %v4376
    %v4385 = vsel %vm4369, %v4361, %v4377
    %v4386 = vsel %vm4370, %v4362, %v4378
    %v4387 = vsel %vm4371, %v4363, %v4379
    %v4388 = vsel %vm4372, %v4364, %v4380
    %v4389 = vsel %vm4373, %v4365, %v4381
    %v4390 = vsel %vm4374, %v4366, %v4382
    %v4391 = vsub.f32 %v4383, %v1800
    %v4392 = vsub.f32 %v4384, %v1801
    %v4393 = vsub.f32 %v4385, %v1802
    %v4394 = vsub.f32 %v4386, %v1803
    %v4395 = vsub.f32 %v4387, %v1804
    %v4396 = vsub.f32 %v4388, %v1805
    %v4397 = vsub.f32 %v4389, %v1806
    %v4398 = vsub.f32 %v4390, %v1807
    %v4399 = vmul.f32 %v4383, %v1800
    %v4400 = vmul.f32 %v4384, %v1801
    %v4401 = vmul.f32 %v4385, %v1802
    %v4402 = vmul.f32 %v4386, %v1803
    %v4403 = vmul.f32 %v4387, %v1804
    %v4404 = vmul.f32 %v4388, %v1805
    %v4405 = vmul.f32 %v4389, %v1806
    %v4406 = vmul.f32 %v4390, %v1807
    %4415 = vrot.lane.b32.xlu0 %v4383, 64
    %v4416 = vpop.permute.xlu0 %4415
    %4417 = vrot.lane.b32.xlu0 %v4384, 64
    %v4418 = vpop.permute.xlu0 %4417
    %4419 = vrot.lane.b32.xlu0 %v4385, 64
    %v4420 = vpop.permute.xlu0 %4419
    %4421 = vrot.lane.b32.xlu0 %v4386, 64
    %v4422 = vpop.permute.xlu0 %4421
    %4423 = vrot.lane.b32.xlu0 %v4387, 64
    %v4424 = vpop.permute.xlu0 %4423
    %4425 = vrot.lane.b32.xlu0 %v4388, 64
    %v4426 = vpop.permute.xlu0 %4425
    %4427 = vrot.lane.b32.xlu0 %v4389, 64
    %v4428 = vpop.permute.xlu0 %4427
    %4429 = vrot.lane.b32.xlu0 %v4390, 64
    %v4430 = vpop.permute.xlu0 %4429
    %4447 = vrot.lane.b32.xlu0 %v1800, 96
    %v4448 = vpop.permute.xlu0 %4447
    %4449 = vrot.lane.b32.xlu0 %v1801, 96
    %v4450 = vpop.permute.xlu0 %4449
    %4451 = vrot.lane.b32.xlu0 %v1802, 96
    %v4452 = vpop.permute.xlu0 %4451
    %4453 = vrot.lane.b32.xlu0 %v1803, 96
    %v4454 = vpop.permute.xlu0 %4453
    %4455 = vrot.lane.b32.xlu0 %v1804, 96
    %v4456 = vpop.permute.xlu0 %4455
    %4457 = vrot.lane.b32.xlu0 %v1805, 96
    %v4458 = vpop.permute.xlu0 %4457
    %4459 = vrot.lane.b32.xlu0 %v1806, 96
    %v4460 = vpop.permute.xlu0 %4459
    %4461 = vrot.lane.b32.xlu0 %v1807, 96
    %v4462 = vpop.permute.xlu0 %4461
    %4479 = vrot.lane.b32.xlu0 %v4399, 32
    %v4480 = vpop.permute.xlu0 %4479
    %4481 = vrot.lane.b32.xlu0 %v4400, 32
    %v4482 = vpop.permute.xlu0 %4481
    %4483 = vrot.lane.b32.xlu0 %v4401, 32
    %v4484 = vpop.permute.xlu0 %4483
    %4485 = vrot.lane.b32.xlu0 %v4402, 32
    %v4486 = vpop.permute.xlu0 %4485
    %4487 = vrot.lane.b32.xlu0 %v4403, 32
    %v4488 = vpop.permute.xlu0 %4487
    %4489 = vrot.lane.b32.xlu0 %v4404, 32
    %v4490 = vpop.permute.xlu0 %4489
    %4491 = vrot.lane.b32.xlu0 %v4405, 32
    %v4492 = vpop.permute.xlu0 %4491
    %4493 = vrot.lane.b32.xlu0 %v4406, 32
    %v4494 = vpop.permute.xlu0 %4493
    %v4503 = vsel %vm893, %v4416, %v4448
    %v4504 = vsel %vm893, %v4418, %v4450
    %v4505 = vsel %vm893, %v4420, %v4452
    %v4506 = vsel %vm893, %v4422, %v4454
    %v4507 = vsel %vm893, %v4424, %v4456
    %v4508 = vsel %vm893, %v4426, %v4458
    %v4509 = vsel %vm893, %v4428, %v4460
    %v4510 = vsel %vm893, %v4430, %v4462
    %vm4511 = vcmask 523264
    %v4512 = vsel %vm4511, %v4503, %v4391
    %v4513 = vsel %vm4511, %v4504, %v4392
    %v4514 = vsel %vm4511, %v4505, %v4393
    %v4515 = vsel %vm4511, %v4506, %v4394
    %v4516 = vsel %vm4511, %v4507, %v4395
    %v4517 = vsel %vm4511, %v4508, %v4396
    %v4518 = vsel %vm4511, %v4509, %v4397
    %v4519 = vsel %vm4511, %v4510, %v4398
    %vm4520 = vcmask 785408
    %v4521 = vsel %vm4520, %v4512, %v4480
    %v4522 = vsel %vm4520, %v4513, %v4482
    %v4523 = vsel %vm4520, %v4514, %v4484
    %v4524 = vsel %vm4520, %v4515, %v4486
    %v4525 = vsel %vm4520, %v4516, %v4488
    %v4526 = vsel %vm4520, %v4517, %v4490
    %v4527 = vsel %vm4520, %v4518, %v4492
    %v4528 = vsel %vm4520, %v4519, %v4494
    %s4529 = sld [smem:[#allocation2 + $0x3]]
    %vm4530 = vcmp.ge.f32.partialorder %v4521, 0.0
    %vm4531 = vcmp.ge.f32.partialorder %v4522, 0.0
    %vm4532 = vcmp.ge.f32.partialorder %v4523, 0.0
    %vm4533 = vcmp.ge.f32.partialorder %v4524, 0.0
    %vm4534 = vcmp.ge.f32.partialorder %v4525, 0.0
    %vm4535 = vcmp.ge.f32.partialorder %v4526, 0.0
    %vm4536 = vcmp.ge.f32.partialorder %v4527, 0.0
    %vm4537 = vcmp.ge.f32.partialorder %v4528, 0.0
    %v4538 = vstv %s4529
    %v4539 = vmul.f32 %v4538, %v4521
    %v4540 = vmul.f32 %v4538, %v4522
    %v4541 = vmul.f32 %v4538, %v4523
    %v4542 = vmul.f32 %v4538, %v4524
    %v4543 = vmul.f32 %v4538, %v4525
    %v4544 = vmul.f32 %v4538, %v4526
    %v4545 = vmul.f32 %v4538, %v4527
    %v4546 = vmul.f32 %v4538, %v4528
    %v4547 = vsel %vm4530, %v4521, %v4539
    %v4548 = vsel %vm4531, %v4522, %v4540
    %v4549 = vsel %vm4532, %v4523, %v4541
    %v4550 = vsel %vm4533, %v4524, %v4542
    %v4551 = vsel %vm4534, %v4525, %v4543
    %v4552 = vsel %vm4535, %v4526, %v4544
    %v4553 = vsel %vm4536, %v4527, %v4545
    %v4554 = vsel %vm4537, %v4528, %v4546
    %v4555 = vsub.f32 %v4383, %v2169
    %v4556 = vsub.f32 %v4384, %v2170
    %v4557 = vsub.f32 %v4385, %v2171
    %v4558 = vsub.f32 %v4386, %v2172
    %v4559 = vsub.f32 %v4387, %v2173
    %v4560 = vsub.f32 %v4388, %v2174
    %v4561 = vsub.f32 %v4389, %v2175
    %v4562 = vsub.f32 %v4390, %v2176
    %v4563 = vmul.f32 %v4383, %v2169
    %v4564 = vmul.f32 %v4384, %v2170
    %v4565 = vmul.f32 %v4385, %v2171
    %v4566 = vmul.f32 %v4386, %v2172
    %v4567 = vmul.f32 %v4387, %v2173
    %v4568 = vmul.f32 %v4388, %v2174
    %v4569 = vmul.f32 %v4389, %v2175
    %v4570 = vmul.f32 %v4390, %v2176
    %4579 = vrot.lane.b32.xlu0 %v2169, 96
    %v4580 = vpop.permute.xlu0 %4579
    %4581 = vrot.lane.b32.xlu0 %v2170, 96
    %v4582 = vpop.permute.xlu0 %4581
    %4583 = vrot.lane.b32.xlu0 %v2171, 96
    %v4584 = vpop.permute.xlu0 %4583
    %4585 = vrot.lane.b32.xlu0 %v2172, 96
    %v4586 = vpop.permute.xlu0 %4585
    %4587 = vrot.lane.b32.xlu0 %v2173, 96
    %v4588 = vpop.permute.xlu0 %4587
    %4589 = vrot.lane.b32.xlu0 %v2174, 96
    %v4590 = vpop.permute.xlu0 %4589
    %4591 = vrot.lane.b32.xlu0 %v2175, 96
    %v4592 = vpop.permute.xlu0 %4591
    %4593 = vrot.lane.b32.xlu0 %v2176, 96
    %v4594 = vpop.permute.xlu0 %4593
    %4611 = vrot.lane.b32.xlu0 %v4563, 32
    %v4612 = vpop.permute.xlu0 %4611
    %4613 = vrot.lane.b32.xlu0 %v4564, 32
    %v4614 = vpop.permute.xlu0 %4613
    %4615 = vrot.lane.b32.xlu0 %v4565, 32
    %v4616 = vpop.permute.xlu0 %4615
    %4617 = vrot.lane.b32.xlu0 %v4566, 32
    %v4618 = vpop.permute.xlu0 %4617
    %4619 = vrot.lane.b32.xlu0 %v4567, 32
    %v4620 = vpop.permute.xlu0 %4619
    %4621 = vrot.lane.b32.xlu0 %v4568, 32
    %v4622 = vpop.permute.xlu0 %4621
    %4623 = vrot.lane.b32.xlu0 %v4569, 32
    %v4624 = vpop.permute.xlu0 %4623
    %4625 = vrot.lane.b32.xlu0 %v4570, 32
    %v4626 = vpop.permute.xlu0 %4625
    %v4635 = vsel %vm893, %v4416, %v4580
    %v4636 = vsel %vm893, %v4418, %v4582
    %v4637 = vsel %vm893, %v4420, %v4584
    %v4638 = vsel %vm893, %v4422, %v4586
    %v4639 = vsel %vm893, %v4424, %v4588
    %v4640 = vsel %vm893, %v4426, %v4590
    %v4641 = vsel %vm893, %v4428, %v4592
    %v4642 = vsel %vm893, %v4430, %v4594
    %v4643 = vsel %vm4511, %v4635, %v4555
    %v4644 = vsel %vm4511, %v4636, %v4556
    %v4645 = vsel %vm4511, %v4637, %v4557
    %v4646 = vsel %vm4511, %v4638, %v4558
    %v4647 = vsel %vm4511, %v4639, %v4559
    %v4648 = vsel %vm4511, %v4640, %v4560
    %v4649 = vsel %vm4511, %v4641, %v4561
    %v4650 = vsel %vm4511, %v4642, %v4562
    %v4651 = vsel %vm4520, %v4643, %v4612
    %v4652 = vsel %vm4520, %v4644, %v4614
    %v4653 = vsel %vm4520, %v4645, %v4616
    %v4654 = vsel %vm4520, %v4646, %v4618
    %v4655 = vsel %vm4520, %v4647, %v4620
    %v4656 = vsel %vm4520, %v4648, %v4622
    %v4657 = vsel %vm4520, %v4649, %v4624
    %v4658 = vsel %vm4520, %v4650, %v4626
    %s4659 = sld [smem:[#allocation2 + $0x4]]
    %vm4660 = vcmp.ge.f32.partialorder %v4651, 0.0
    %vm4661 = vcmp.ge.f32.partialorder %v4652, 0.0
    %vm4662 = vcmp.ge.f32.partialorder %v4653, 0.0
    %vm4663 = vcmp.ge.f32.partialorder %v4654, 0.0
    %vm4664 = vcmp.ge.f32.partialorder %v4655, 0.0
    %vm4665 = vcmp.ge.f32.partialorder %v4656, 0.0
    %vm4666 = vcmp.ge.f32.partialorder %v4657, 0.0
    %vm4667 = vcmp.ge.f32.partialorder %v4658, 0.0
    %v4668 = vstv %s4659
    %v4669 = vmul.f32 %v4668, %v4651
    %v4670 = vmul.f32 %v4668, %v4652
    %v4671 = vmul.f32 %v4668, %v4653
    %v4672 = vmul.f32 %v4668, %v4654
    %v4673 = vmul.f32 %v4668, %v4655
    %v4674 = vmul.f32 %v4668, %v4656
    %v4675 = vmul.f32 %v4668, %v4657
    %v4676 = vmul.f32 %v4668, %v4658
    %v4677 = vsel %vm4660, %v4651, %v4669
    %v4678 = vsel %vm4661, %v4652, %v4670
    %v4679 = vsel %vm4662, %v4653, %v4671
    %v4680 = vsel %vm4663, %v4654, %v4672
    %v4681 = vsel %vm4664, %v4655, %v4673
    %v4682 = vsel %vm4665, %v4656, %v4674
    %v4683 = vsel %vm4666, %v4657, %v4675
    %v4684 = vsel %vm4667, %v4658, %v4676
    %v4685 = vsub.f32 %v4383, %v2538
    %v4686 = vsub.f32 %v4384, %v2539
    %v4687 = vsub.f32 %v4385, %v2540
    %v4688 = vsub.f32 %v4386, %v2541
    %v4689 = vsub.f32 %v4387, %v2542
    %v4690 = vsub.f32 %v4388, %v2543
    %v4691 = vsub.f32 %v4389, %v2544
    %v4692 = vsub.f32 %v4390, %v2545
    %v4693 = vmul.f32 %v4383, %v2538
    %v4694 = vmul.f32 %v4384, %v2539
    %v4695 = vmul.f32 %v4385, %v2540
    %v4696 = vmul.f32 %v4386, %v2541
    %v4697 = vmul.f32 %v4387, %v2542
    %v4698 = vmul.f32 %v4388, %v2543
    %v4699 = vmul.f32 %v4389, %v2544
    %v4700 = vmul.f32 %v4390, %v2545
    %4709 = vrot.lane.b32.xlu0 %v2538, 96
    %v4710 = vpop.permute.xlu0 %4709
    %4711 = vrot.lane.b32.xlu0 %v2539, 96
    %v4712 = vpop.permute.xlu0 %4711
    %4713 = vrot.lane.b32.xlu0 %v2540, 96
    %v4714 = vpop.permute.xlu0 %4713
    %4715 = vrot.lane.b32.xlu0 %v2541, 96
    %v4716 = vpop.permute.xlu0 %4715
    %4717 = vrot.lane.b32.xlu0 %v2542, 96
    %v4718 = vpop.permute.xlu0 %4717
    %4719 = vrot.lane.b32.xlu0 %v2543, 96
    %v4720 = vpop.permute.xlu0 %4719
    %4721 = vrot.lane.b32.xlu0 %v2544, 96
    %v4722 = vpop.permute.xlu0 %4721
    %4723 = vrot.lane.b32.xlu0 %v2545, 96
    %v4724 = vpop.permute.xlu0 %4723
    %4741 = vrot.lane.b32.xlu0 %v4693, 32
    %v4742 = vpop.permute.xlu0 %4741
    %4743 = vrot.lane.b32.xlu0 %v4694, 32
    %v4744 = vpop.permute.xlu0 %4743
    %4745 = vrot.lane.b32.xlu0 %v4695, 32
    %v4746 = vpop.permute.xlu0 %4745
    %4747 = vrot.lane.b32.xlu0 %v4696, 32
    %v4748 = vpop.permute.xlu0 %4747
    %4749 = vrot.lane.b32.xlu0 %v4697, 32
    %v4750 = vpop.permute.xlu0 %4749
    %4751 = vrot.lane.b32.xlu0 %v4698, 32
    %v4752 = vpop.permute.xlu0 %4751
    %4753 = vrot.lane.b32.xlu0 %v4699, 32
    %v4754 = vpop.permute.xlu0 %4753
    %4755 = vrot.lane.b32.xlu0 %v4700, 32
    %v4756 = vpop.permute.xlu0 %4755
    %v4765 = vsel %vm893, %v4416, %v4710
    %v4766 = vsel %vm893, %v4418, %v4712
    %v4767 = vsel %vm893, %v4420, %v4714
    %v4768 = vsel %vm893, %v4422, %v4716
    %v4769 = vsel %vm893, %v4424, %v4718
    %v4770 = vsel %vm893, %v4426, %v4720
    %v4771 = vsel %vm893, %v4428, %v4722
    %v4772 = vsel %vm893, %v4430, %v4724
    %v4773 = vsel %vm4511, %v4765, %v4685
    %v4774 = vsel %vm4511, %v4766, %v4686
    %v4775 = vsel %vm4511, %v4767, %v4687
    %v4776 = vsel %vm4511, %v4768, %v4688
    %v4777 = vsel %vm4511, %v4769, %v4689
    %v4778 = vsel %vm4511, %v4770, %v4690
    %v4779 = vsel %vm4511, %v4771, %v4691
    %v4780 = vsel %vm4511, %v4772, %v4692
    %v4781 = vsel %vm4520, %v4773, %v4742
    %v4782 = vsel %vm4520, %v4774, %v4744
    %v4783 = vsel %vm4520, %v4775, %v4746
    %v4784 = vsel %vm4520, %v4776, %v4748
    %v4785 = vsel %vm4520, %v4777, %v4750
    %v4786 = vsel %vm4520, %v4778, %v4752
    %v4787 = vsel %vm4520, %v4779, %v4754
    %v4788 = vsel %vm4520, %v4780, %v4756
    %s4789 = sld [smem:[#allocation2 + $0x5]]
    %vm4790 = vcmp.ge.f32.partialorder %v4781, 0.0
    %vm4791 = vcmp.ge.f32.partialorder %v4782, 0.0
    %vm4792 = vcmp.ge.f32.partialorder %v4783, 0.0
    %vm4793 = vcmp.ge.f32.partialorder %v4784, 0.0
    %vm4794 = vcmp.ge.f32.partialorder %v4785, 0.0
    %vm4795 = vcmp.ge.f32.partialorder %v4786, 0.0
    %vm4796 = vcmp.ge.f32.partialorder %v4787, 0.0
    %vm4797 = vcmp.ge.f32.partialorder %v4788, 0.0
    %v4798 = vstv %s4789
    %v4799 = vmul.f32 %v4798, %v4781
    %v4800 = vmul.f32 %v4798, %v4782
    %v4801 = vmul.f32 %v4798, %v4783
    %v4802 = vmul.f32 %v4798, %v4784
    %v4803 = vmul.f32 %v4798, %v4785
    %v4804 = vmul.f32 %v4798, %v4786
    %v4805 = vmul.f32 %v4798, %v4787
    %v4806 = vmul.f32 %v4798, %v4788
    %v4807 = vsel %vm4790, %v4781, %v4799
    %v4808 = vsel %vm4791, %v4782, %v4800
    %v4809 = vsel %vm4792, %v4783, %v4801
    %v4810 = vsel %vm4793, %v4784, %v4802
    %v4811 = vsel %vm4794, %v4785, %v4803
    %v4812 = vsel %vm4795, %v4786, %v4804
    %v4813 = vsel %vm4796, %v4787, %v4805
    %v4814 = vsel %vm4797, %v4788, %v4806
    %v4815 = vsub.f32 %v4383, %v2907
    %v4816 = vsub.f32 %v4384, %v2908
    %v4817 = vsub.f32 %v4385, %v2909
    %v4818 = vsub.f32 %v4386, %v2910
    %v4819 = vsub.f32 %v4387, %v2911
    %v4820 = vsub.f32 %v4388, %v2912
    %v4821 = vsub.f32 %v4389, %v2913
    %v4822 = vsub.f32 %v4390, %v2914
    %v4823 = vmul.f32 %v4383, %v2907
    %v4824 = vmul.f32 %v4384, %v2908
    %v4825 = vmul.f32 %v4385, %v2909
    %v4826 = vmul.f32 %v4386, %v2910
    %v4827 = vmul.f32 %v4387, %v2911
    %v4828 = vmul.f32 %v4388, %v2912
    %v4829 = vmul.f32 %v4389, %v2913
    %v4830 = vmul.f32 %v4390, %v2914
    %4839 = vrot.lane.b32.xlu0 %v2907, 96
    %v4840 = vpop.permute.xlu0 %4839
    %4841 = vrot.lane.b32.xlu0 %v2908, 96
    %v4842 = vpop.permute.xlu0 %4841
    %4843 = vrot.lane.b32.xlu0 %v2909, 96
    %v4844 = vpop.permute.xlu0 %4843
    %4845 = vrot.lane.b32.xlu0 %v2910, 96
    %v4846 = vpop.permute.xlu0 %4845
    %4847 = vrot.lane.b32.xlu0 %v2911, 96
    %v4848 = vpop.permute.xlu0 %4847
    %4849 = vrot.lane.b32.xlu0 %v2912, 96
    %v4850 = vpop.permute.xlu0 %4849
    %4851 = vrot.lane.b32.xlu0 %v2913, 96
    %v4852 = vpop.permute.xlu0 %4851
    %4853 = vrot.lane.b32.xlu0 %v2914, 96
    %v4854 = vpop.permute.xlu0 %4853
    %4871 = vrot.lane.b32.xlu0 %v4823, 32
    %v4872 = vpop.permute.xlu0 %4871
    %4873 = vrot.lane.b32.xlu0 %v4824, 32
    %v4874 = vpop.permute.xlu0 %4873
    %4875 = vrot.lane.b32.xlu0 %v4825, 32
    %v4876 = vpop.permute.xlu0 %4875
    %4877 = vrot.lane.b32.xlu0 %v4826, 32
    %v4878 = vpop.permute.xlu0 %4877
    %4879 = vrot.lane.b32.xlu0 %v4827, 32
    %v4880 = vpop.permute.xlu0 %4879
    %4881 = vrot.lane.b32.xlu0 %v4828, 32
    %v4882 = vpop.permute.xlu0 %4881
    %4883 = vrot.lane.b32.xlu0 %v4829, 32
    %v4884 = vpop.permute.xlu0 %4883
    %4885 = vrot.lane.b32.xlu0 %v4830, 32
    %v4886 = vpop.permute.xlu0 %4885
    %v4895 = vsel %vm893, %v4416, %v4840
    %v4896 = vsel %vm893, %v4418, %v4842
    %v4897 = vsel %vm893, %v4420, %v4844
    %v4898 = vsel %vm893, %v4422, %v4846
    %v4899 = vsel %vm893, %v4424, %v4848
    %v4900 = vsel %vm893, %v4426, %v4850
    %v4901 = vsel %vm893, %v4428, %v4852
    %v4902 = vsel %vm893, %v4430, %v4854
    %v4903 = vsel %vm4511, %v4895, %v4815
    %v4904 = vsel %vm4511, %v4896, %v4816
    %v4905 = vsel %vm4511, %v4897, %v4817
    %v4906 = vsel %vm4511, %v4898, %v4818
    %v4907 = vsel %vm4511, %v4899, %v4819
    %v4908 = vsel %vm4511, %v4900, %v4820
    %v4909 = vsel %vm4511, %v4901, %v4821
    %v4910 = vsel %vm4511, %v4902, %v4822
    %v4911 = vsel %vm4520, %v4903, %v4872
    %v4912 = vsel %vm4520, %v4904, %v4874
    %v4913 = vsel %vm4520, %v4905, %v4876
    %v4914 = vsel %vm4520, %v4906, %v4878
    %v4915 = vsel %vm4520, %v4907, %v4880
    %v4916 = vsel %vm4520, %v4908, %v4882
    %v4917 = vsel %vm4520, %v4909, %v4884
    %v4918 = vsel %vm4520, %v4910, %v4886
    %s4919 = sld [smem:[#allocation2 + $0x6]]
    %vm4920 = vcmp.ge.f32.partialorder %v4911, 0.0
    %vm4921 = vcmp.ge.f32.partialorder %v4912, 0.0
    %vm4922 = vcmp.ge.f32.partialorder %v4913, 0.0
    %vm4923 = vcmp.ge.f32.partialorder %v4914, 0.0
    %vm4924 = vcmp.ge.f32.partialorder %v4915, 0.0
    %vm4925 = vcmp.ge.f32.partialorder %v4916, 0.0
    %vm4926 = vcmp.ge.f32.partialorder %v4917, 0.0
    %vm4927 = vcmp.ge.f32.partialorder %v4918, 0.0
    %v4928 = vstv %s4919
    %v4929 = vmul.f32 %v4928, %v4911
    %v4930 = vmul.f32 %v4928, %v4912
    %v4931 = vmul.f32 %v4928, %v4913
    %v4932 = vmul.f32 %v4928, %v4914
    %v4933 = vmul.f32 %v4928, %v4915
    %v4934 = vmul.f32 %v4928, %v4916
    %v4935 = vmul.f32 %v4928, %v4917
    %v4936 = vmul.f32 %v4928, %v4918
    %v4937 = vsel %vm4920, %v4911, %v4929
    %v4938 = vsel %vm4921, %v4912, %v4930
    %v4939 = vsel %vm4922, %v4913, %v4931
    %v4940 = vsel %vm4923, %v4914, %v4932
    %v4941 = vsel %vm4924, %v4915, %v4933
    %v4942 = vsel %vm4925, %v4916, %v4934
    %v4943 = vsel %vm4926, %v4917, %v4935
    %v4944 = vsel %vm4927, %v4918, %v4936
    %v4945 = vsub.f32 %v4383, %v3276
    %v4946 = vsub.f32 %v4384, %v3277
    %v4947 = vsub.f32 %v4385, %v3278
    %v4948 = vsub.f32 %v4386, %v3279
    %v4949 = vsub.f32 %v4387, %v3280
    %v4950 = vsub.f32 %v4388, %v3281
    %v4951 = vsub.f32 %v4389, %v3282
    %v4952 = vsub.f32 %v4390, %v3283
    %v4953 = vmul.f32 %v4383, %v3276
    %v4954 = vmul.f32 %v4384, %v3277
    %v4955 = vmul.f32 %v4385, %v3278
    %v4956 = vmul.f32 %v4386, %v3279
    %v4957 = vmul.f32 %v4387, %v3280
    %v4958 = vmul.f32 %v4388, %v3281
    %v4959 = vmul.f32 %v4389, %v3282
    %v4960 = vmul.f32 %v4390, %v3283
    %4969 = vrot.lane.b32.xlu0 %v3276, 96
    %v4970 = vpop.permute.xlu0 %4969
    %4971 = vrot.lane.b32.xlu0 %v3277, 96
    %v4972 = vpop.permute.xlu0 %4971
    %4973 = vrot.lane.b32.xlu0 %v3278, 96
    %v4974 = vpop.permute.xlu0 %4973
    %4975 = vrot.lane.b32.xlu0 %v3279, 96
    %v4976 = vpop.permute.xlu0 %4975
    %4977 = vrot.lane.b32.xlu0 %v3280, 96
    %v4978 = vpop.permute.xlu0 %4977
    %4979 = vrot.lane.b32.xlu0 %v3281, 96
    %v4980 = vpop.permute.xlu0 %4979
    %4981 = vrot.lane.b32.xlu0 %v3282, 96
    %v4982 = vpop.permute.xlu0 %4981
    %4983 = vrot.lane.b32.xlu0 %v3283, 96
    %v4984 = vpop.permute.xlu0 %4983
    %5001 = vrot.lane.b32.xlu0 %v4953, 32
    %v5002 = vpop.permute.xlu0 %5001
    %5003 = vrot.lane.b32.xlu0 %v4954, 32
    %v5004 = vpop.permute.xlu0 %5003
    %5005 = vrot.lane.b32.xlu0 %v4955, 32
    %v5006 = vpop.permute.xlu0 %5005
    %5007 = vrot.lane.b32.xlu0 %v4956, 32
    %v5008 = vpop.permute.xlu0 %5007
    %5009 = vrot.lane.b32.xlu0 %v4957, 32
    %v5010 = vpop.permute.xlu0 %5009
    %5011 = vrot.lane.b32.xlu0 %v4958, 32
    %v5012 = vpop.permute.xlu0 %5011
    %5013 = vrot.lane.b32.xlu0 %v4959, 32
    %v5014 = vpop.permute.xlu0 %5013
    %5015 = vrot.lane.b32.xlu0 %v4960, 32
    %v5016 = vpop.permute.xlu0 %5015
    %v5025 = vsel %vm893, %v4416, %v4970
    %v5026 = vsel %vm893, %v4418, %v4972
    %v5027 = vsel %vm893, %v4420, %v4974
    %v5028 = vsel %vm893, %v4422, %v4976
    %v5029 = vsel %vm893, %v4424, %v4978
    %v5030 = vsel %vm893, %v4426, %v4980
    %v5031 = vsel %vm893, %v4428, %v4982
    %v5032 = vsel %vm893, %v4430, %v4984
    %v5033 = vsel %vm4511, %v5025, %v4945
    %v5034 = vsel %vm4511, %v5026, %v4946
    %v5035 = vsel %vm4511, %v5027, %v4947
    %v5036 = vsel %vm4511, %v5028, %v4948
    %v5037 = vsel %vm4511, %v5029, %v4949
    %v5038 = vsel %vm4511, %v5030, %v4950
    %v5039 = vsel %vm4511, %v5031, %v4951
    %v5040 = vsel %vm4511, %v5032, %v4952
    %v5041 = vsel %vm4520, %v5033, %v5002
    %v5042 = vsel %vm4520, %v5034, %v5004
    %v5043 = vsel %vm4520, %v5035, %v5006
    %v5044 = vsel %vm4520, %v5036, %v5008
    %v5045 = vsel %vm4520, %v5037, %v5010
    %v5046 = vsel %vm4520, %v5038, %v5012
    %v5047 = vsel %vm4520, %v5039, %v5014
    %v5048 = vsel %vm4520, %v5040, %v5016
    %s5049 = sld [smem:[#allocation2 + $0x7]]
    %vm5050 = vcmp.ge.f32.partialorder %v5041, 0.0
    %vm5051 = vcmp.ge.f32.partialorder %v5042, 0.0
    %vm5052 = vcmp.ge.f32.partialorder %v5043, 0.0
    %vm5053 = vcmp.ge.f32.partialorder %v5044, 0.0
    %vm5054 = vcmp.ge.f32.partialorder %v5045, 0.0
    %vm5055 = vcmp.ge.f32.partialorder %v5046, 0.0
    %vm5056 = vcmp.ge.f32.partialorder %v5047, 0.0
    %vm5057 = vcmp.ge.f32.partialorder %v5048, 0.0
    %v5058 = vstv %s5049
    %v5059 = vmul.f32 %v5058, %v5041
    %v5060 = vmul.f32 %v5058, %v5042
    %v5061 = vmul.f32 %v5058, %v5043
    %v5062 = vmul.f32 %v5058, %v5044
    %v5063 = vmul.f32 %v5058, %v5045
    %v5064 = vmul.f32 %v5058, %v5046
    %v5065 = vmul.f32 %v5058, %v5047
    %v5066 = vmul.f32 %v5058, %v5048
    %v5067 = vsel %vm5050, %v5041, %v5059
    %v5068 = vsel %vm5051, %v5042, %v5060
    %v5069 = vsel %vm5052, %v5043, %v5061
    %v5070 = vsel %vm5053, %v5044, %v5062
    %v5071 = vsel %vm5054, %v5045, %v5063
    %v5072 = vsel %vm5055, %v5046, %v5064
    %v5073 = vsel %vm5056, %v5047, %v5065
    %v5074 = vsel %vm5057, %v5048, %v5066
    %v5075 = vsub.f32 %v4383, %v3645
    %v5076 = vsub.f32 %v4384, %v3646
    %v5077 = vsub.f32 %v4385, %v3647
    %v5078 = vsub.f32 %v4386, %v3648
    %v5079 = vsub.f32 %v4387, %v3649
    %v5080 = vsub.f32 %v4388, %v3650
    %v5081 = vsub.f32 %v4389, %v3651
    %v5082 = vsub.f32 %v4390, %v3652
    %v5083 = vmul.f32 %v4383, %v3645
    %v5084 = vmul.f32 %v4384, %v3646
    %v5085 = vmul.f32 %v4385, %v3647
    %v5086 = vmul.f32 %v4386, %v3648
    %v5087 = vmul.f32 %v4387, %v3649
    %v5088 = vmul.f32 %v4388, %v3650
    %v5089 = vmul.f32 %v4389, %v3651
    %v5090 = vmul.f32 %v4390, %v3652
    %5099 = vrot.lane.b32.xlu0 %v3645, 96
    %v5100 = vpop.permute.xlu0 %5099
    %5101 = vrot.lane.b32.xlu0 %v3646, 96
    %v5102 = vpop.permute.xlu0 %5101
    %5103 = vrot.lane.b32.xlu0 %v3647, 96
    %v5104 = vpop.permute.xlu0 %5103
    %5105 = vrot.lane.b32.xlu0 %v3648, 96
    %v5106 = vpop.permute.xlu0 %5105
    %5107 = vrot.lane.b32.xlu0 %v3649, 96
    %v5108 = vpop.permute.xlu0 %5107
    %5109 = vrot.lane.b32.xlu0 %v3650, 96
    %v5110 = vpop.permute.xlu0 %5109
    %5111 = vrot.lane.b32.xlu0 %v3651, 96
    %v5112 = vpop.permute.xlu0 %5111
    %5113 = vrot.lane.b32.xlu0 %v3652, 96
    %v5114 = vpop.permute.xlu0 %5113
    %5131 = vrot.lane.b32.xlu0 %v5083, 32
    %v5132 = vpop.permute.xlu0 %5131
    %5133 = vrot.lane.b32.xlu0 %v5084, 32
    %v5134 = vpop.permute.xlu0 %5133
    %5135 = vrot.lane.b32.xlu0 %v5085, 32
    %v5136 = vpop.permute.xlu0 %5135
    %5137 = vrot.lane.b32.xlu0 %v5086, 32
    %v5138 = vpop.permute.xlu0 %5137
    %5139 = vrot.lane.b32.xlu0 %v5087, 32
    %v5140 = vpop.permute.xlu0 %5139
    %5141 = vrot.lane.b32.xlu0 %v5088, 32
    %v5142 = vpop.permute.xlu0 %5141
    %5143 = vrot.lane.b32.xlu0 %v5089, 32
    %v5144 = vpop.permute.xlu0 %5143
    %5145 = vrot.lane.b32.xlu0 %v5090, 32
    %v5146 = vpop.permute.xlu0 %5145
    %v5155 = vsel %vm893, %v4416, %v5100
    %v5156 = vsel %vm893, %v4418, %v5102
    %v5157 = vsel %vm893, %v4420, %v5104
    %v5158 = vsel %vm893, %v4422, %v5106
    %v5159 = vsel %vm893, %v4424, %v5108
    %v5160 = vsel %vm893, %v4426, %v5110
    %v5161 = vsel %vm893, %v4428, %v5112
    %v5162 = vsel %vm893, %v4430, %v5114
    %v5163 = vsel %vm4511, %v5155, %v5075
    %v5164 = vsel %vm4511, %v5156, %v5076
    %v5165 = vsel %vm4511, %v5157, %v5077
    %v5166 = vsel %vm4511, %v5158, %v5078
    %v5167 = vsel %vm4511, %v5159, %v5079
    %v5168 = vsel %vm4511, %v5160, %v5080
    %v5169 = vsel %vm4511, %v5161, %v5081
    %v5170 = vsel %vm4511, %v5162, %v5082
    %v5171 = vsel %vm4520, %v5163, %v5132
    %v5172 = vsel %vm4520, %v5164, %v5134
    %v5173 = vsel %vm4520, %v5165, %v5136
    %v5174 = vsel %vm4520, %v5166, %v5138
    %v5175 = vsel %vm4520, %v5167, %v5140
    %v5176 = vsel %vm4520, %v5168, %v5142
    %v5177 = vsel %vm4520, %v5169, %v5144
    %v5178 = vsel %vm4520, %v5170, %v5146
    %s5179 = sld [smem:[#allocation2 + $0x8]]
    %vm5180 = vcmp.ge.f32.partialorder %v5171, 0.0
    %vm5181 = vcmp.ge.f32.partialorder %v5172, 0.0
    %vm5182 = vcmp.ge.f32.partialorder %v5173, 0.0
    %vm5183 = vcmp.ge.f32.partialorder %v5174, 0.0
    %vm5184 = vcmp.ge.f32.partialorder %v5175, 0.0
    %vm5185 = vcmp.ge.f32.partialorder %v5176, 0.0
    %vm5186 = vcmp.ge.f32.partialorder %v5177, 0.0
    %vm5187 = vcmp.ge.f32.partialorder %v5178, 0.0
    %v5188 = vstv %s5179
    %v5189 = vmul.f32 %v5188, %v5171
    %v5190 = vmul.f32 %v5188, %v5172
    %v5191 = vmul.f32 %v5188, %v5173
    %v5192 = vmul.f32 %v5188, %v5174
    %v5193 = vmul.f32 %v5188, %v5175
    %v5194 = vmul.f32 %v5188, %v5176
    %v5195 = vmul.f32 %v5188, %v5177
    %v5196 = vmul.f32 %v5188, %v5178
    %v5197 = vsel %vm5180, %v5171, %v5189
    %v5198 = vsel %vm5181, %v5172, %v5190
    %v5199 = vsel %vm5182, %v5173, %v5191
    %v5200 = vsel %vm5183, %v5174, %v5192
    %v5201 = vsel %vm5184, %v5175, %v5193
    %v5202 = vsel %vm5185, %v5176, %v5194
    %v5203 = vsel %vm5186, %v5177, %v5195
    %v5204 = vsel %vm5187, %v5178, %v5196
    %v5205 = vsub.f32 %v4383, %v4014
    %v5206 = vsub.f32 %v4384, %v4015
    %v5207 = vsub.f32 %v4385, %v4016
    %v5208 = vsub.f32 %v4386, %v4017
    %v5209 = vsub.f32 %v4387, %v4018
    %v5210 = vsub.f32 %v4388, %v4019
    %v5211 = vsub.f32 %v4389, %v4020
    %v5212 = vsub.f32 %v4390, %v4021
    %v5213 = vmul.f32 %v4383, %v4014
    %v5214 = vmul.f32 %v4384, %v4015
    %v5215 = vmul.f32 %v4385, %v4016
    %v5216 = vmul.f32 %v4386, %v4017
    %v5217 = vmul.f32 %v4387, %v4018
    %v5218 = vmul.f32 %v4388, %v4019
    %v5219 = vmul.f32 %v4389, %v4020
    %v5220 = vmul.f32 %v4390, %v4021
    %5229 = vrot.lane.b32.xlu0 %v4014, 96
    %v5230 = vpop.permute.xlu0 %5229
    %5231 = vrot.lane.b32.xlu0 %v4015, 96
    %v5232 = vpop.permute.xlu0 %5231
    %5233 = vrot.lane.b32.xlu0 %v4016, 96
    %v5234 = vpop.permute.xlu0 %5233
    %5235 = vrot.lane.b32.xlu0 %v4017, 96
    %v5236 = vpop.permute.xlu0 %5235
    %5237 = vrot.lane.b32.xlu0 %v4018, 96
    %v5238 = vpop.permute.xlu0 %5237
    %5239 = vrot.lane.b32.xlu0 %v4019, 96
    %v5240 = vpop.permute.xlu0 %5239
    %5241 = vrot.lane.b32.xlu0 %v4020, 96
    %v5242 = vpop.permute.xlu0 %5241
    %5243 = vrot.lane.b32.xlu0 %v4021, 96
    %v5244 = vpop.permute.xlu0 %5243
    %5261 = vrot.lane.b32.xlu0 %v5213, 32
    %v5262 = vpop.permute.xlu0 %5261
    %5263 = vrot.lane.b32.xlu0 %v5214, 32
    %v5264 = vpop.permute.xlu0 %5263
    %5265 = vrot.lane.b32.xlu0 %v5215, 32
    %v5266 = vpop.permute.xlu0 %5265
    %5267 = vrot.lane.b32.xlu0 %v5216, 32
    %v5268 = vpop.permute.xlu0 %5267
    %5269 = vrot.lane.b32.xlu0 %v5217, 32
    %v5270 = vpop.permute.xlu0 %5269
    %5271 = vrot.lane.b32.xlu0 %v5218, 32
    %v5272 = vpop.permute.xlu0 %5271
    %5273 = vrot.lane.b32.xlu0 %v5219, 32
    %v5274 = vpop.permute.xlu0 %5273
    %5275 = vrot.lane.b32.xlu0 %v5220, 32
    %v5276 = vpop.permute.xlu0 %5275
    %v5285 = vsel %vm893, %v4416, %v5230
    %v5286 = vsel %vm893, %v4418, %v5232
    %v5287 = vsel %vm893, %v4420, %v5234
    %v5288 = vsel %vm893, %v4422, %v5236
    %v5289 = vsel %vm893, %v4424, %v5238
    %v5290 = vsel %vm893, %v4426, %v5240
    %v5291 = vsel %vm893, %v4428, %v5242
    %v5292 = vsel %vm893, %v4430, %v5244
    %v5293 = vsel %vm4511, %v5285, %v5205
    %v5294 = vsel %vm4511, %v5286, %v5206
    %v5295 = vsel %vm4511, %v5287, %v5207
    %v5296 = vsel %vm4511, %v5288, %v5208
    %v5297 = vsel %vm4511, %v5289, %v5209
    %v5298 = vsel %vm4511, %v5290, %v5210
    %v5299 = vsel %vm4511, %v5291, %v5211
    %v5300 = vsel %vm4511, %v5292, %v5212
    %v5301 = vsel %vm4520, %v5293, %v5262
    %v5302 = vsel %vm4520, %v5294, %v5264
    %v5303 = vsel %vm4520, %v5295, %v5266
    %v5304 = vsel %vm4520, %v5296, %v5268
    %v5305 = vsel %vm4520, %v5297, %v5270
    %v5306 = vsel %vm4520, %v5298, %v5272
    %v5307 = vsel %vm4520, %v5299, %v5274
    %v5308 = vsel %vm4520, %v5300, %v5276
    %s5309 = sld [smem:[#allocation2 + $0x9]]
    %vm5310 = vcmp.ge.f32.partialorder %v5301, 0.0
    %vm5311 = vcmp.ge.f32.partialorder %v5302, 0.0
    %vm5312 = vcmp.ge.f32.partialorder %v5303, 0.0
    %vm5313 = vcmp.ge.f32.partialorder %v5304, 0.0
    %vm5314 = vcmp.ge.f32.partialorder %v5305, 0.0
    %vm5315 = vcmp.ge.f32.partialorder %v5306, 0.0
    %vm5316 = vcmp.ge.f32.partialorder %v5307, 0.0
    %vm5317 = vcmp.ge.f32.partialorder %v5308, 0.0
    %v5318 = vstv %s5309
    %v5319 = vmul.f32 %v5318, %v5301
    %v5320 = vmul.f32 %v5318, %v5302
    %v5321 = vmul.f32 %v5318, %v5303
    %v5322 = vmul.f32 %v5318, %v5304
    %v5323 = vmul.f32 %v5318, %v5305
    %v5324 = vmul.f32 %v5318, %v5306
    %v5325 = vmul.f32 %v5318, %v5307
    %v5326 = vmul.f32 %v5318, %v5308
    %v5327 = vsel %vm5310, %v5301, %v5319
    %v5328 = vsel %vm5311, %v5302, %v5320
    %v5329 = vsel %vm5312, %v5303, %v5321
    %v5330 = vsel %vm5313, %v5304, %v5322
    %v5331 = vsel %vm5314, %v5305, %v5323
    %v5332 = vsel %vm5315, %v5306, %v5324
    %v5333 = vsel %vm5316, %v5307, %v5325
    %v5334 = vsel %vm5317, %v5308, %v5326
    %v5335 = vsub.f32 %v4383, %v4383
    %v5336 = vsub.f32 %v4384, %v4384
    %v5337 = vsub.f32 %v4385, %v4385
    %v5338 = vsub.f32 %v4386, %v4386
    %v5339 = vsub.f32 %v4387, %v4387
    %v5340 = vsub.f32 %v4388, %v4388
    %v5341 = vsub.f32 %v4389, %v4389
    %v5342 = vsub.f32 %v4390, %v4390
    %v5343 = vmul.f32 %v4383, %v4383
    %v5344 = vmul.f32 %v4384, %v4384
    %v5345 = vmul.f32 %v4385, %v4385
    %v5346 = vmul.f32 %v4386, %v4386
    %v5347 = vmul.f32 %v4387, %v4387
    %v5348 = vmul.f32 %v4388, %v4388
    %v5349 = vmul.f32 %v4389, %v4389
    %v5350 = vmul.f32 %v4390, %v4390
    %5351 = vrot.lane.b32.xlu0 %v4383, 96
    %v5352 = vpop.permute.xlu0 %5351
    %5353 = vrot.lane.b32.xlu0 %v4384, 96
    %v5354 = vpop.permute.xlu0 %5353
    %5355 = vrot.lane.b32.xlu0 %v4385, 96
    %v5356 = vpop.permute.xlu0 %5355
    %5357 = vrot.lane.b32.xlu0 %v4386, 96
    %v5358 = vpop.permute.xlu0 %5357
    %5359 = vrot.lane.b32.xlu0 %v4387, 96
    %v5360 = vpop.permute.xlu0 %5359
    %5361 = vrot.lane.b32.xlu0 %v4388, 96
    %v5362 = vpop.permute.xlu0 %5361
    %5363 = vrot.lane.b32.xlu0 %v4389, 96
    %v5364 = vpop.permute.xlu0 %5363
    %5365 = vrot.lane.b32.xlu0 %v4390, 96
    %v5366 = vpop.permute.xlu0 %5365
    %5383 = vrot.lane.b32.xlu0 %v5343, 32
    %v5384 = vpop.permute.xlu0 %5383
    %5385 = vrot.lane.b32.xlu0 %v5344, 32
    %v5386 = vpop.permute.xlu0 %5385
    %5387 = vrot.lane.b32.xlu0 %v5345, 32
    %v5388 = vpop.permute.xlu0 %5387
    %5389 = vrot.lane.b32.xlu0 %v5346, 32
    %v5390 = vpop.permute.xlu0 %5389
    %5391 = vrot.lane.b32.xlu0 %v5347, 32
    %v5392 = vpop.permute.xlu0 %5391
    %5393 = vrot.lane.b32.xlu0 %v5348, 32
    %v5394 = vpop.permute.xlu0 %5393
    %5395 = vrot.lane.b32.xlu0 %v5349, 32
    %v5396 = vpop.permute.xlu0 %5395
    %5397 = vrot.lane.b32.xlu0 %v5350, 32
    %v5398 = vpop.permute.xlu0 %5397
    %v5407 = vsel %vm893, %v4416, %v5352
    %v5408 = vsel %vm893, %v4418, %v5354
    %v5409 = vsel %vm893, %v4420, %v5356
    %v5410 = vsel %vm893, %v4422, %v5358
    %v5411 = vsel %vm893, %v4424, %v5360
    %v5412 = vsel %vm893, %v4426, %v5362
    %v5413 = vsel %vm893, %v4428, %v5364
    %v5414 = vsel %vm893, %v4430, %v5366
    %v5415 = vsel %vm4511, %v5407, %v5335
    %v5416 = vsel %vm4511, %v5408, %v5336
    %v5417 = vsel %vm4511, %v5409, %v5337
    %v5418 = vsel %vm4511, %v5410, %v5338
    %v5419 = vsel %vm4511, %v5411, %v5339
    %v5420 = vsel %vm4511, %v5412, %v5340
    %v5421 = vsel %vm4511, %v5413, %v5341
    %v5422 = vsel %vm4511, %v5414, %v5342
    %v5423 = vsel %vm4520, %v5415, %v5384
    %v5424 = vsel %vm4520, %v5416, %v5386
    %v5425 = vsel %vm4520, %v5417, %v5388
    %v5426 = vsel %vm4520, %v5418, %v5390
    %v5427 = vsel %vm4520, %v5419, %v5392
    %v5428 = vsel %vm4520, %v5420, %v5394
    %v5429 = vsel %vm4520, %v5421, %v5396
    %v5430 = vsel %vm4520, %v5422, %v5398
    %v5431 = vld [vmem:[%s5] sm:$0xff]
    %v5432 = vld [vmem:[%s5 + $0x8] sm:$0xff]
    %v5433 = vld [vmem:[%s5 + $0x10] sm:$0xff]
    %v5434 = vld [vmem:[%s5 + $0x18] sm:$0xff]
    %v5435 = vld [vmem:[%s5 + $0x20] sm:$0xff]
    %v5436 = vld [vmem:[%s5 + $0x28] sm:$0xff]
    %v5437 = vld [vmem:[%s5 + $0x30] sm:$0xff]
    %v5438 = vld [vmem:[%s5 + $0x38] sm:$0xff]
    %v5439 = vld [vmem:[%s5 + $0x40] sm:$0xff]
    %v5440 = vld [vmem:[%s5 + $0x48] sm:$0xff]
    %v5441 = vld [vmem:[%s5 + $0x50] sm:$0xff]
    %v5442 = vld [vmem:[%s5 + $0x58] sm:$0xff]
    %v5443 = vld [vmem:[%s5 + $0x60] sm:$0xff]
    %v5444 = vld [vmem:[%s5 + $0x68] sm:$0xff]
    %v5445 = vld [vmem:[%s5 + $0x70] sm:$0xff]
    %v5446 = vld [vmem:[%s5 + $0x78] sm:$0xff]
    %v5447 = vld [vmem:[%s5 + $0x80] sm:$0xff]
    %v5448 = vld [vmem:[%s5 + $0x88] sm:$0xff]
    %v5449 = vld [vmem:[%s5 + $0x90] sm:$0xff]
    %v5450 = vld [vmem:[%s5 + $0x98] sm:$0xff]
    %v5451 = vld [vmem:[%s5 + $0xa0] sm:$0xff]
    %v5452 = vld [vmem:[%s5 + $0xa8] sm:$0xff]
    %v5453 = vld [vmem:[%s5 + $0xb0] sm:$0xff]
    %v5454 = vld [vmem:[%s5 + $0xb8] sm:$0xff]
    %v5455 = vld [vmem:[%s5 + $0xc0] sm:$0xff]
    %v5456 = vld [vmem:[%s5 + $0xc8] sm:$0xff]
    %v5457 = vld [vmem:[%s5 + $0xd0] sm:$0xff]
    %v5458 = vld [vmem:[%s5 + $0xd8] sm:$0xff]
    %v5459 = vld [vmem:[%s5 + $0xe0] sm:$0xff]
    %v5460 = vld [vmem:[%s5 + $0xe8] sm:$0xff]
    %v5461 = vld [vmem:[%s5 + $0xf0] sm:$0xff]
    %v5462 = vld [vmem:[%s5 + $0xf8] sm:$0xff]
    %v5463 = vld [vmem:[%s5 + $0x100] sm:$0xff]
    %v5464 = vld [vmem:[%s5 + $0x108] sm:$0xff]
    %v5465 = vld [vmem:[%s5 + $0x110] sm:$0xff]
    %v5466 = vld [vmem:[%s5 + $0x118] sm:$0xff]
    %v5467 = vld [vmem:[%s5 + $0x120] sm:$0xff]
    %v5468 = vld [vmem:[%s5 + $0x128] sm:$0xff]
    %v5469 = vld [vmem:[%s5 + $0x130] sm:$0xff]
    %v5470 = vld [vmem:[%s5 + $0x138] sm:$0xff]
    %v5471 = vld [vmem:[%s5 + $0x140] sm:$0xff]
    %v5472 = vld [vmem:[%s5 + $0x148] sm:$0xff]
    %v5473 = vld [vmem:[%s5 + $0x150] sm:$0xff]
    %v5474 = vld [vmem:[%s5 + $0x158] sm:$0xff]
    %v5475 = vld [vmem:[%s5 + $0x160] sm:$0xff]
    %v5476 = vld [vmem:[%s5 + $0x168] sm:$0xff]
    %v5477 = vld [vmem:[%s5 + $0x170] sm:$0xff]
    %v5478 = vld [vmem:[%s5 + $0x178] sm:$0xff]
    %v5479 = vld [vmem:[%s5 + $0x180] sm:$0xff]
    %v5480 = vld [vmem:[%s5 + $0x188] sm:$0xff]
    %v5481 = vld [vmem:[%s5 + $0x190] sm:$0xff]
    %v5482 = vld [vmem:[%s5 + $0x198] sm:$0xff]
    %v5483 = vld [vmem:[%s5 + $0x1a0] sm:$0xff]
    %v5484 = vld [vmem:[%s5 + $0x1a8] sm:$0xff]
    %v5485 = vld [vmem:[%s5 + $0x1b0] sm:$0xff]
    %v5486 = vld [vmem:[%s5 + $0x1b8] sm:$0xff]
    %v5487 = vld [vmem:[%s5 + $0x1c0] sm:$0xff]
    %v5488 = vld [vmem:[%s5 + $0x1c8] sm:$0xff]
    %v5489 = vld [vmem:[%s5 + $0x1d0] sm:$0xff]
    %v5490 = vld [vmem:[%s5 + $0x1d8] sm:$0xff]
    %v5491 = vld [vmem:[%s5 + $0x1e0] sm:$0xff]
    %v5492 = vld [vmem:[%s5 + $0x1e8] sm:$0xff]
    %v5493 = vld [vmem:[%s5 + $0x1f0] sm:$0xff]
    %v5494 = vld [vmem:[%s5 + $0x1f8] sm:$0xff]
    %v5495 = vld [vmem:[%s5 + $0x200] sm:$0xff]
    %v5496 = vld [vmem:[%s5 + $0x208] sm:$0xff]
    %v5497 = vld [vmem:[%s5 + $0x210] sm:$0xff]
    %v5498 = vld [vmem:[%s5 + $0x218] sm:$0xff]
    %v5499 = vld [vmem:[%s5 + $0x220] sm:$0xff]
    %v5500 = vld [vmem:[%s5 + $0x228] sm:$0xff]
    %v5501 = vld [vmem:[%s5 + $0x230] sm:$0xff]
    %v5502 = vld [vmem:[%s5 + $0x238] sm:$0xff]
    %v5503 = vld [vmem:[%s5 + $0x240] sm:$0xff]
    %v5504 = vld [vmem:[%s5 + $0x248] sm:$0xff]
    %v5505 = vld [vmem:[%s5 + $0x250] sm:$0xff]
    %v5506 = vld [vmem:[%s5 + $0x258] sm:$0xff]
    %v5507 = vld [vmem:[%s5 + $0x260] sm:$0xff]
    %v5508 = vld [vmem:[%s5 + $0x268] sm:$0xff]
    %v5509 = vld [vmem:[%s5 + $0x270] sm:$0xff]
    %v5510 = vld [vmem:[%s5 + $0x278] sm:$0xff]
    %v5511 = vld [vmem:[%s5 + $0x280] sm:$0xff]
    %v5512 = vld [vmem:[%s5 + $0x288] sm:$0xff]
    %v5513 = vld [vmem:[%s5 + $0x290] sm:$0xff]
    %v5514 = vld [vmem:[%s5 + $0x298] sm:$0xff]
    %v5515 = vld [vmem:[%s5 + $0x2a0] sm:$0xff]
    %v5516 = vld [vmem:[%s5 + $0x2a8] sm:$0xff]
    %v5517 = vld [vmem:[%s5 + $0x2b0] sm:$0xff]
    %v5518 = vld [vmem:[%s5 + $0x2b8] sm:$0xff]
    %v5519 = vld [vmem:[%s5 + $0x2c0] sm:$0xff]
    %v5520 = vld [vmem:[%s5 + $0x2c8] sm:$0xff]
    %v5521 = vld [vmem:[%s5 + $0x2d0] sm:$0xff]
    %v5522 = vld [vmem:[%s5 + $0x2d8] sm:$0xff]
    %v5523 = vld [vmem:[%s5 + $0x2e0] sm:$0xff]
    %v5524 = vld [vmem:[%s5 + $0x2e8] sm:$0xff]
    %v5525 = vld [vmem:[%s5 + $0x2f0] sm:$0xff]
    %v5526 = vld [vmem:[%s5 + $0x2f8] sm:$0xff]
    %v5527 = vld [vmem:[%s5 + $0x300] sm:$0xff]
    %v5528 = vld [vmem:[%s5 + $0x308] sm:$0xff]
    %v5529 = vld [vmem:[%s5 + $0x310] sm:$0xff]
    %v5530 = vld [vmem:[%s5 + $0x318] sm:$0xff]
    %v5531 = vld [vmem:[%s5 + $0x320] sm:$0xff]
    %v5532 = vld [vmem:[%s5 + $0x328] sm:$0xff]
    %v5533 = vld [vmem:[%s5 + $0x330] sm:$0xff]
    %v5534 = vld [vmem:[%s5 + $0x338] sm:$0xff]
    %v5535 = vld [vmem:[%s5 + $0x340] sm:$0xff]
    %v5536 = vld [vmem:[%s5 + $0x348] sm:$0xff]
    %v5537 = vld [vmem:[%s5 + $0x350] sm:$0xff]
    %v5538 = vld [vmem:[%s5 + $0x358] sm:$0xff]
    %v5539 = vld [vmem:[%s5 + $0x360] sm:$0xff]
    %v5540 = vld [vmem:[%s5 + $0x368] sm:$0xff]
    %v5541 = vld [vmem:[%s5 + $0x370] sm:$0xff]
    %v5542 = vld [vmem:[%s5 + $0x378] sm:$0xff]
    %v5543 = vld [vmem:[%s5 + $0x380] sm:$0xff]
    %v5544 = vld [vmem:[%s5 + $0x388] sm:$0xff]
    %v5545 = vld [vmem:[%s5 + $0x390] sm:$0xff]
    %v5546 = vld [vmem:[%s5 + $0x398] sm:$0xff]
    %v5547 = vld [vmem:[%s5 + $0x3a0] sm:$0xff]
    %v5548 = vld [vmem:[%s5 + $0x3a8] sm:$0xff]
    %v5549 = vld [vmem:[%s5 + $0x3b0] sm:$0xff]
    %v5550 = vld [vmem:[%s5 + $0x3b8] sm:$0xff]
    %v5551 = vld [vmem:[%s5 + $0x3c0] sm:$0xff]
    %v5552 = vld [vmem:[%s5 + $0x3c8] sm:$0xff]
    %v5553 = vld [vmem:[%s5 + $0x3d0] sm:$0xff]
    %v5554 = vld [vmem:[%s5 + $0x3d8] sm:$0xff]
    %v5555 = vld [vmem:[%s5 + $0x3e0] sm:$0xff]
    %v5556 = vld [vmem:[%s5 + $0x3e8] sm:$0xff]
    %v5557 = vld [vmem:[%s5 + $0x3f0] sm:$0xff]
    %v5558 = vld [vmem:[%s5 + $0x3f8] sm:$0xff]
    %5559 = vmatprep.subr.mxu0 0.0
    %5560 = vmatpush1.msra.mxu0 %v5446
    %5561 = vmatprep.subr.mxu0 0.0
    %5562 = vmatpush1.msra.mxu0 %v5445
    %5563 = vmatprep.subr.mxu0 0.0
    %5564 = vmatpush1.msra.mxu0 %v5444
    %5565 = vmatprep.subr.mxu0 0.0
    %5566 = vmatpush1.msra.mxu0 %v5443
    %5567 = vmatprep.subr.mxu0 0.0
    %5568 = vmatpush1.msra.mxu0 %v5442
    %5569 = vmatprep.subr.mxu0 0.0
    %5570 = vmatpush1.msra.mxu0 %v5441
    %5571 = vmatprep.subr.mxu0 0.0
    %5572 = vmatpush1.msra.mxu0 %v5440
    %5573 = vmatprep.subr.mxu0 0.0
    %5574 = vmatpush1.msra.mxu0 %v5439
    %5575 = vmatprep.subr.mxu0 0.0
    %5576 = vmatpush1.msra.mxu0 %v5438
    %5577 = vmatprep.subr.mxu0 0.0
    %5578 = vmatpush1.msra.mxu0 %v5437
    %5579 = vmatprep.subr.mxu0 0.0
    %5580 = vmatpush1.msra.mxu0 %v5436
    %5581 = vmatprep.subr.mxu0 0.0
    %5582 = vmatpush1.msra.mxu0 %v5435
    %5583 = vmatprep.subr.mxu0 0.0
    %5584 = vmatpush1.msra.mxu0 %v5434
    %5585 = vmatprep.subr.mxu0 0.0
    %5586 = vmatpush1.msra.mxu0 %v5433
    %5587 = vmatprep.subr.mxu0 0.0
    %5588 = vmatpush1.msra.mxu0 %v5432
    %5589 = vmatprep.subr.mxu0 0.0
    %5590 = vmatpush1.msra.mxu0 %v5431
    %5591 = vmatprep.subr.mxu0 0.0
    %5592 = vmatpush2.msra.mxu0 %v5462
    %5593 = vmatprep.subr.mxu0 0.0
    %5594 = vmatpush2.msra.mxu0 %v5461
    %5595 = vmatprep.subr.mxu0 0.0
    %5596 = vmatpush2.msra.mxu0 %v5460
    %5597 = vmatprep.subr.mxu0 0.0
    %5598 = vmatpush2.msra.mxu0 %v5459
    %5599 = vmatprep.subr.mxu0 0.0
    %5600 = vmatpush2.msra.mxu0 %v5458
    %5601 = vmatprep.subr.mxu0 0.0
    %5602 = vmatpush2.msra.mxu0 %v5457
    %5603 = vmatprep.subr.mxu0 0.0
    %5604 = vmatpush2.msra.mxu0 %v5456
    %5605 = vmatprep.subr.mxu0 0.0
    %5606 = vmatpush2.msra.mxu0 %v5455
    %5607 = vmatprep.subr.mxu0 0.0
    %5608 = vmatpush2.msra.mxu0 %v5454
    %5609 = vmatprep.subr.mxu0 0.0
    %5610 = vmatpush2.msra.mxu0 %v5453
    %5611 = vmatprep.subr.mxu0 0.0
    %5612 = vmatpush2.msra.mxu0 %v5452
    %5613 = vmatprep.subr.mxu0 0.0
    %5614 = vmatpush2.msra.mxu0 %v5451
    %5615 = vmatprep.subr.mxu0 0.0
    %5616 = vmatpush2.msra.mxu0 %v5450
    %5617 = vmatprep.subr.mxu0 0.0
    %5618 = vmatpush2.msra.mxu0 %v5449
    %5619 = vmatprep.subr.mxu0 0.0
    %5620 = vmatpush2.msra.mxu0 %v5448
    %5621 = vmatprep.subr.mxu0 0.0
    %5622 = vmatpush2.msra.mxu0 %v5447
    %5623 = vmatprep.mubr.f32.mxu0 %v4677
    %5624 = vmatmul.mubr.f32.gmra.mxu0 %v4547
    %v5625 = vpop.f32.mrf.mxu0
    %v5626 = vadd.f32 0.0, %v5625
    %v5627 = vpop.f32.mrf.mxu0
    %5628 = vmatprep.mubr.f32.mxu0 %v4678
    %5629 = vmatmul.mubr.f32.gmra.mxu0 %v4548
    %v5630 = vpop.f32.mrf.mxu0
    %v5631 = vadd.f32 0.0, %v5630
    %v5632 = vpop.f32.mrf.mxu0
    %5633 = vmatprep.mubr.f32.mxu0 %v4679
    %5634 = vmatmul.mubr.f32.gmra.mxu0 %v4549
    %v5635 = vpop.f32.mrf.mxu0
    %v5636 = vadd.f32 0.0, %v5635
    %v5637 = vpop.f32.mrf.mxu0
    %5638 = vmatprep.mubr.f32.mxu0 %v4680
    %5639 = vmatmul.mubr.f32.gmra.mxu0 %v4550
    %v5640 = vpop.f32.mrf.mxu0
    %v5641 = vadd.f32 0.0, %v5640
    %v5642 = vpop.f32.mrf.mxu0
    %5643 = vmatprep.mubr.f32.mxu0 %v4681
    %5644 = vmatmul.mubr.f32.gmra.mxu0 %v4551
    %v5645 = vpop.f32.mrf.mxu0
    %v5646 = vadd.f32 0.0, %v5645
    %v5647 = vpop.f32.mrf.mxu0
    %5648 = vmatprep.mubr.f32.mxu0 %v4682
    %5649 = vmatmul.mubr.f32.gmra.mxu0 %v4552
    %v5650 = vpop.f32.mrf.mxu0
    %v5651 = vadd.f32 0.0, %v5650
    %v5652 = vpop.f32.mrf.mxu0
    %5653 = vmatprep.mubr.f32.mxu0 %v4683
    %5654 = vmatmul.mubr.f32.gmra.mxu0 %v4553
    %v5655 = vpop.f32.mrf.mxu0
    %v5656 = vadd.f32 0.0, %v5655
    %v5657 = vpop.f32.mrf.mxu0
    %5658 = vmatprep.mubr.f32.mxu0 %v4684
    %5659 = vmatmul.mubr.f32.gmra.mxu0 %v4554
    %v5660 = vpop.f32.mrf.mxu0
    %v5661 = vadd.f32 0.0, %v5660
    %v5662 = vpop.f32.mrf.mxu0
    %5663 = vdwg.mxu0
    %5664 = vmatprep.subr.mxu0 0.0
    %5665 = vmatpush1.msra.mxu0 %v5478
    %5666 = vmatprep.subr.mxu0 0.0
    %5667 = vmatpush1.msra.mxu0 %v5477
    %5668 = vmatprep.subr.mxu0 0.0
    %5669 = vmatpush1.msra.mxu0 %v5476
    %5670 = vmatprep.subr.mxu0 0.0
    %5671 = vmatpush1.msra.mxu0 %v5475
    %5672 = vmatprep.subr.mxu0 0.0
    %5673 = vmatpush1.msra.mxu0 %v5474
    %5674 = vmatprep.subr.mxu0 0.0
    %5675 = vmatpush1.msra.mxu0 %v5473
    %5676 = vmatprep.subr.mxu0 0.0
    %5677 = vmatpush1.msra.mxu0 %v5472
    %5678 = vmatprep.subr.mxu0 0.0
    %5679 = vmatpush1.msra.mxu0 %v5471
    %5680 = vmatprep.subr.mxu0 0.0
    %5681 = vmatpush1.msra.mxu0 %v5470
    %5682 = vmatprep.subr.mxu0 0.0
    %5683 = vmatpush1.msra.mxu0 %v5469
    %5684 = vmatprep.subr.mxu0 0.0
    %5685 = vmatpush1.msra.mxu0 %v5468
    %5686 = vmatprep.subr.mxu0 0.0
    %5687 = vmatpush1.msra.mxu0 %v5467
    %5688 = vmatprep.subr.mxu0 0.0
    %5689 = vmatpush1.msra.mxu0 %v5466
    %5690 = vmatprep.subr.mxu0 0.0
    %5691 = vmatpush1.msra.mxu0 %v5465
    %5692 = vmatprep.subr.mxu0 0.0
    %5693 = vmatpush1.msra.mxu0 %v5464
    %5694 = vmatprep.subr.mxu0 0.0
    %5695 = vmatpush1.msra.mxu0 %v5463
    %5696 = vmatprep.subr.mxu0 0.0
    %5697 = vmatpush2.msra.mxu0 %v5494
    %5698 = vmatprep.subr.mxu0 0.0
    %5699 = vmatpush2.msra.mxu0 %v5493
    %5700 = vmatprep.subr.mxu0 0.0
    %5701 = vmatpush2.msra.mxu0 %v5492
    %5702 = vmatprep.subr.mxu0 0.0
    %5703 = vmatpush2.msra.mxu0 %v5491
    %5704 = vmatprep.subr.mxu0 0.0
    %5705 = vmatpush2.msra.mxu0 %v5490
    %5706 = vmatprep.subr.mxu0 0.0
    %5707 = vmatpush2.msra.mxu0 %v5489
    %5708 = vmatprep.subr.mxu0 0.0
    %5709 = vmatpush2.msra.mxu0 %v5488
    %5710 = vmatprep.subr.mxu0 0.0
    %5711 = vmatpush2.msra.mxu0 %v5487
    %5712 = vmatprep.subr.mxu0 0.0
    %5713 = vmatpush2.msra.mxu0 %v5486
    %5714 = vmatprep.subr.mxu0 0.0
    %5715 = vmatpush2.msra.mxu0 %v5485
    %5716 = vmatprep.subr.mxu0 0.0
    %5717 = vmatpush2.msra.mxu0 %v5484
    %5718 = vmatprep.subr.mxu0 0.0
    %5719 = vmatpush2.msra.mxu0 %v5483
    %5720 = vmatprep.subr.mxu0 0.0
    %5721 = vmatpush2.msra.mxu0 %v5482
    %5722 = vmatprep.subr.mxu0 0.0
    %5723 = vmatpush2.msra.mxu0 %v5481
    %5724 = vmatprep.subr.mxu0 0.0
    %5725 = vmatpush2.msra.mxu0 %v5480
    %5726 = vmatprep.subr.mxu0 0.0
    %5727 = vmatpush2.msra.mxu0 %v5479
    %5728 = vmatprep.mubr.f32.mxu0 %v4937
    %5729 = vmatmul.mubr.f32.gmra.mxu0 %v4807
    %v5730 = vpop.f32.mrf.mxu0
    %v5731 = vadd.f32 %v5626, %v5730
    %v5732 = vpop.f32.mrf.mxu0
    %5733 = vmatprep.mubr.f32.mxu0 %v4938
    %5734 = vmatmul.mubr.f32.gmra.mxu0 %v4808
    %v5735 = vpop.f32.mrf.mxu0
    %v5736 = vadd.f32 %v5631, %v5735
    %v5737 = vpop.f32.mrf.mxu0
    %5738 = vmatprep.mubr.f32.mxu0 %v4939
    %5739 = vmatmul.mubr.f32.gmra.mxu0 %v4809
    %v5740 = vpop.f32.mrf.mxu0
    %v5741 = vadd.f32 %v5636, %v5740
    %v5742 = vpop.f32.mrf.mxu0
    %5743 = vmatprep.mubr.f32.mxu0 %v4940
    %5744 = vmatmul.mubr.f32.gmra.mxu0 %v4810
    %v5745 = vpop.f32.mrf.mxu0
    %v5746 = vadd.f32 %v5641, %v5745
    %v5747 = vpop.f32.mrf.mxu0
    %5748 = vmatprep.mubr.f32.mxu0 %v4941
    %5749 = vmatmul.mubr.f32.gmra.mxu0 %v4811
    %v5750 = vpop.f32.mrf.mxu0
    %v5751 = vadd.f32 %v5646, %v5750
    %v5752 = vpop.f32.mrf.mxu0
    %5753 = vmatprep.mubr.f32.mxu0 %v4942
    %5754 = vmatmul.mubr.f32.gmra.mxu0 %v4812
    %v5755 = vpop.f32.mrf.mxu0
    %v5756 = vadd.f32 %v5651, %v5755
    %v5757 = vpop.f32.mrf.mxu0
    %5758 = vmatprep.mubr.f32.mxu0 %v4943
    %5759 = vmatmul.mubr.f32.gmra.mxu0 %v4813
    %v5760 = vpop.f32.mrf.mxu0
    %v5761 = vadd.f32 %v5656, %v5760
    %v5762 = vpop.f32.mrf.mxu0
    %5763 = vmatprep.mubr.f32.mxu0 %v4944
    %5764 = vmatmul.mubr.f32.gmra.mxu0 %v4814
    %v5765 = vpop.f32.mrf.mxu0
    %v5766 = vadd.f32 %v5661, %v5765
    %v5767 = vpop.f32.mrf.mxu0
    %5768 = vdwg.mxu0
    %5769 = vmatprep.subr.mxu0 0.0
    %5770 = vmatpush1.msra.mxu0 %v5510
    %5771 = vmatprep.subr.mxu0 0.0
    %5772 = vmatpush1.msra.mxu0 %v5509
    %5773 = vmatprep.subr.mxu0 0.0
    %5774 = vmatpush1.msra.mxu0 %v5508
    %5775 = vmatprep.subr.mxu0 0.0
    %5776 = vmatpush1.msra.mxu0 %v5507
    %5777 = vmatprep.subr.mxu0 0.0
    %5778 = vmatpush1.msra.mxu0 %v5506
    %5779 = vmatprep.subr.mxu0 0.0
    %5780 = vmatpush1.msra.mxu0 %v5505
    %5781 = vmatprep.subr.mxu0 0.0
    %5782 = vmatpush1.msra.mxu0 %v5504
    %5783 = vmatprep.subr.mxu0 0.0
    %5784 = vmatpush1.msra.mxu0 %v5503
    %5785 = vmatprep.subr.mxu0 0.0
    %5786 = vmatpush1.msra.mxu0 %v5502
    %5787 = vmatprep.subr.mxu0 0.0
    %5788 = vmatpush1.msra.mxu0 %v5501
    %5789 = vmatprep.subr.mxu0 0.0
    %5790 = vmatpush1.msra.mxu0 %v5500
    %5791 = vmatprep.subr.mxu0 0.0
    %5792 = vmatpush1.msra.mxu0 %v5499
    %5793 = vmatprep.subr.mxu0 0.0
    %5794 = vmatpush1.msra.mxu0 %v5498
    %5795 = vmatprep.subr.mxu0 0.0
    %5796 = vmatpush1.msra.mxu0 %v5497
    %5797 = vmatprep.subr.mxu0 0.0
    %5798 = vmatpush1.msra.mxu0 %v5496
    %5799 = vmatprep.subr.mxu0 0.0
    %5800 = vmatpush1.msra.mxu0 %v5495
    %5801 = vmatprep.subr.mxu0 0.0
    %5802 = vmatpush2.msra.mxu0 %v5526
    %5803 = vmatprep.subr.mxu0 0.0
    %5804 = vmatpush2.msra.mxu0 %v5525
    %5805 = vmatprep.subr.mxu0 0.0
    %5806 = vmatpush2.msra.mxu0 %v5524
    %5807 = vmatprep.subr.mxu0 0.0
    %5808 = vmatpush2.msra.mxu0 %v5523
    %5809 = vmatprep.subr.mxu0 0.0
    %5810 = vmatpush2.msra.mxu0 %v5522
    %5811 = vmatprep.subr.mxu0 0.0
    %5812 = vmatpush2.msra.mxu0 %v5521
    %5813 = vmatprep.subr.mxu0 0.0
    %5814 = vmatpush2.msra.mxu0 %v5520
    %5815 = vmatprep.subr.mxu0 0.0
    %5816 = vmatpush2.msra.mxu0 %v5519
    %5817 = vmatprep.subr.mxu0 0.0
    %5818 = vmatpush2.msra.mxu0 %v5518
    %5819 = vmatprep.subr.mxu0 0.0
    %5820 = vmatpush2.msra.mxu0 %v5517
    %5821 = vmatprep.subr.mxu0 0.0
    %5822 = vmatpush2.msra.mxu0 %v5516
    %5823 = vmatprep.subr.mxu0 0.0
    %5824 = vmatpush2.msra.mxu0 %v5515
    %5825 = vmatprep.subr.mxu0 0.0
    %5826 = vmatpush2.msra.mxu0 %v5514
    %5827 = vmatprep.subr.mxu0 0.0
    %5828 = vmatpush2.msra.mxu0 %v5513
    %5829 = vmatprep.subr.mxu0 0.0
    %5830 = vmatpush2.msra.mxu0 %v5512
    %5831 = vmatprep.subr.mxu0 0.0
    %5832 = vmatpush2.msra.mxu0 %v5511
    %5833 = vmatprep.mubr.f32.mxu0 %v5197
    %5834 = vmatmul.mubr.f32.gmra.mxu0 %v5067
    %v5835 = vpop.f32.mrf.mxu0
    %v5836 = vadd.f32 %v5731, %v5835
    %v5837 = vpop.f32.mrf.mxu0
    %5838 = vmatprep.mubr.f32.mxu0 %v5198
    %5839 = vmatmul.mubr.f32.gmra.mxu0 %v5068
    %v5840 = vpop.f32.mrf.mxu0
    %v5841 = vadd.f32 %v5736, %v5840
    %v5842 = vpop.f32.mrf.mxu0
    %5843 = vmatprep.mubr.f32.mxu0 %v5199
    %5844 = vmatmul.mubr.f32.gmra.mxu0 %v5069
    %v5845 = vpop.f32.mrf.mxu0
    %v5846 = vadd.f32 %v5741, %v5845
    %v5847 = vpop.f32.mrf.mxu0
    %5848 = vmatprep.mubr.f32.mxu0 %v5200
    %5849 = vmatmul.mubr.f32.gmra.mxu0 %v5070
    %v5850 = vpop.f32.mrf.mxu0
    %v5851 = vadd.f32 %v5746, %v5850
    %v5852 = vpop.f32.mrf.mxu0
    %5853 = vmatprep.mubr.f32.mxu0 %v5201
    %5854 = vmatmul.mubr.f32.gmra.mxu0 %v5071
    %v5855 = vpop.f32.mrf.mxu0
    %v5856 = vadd.f32 %v5751, %v5855
    %v5857 = vpop.f32.mrf.mxu0
    %5858 = vmatprep.mubr.f32.mxu0 %v5202
    %5859 = vmatmul.mubr.f32.gmra.mxu0 %v5072
    %v5860 = vpop.f32.mrf.mxu0
    %v5861 = vadd.f32 %v5756, %v5860
    %v5862 = vpop.f32.mrf.mxu0
    %5863 = vmatprep.mubr.f32.mxu0 %v5203
    %5864 = vmatmul.mubr.f32.gmra.mxu0 %v5073
    %v5865 = vpop.f32.mrf.mxu0
    %v5866 = vadd.f32 %v5761, %v5865
    %v5867 = vpop.f32.mrf.mxu0
    %5868 = vmatprep.mubr.f32.mxu0 %v5204
    %5869 = vmatmul.mubr.f32.gmra.mxu0 %v5074
    %v5870 = vpop.f32.mrf.mxu0
    %v5871 = vadd.f32 %v5766, %v5870
    %v5872 = vpop.f32.mrf.mxu0
    %5873 = vdwg.mxu0
    %5874 = vmatprep.subr.mxu0 0.0
    %5875 = vmatpush1.msra.mxu0 %v5542
    %5876 = vmatprep.subr.mxu0 0.0
    %5877 = vmatpush1.msra.mxu0 %v5541
    %5878 = vmatprep.subr.mxu0 0.0
    %5879 = vmatpush1.msra.mxu0 %v5540
    %5880 = vmatprep.subr.mxu0 0.0
    %5881 = vmatpush1.msra.mxu0 %v5539
    %5882 = vmatprep.subr.mxu0 0.0
    %5883 = vmatpush1.msra.mxu0 %v5538
    %5884 = vmatprep.subr.mxu0 0.0
    %5885 = vmatpush1.msra.mxu0 %v5537
    %5886 = vmatprep.subr.mxu0 0.0
    %5887 = vmatpush1.msra.mxu0 %v5536
    %5888 = vmatprep.subr.mxu0 0.0
    %5889 = vmatpush1.msra.mxu0 %v5535
    %5890 = vmatprep.subr.mxu0 0.0
    %5891 = vmatpush1.msra.mxu0 %v5534
    %5892 = vmatprep.subr.mxu0 0.0
    %5893 = vmatpush1.msra.mxu0 %v5533
    %5894 = vmatprep.subr.mxu0 0.0
    %5895 = vmatpush1.msra.mxu0 %v5532
    %5896 = vmatprep.subr.mxu0 0.0
    %5897 = vmatpush1.msra.mxu0 %v5531
    %5898 = vmatprep.subr.mxu0 0.0
    %5899 = vmatpush1.msra.mxu0 %v5530
    %5900 = vmatprep.subr.mxu0 0.0
    %5901 = vmatpush1.msra.mxu0 %v5529
    %5902 = vmatprep.subr.mxu0 0.0
    %5903 = vmatpush1.msra.mxu0 %v5528
    %5904 = vmatprep.subr.mxu0 0.0
    %5905 = vmatpush1.msra.mxu0 %v5527
    %5906 = vmatprep.subr.mxu0 0.0
    %5907 = vmatpush2.msra.mxu0 %v5558
    %5908 = vmatprep.subr.mxu0 0.0
    %5909 = vmatpush2.msra.mxu0 %v5557
    %5910 = vmatprep.subr.mxu0 0.0
    %5911 = vmatpush2.msra.mxu0 %v5556
    %5912 = vmatprep.subr.mxu0 0.0
    %5913 = vmatpush2.msra.mxu0 %v5555
    %5914 = vmatprep.subr.mxu0 0.0
    %5915 = vmatpush2.msra.mxu0 %v5554
    %5916 = vmatprep.subr.mxu0 0.0
    %5917 = vmatpush2.msra.mxu0 %v5553
    %5918 = vmatprep.subr.mxu0 0.0
    %5919 = vmatpush2.msra.mxu0 %v5552
    %5920 = vmatprep.subr.mxu0 0.0
    %5921 = vmatpush2.msra.mxu0 %v5551
    %5922 = vmatprep.subr.mxu0 0.0
    %5923 = vmatpush2.msra.mxu0 %v5550
    %5924 = vmatprep.subr.mxu0 0.0
    %5925 = vmatpush2.msra.mxu0 %v5549
    %5926 = vmatprep.subr.mxu0 0.0
    %5927 = vmatpush2.msra.mxu0 %v5548
    %5928 = vmatprep.subr.mxu0 0.0
    %5929 = vmatpush2.msra.mxu0 %v5547
    %5930 = vmatprep.subr.mxu0 0.0
    %5931 = vmatpush2.msra.mxu0 %v5546
    %5932 = vmatprep.subr.mxu0 0.0
    %5933 = vmatpush2.msra.mxu0 %v5545
    %5934 = vmatprep.subr.mxu0 0.0
    %5935 = vmatpush2.msra.mxu0 %v5544
    %5936 = vmatprep.subr.mxu0 0.0
    %5937 = vmatpush2.msra.mxu0 %v5543
    %5938 = vmatprep.mubr.f32.mxu0 %v5423
    %5939 = vmatmul.mubr.f32.gmra.mxu0 %v5327
    %v5940 = vpop.f32.mrf.mxu0
    %v5941 = vadd.f32 %v5836, %v5940
    %v5942 = vpop.f32.mrf.mxu0
    %5943 = vmatprep.mubr.f32.mxu0 %v5424
    %5944 = vmatmul.mubr.f32.gmra.mxu0 %v5328
    %v5945 = vpop.f32.mrf.mxu0
    %v5946 = vadd.f32 %v5841, %v5945
    %v5947 = vpop.f32.mrf.mxu0
    %5948 = vmatprep.mubr.f32.mxu0 %v5425
    %5949 = vmatmul.mubr.f32.gmra.mxu0 %v5329
    %v5950 = vpop.f32.mrf.mxu0
    %v5951 = vadd.f32 %v5846, %v5950
    %v5952 = vpop.f32.mrf.mxu0
    %5953 = vmatprep.mubr.f32.mxu0 %v5426
    %5954 = vmatmul.mubr.f32.gmra.mxu0 %v5330
    %v5955 = vpop.f32.mrf.mxu0
    %v5956 = vadd.f32 %v5851, %v5955
    %v5957 = vpop.f32.mrf.mxu0
    %5958 = vmatprep.mubr.f32.mxu0 %v5427
    %5959 = vmatmul.mubr.f32.gmra.mxu0 %v5331
    %v5960 = vpop.f32.mrf.mxu0
    %v5961 = vadd.f32 %v5856, %v5960
    %v5962 = vpop.f32.mrf.mxu0
    %5963 = vmatprep.mubr.f32.mxu0 %v5428
    %5964 = vmatmul.mubr.f32.gmra.mxu0 %v5332
    %v5965 = vpop.f32.mrf.mxu0
    %v5966 = vadd.f32 %v5861, %v5965
    %v5967 = vpop.f32.mrf.mxu0
    %5968 = vmatprep.mubr.f32.mxu0 %v5429
    %5969 = vmatmul.mubr.f32.gmra.mxu0 %v5333
    %v5970 = vpop.f32.mrf.mxu0
    %v5971 = vadd.f32 %v5866, %v5970
    %v5972 = vpop.f32.mrf.mxu0
    %5973 = vmatprep.mubr.f32.mxu0 %v5430
    %5974 = vmatmul.mubr.f32.gmra.mxu0 %v5334
    %v5975 = vpop.f32.mrf.mxu0
    %v5976 = vadd.f32 %v5871, %v5975
    %v5977 = vpop.f32.mrf.mxu0
    %5978 = vdwg.mxu0
    %vm5979 = vcmp.ge.f32.partialorder %v5941, 0.0
    %vm5980 = vcmp.ge.f32.partialorder %v5946, 0.0
    %vm5981 = vcmp.ge.f32.partialorder %v5951, 0.0
    %vm5982 = vcmp.ge.f32.partialorder %v5956, 0.0
    %vm5983 = vcmp.ge.f32.partialorder %v5961, 0.0
    %vm5984 = vcmp.ge.f32.partialorder %v5966, 0.0
    %vm5985 = vcmp.ge.f32.partialorder %v5971, 0.0
    %vm5986 = vcmp.ge.f32.partialorder %v5976, 0.0
    %v5987 = vstv %s44
    %v5988 = vmul.f32 %v5987, %v5941
    %v5989 = vmul.f32 %v5987, %v5946
    %v5990 = vmul.f32 %v5987, %v5951
    %v5991 = vmul.f32 %v5987, %v5956
    %v5992 = vmul.f32 %v5987, %v5961
    %v5993 = vmul.f32 %v5987, %v5966
    %v5994 = vmul.f32 %v5987, %v5971
    %v5995 = vmul.f32 %v5987, %v5976
    %v5996 = vsel %vm5979, %v5941, %v5988
    %v5997 = vsel %vm5980, %v5946, %v5989
    %v5998 = vsel %vm5981, %v5951, %v5990
    %v5999 = vsel %vm5982, %v5956, %v5991
    %v6000 = vsel %vm5983, %v5961, %v5992
    %v6001 = vsel %vm5984, %v5966, %v5993
    %v6002 = vsel %vm5985, %v5971, %v5994
    %v6003 = vsel %vm5986, %v5976, %v5995
    %v6004 = vld [vmem:[%s6] sm:$0x1]
    %v6006 = vlaneseq
    %v6007 = vshrl.u32 %v6006, 7
    %v6008 = vsub.s32 0, %v6007
    %v6009 = vrot.slane %v6004, %v6008
    %v6011 = vmul.f32 %v5996, %v6009
    %v6012 = vmul.f32 %v5997, %v6009
    %v6013 = vmul.f32 %v5998, %v6009
    %v6014 = vmul.f32 %v5999, %v6009
    %v6015 = vmul.f32 %v6000, %v6009
    %v6016 = vmul.f32 %v6001, %v6009
    %v6017 = vmul.f32 %v6002, %v6009
    %v6018 = vmul.f32 %v6003, %v6009
    %vm6019 = vcmask 80896
    %v6020 = vsel %vm6019, %v6011, 0.0
    %6021 = vadd.xlane.f32.xlu0 %v6020
    %v6022 = vpop.xlane.xlu0 %6021
    %v6023 = vsel %vm6019, %v6012, 0.0
    %6024 = vadd.xlane.f32.xlu0 %v6023
    %v6025 = vpop.xlane.xlu0 %6024
    %v6026 = vsel %vm6019, %v6013, 0.0
    %6027 = vadd.xlane.f32.xlu0 %v6026
    %v6028 = vpop.xlane.xlu0 %6027
    %v6029 = vsel %vm6019, %v6014, 0.0
    %6030 = vadd.xlane.f32.xlu0 %v6029
    %v6031 = vpop.xlane.xlu0 %6030
    %v6032 = vsel %vm6019, %v6015, 0.0
    %6033 = vadd.xlane.f32.xlu0 %v6032
    %v6034 = vpop.xlane.xlu0 %6033
    %v6035 = vsel %vm6019, %v6016, 0.0
    %6036 = vadd.xlane.f32.xlu0 %v6035
    %v6037 = vpop.xlane.xlu0 %6036
    %v6038 = vsel %vm6019, %v6017, 0.0
    %6039 = vadd.xlane.f32.xlu0 %v6038
    %v6040 = vpop.xlane.xlu0 %6039
    %v6041 = vsel %vm6019, %v6018, 0.0
    %6042 = vadd.xlane.f32.xlu0 %v6041
    %v6043 = vpop.xlane.xlu0 %6042
    %vm6044 = vcmask 7168
    %6045 = vst.msk [vmem:[%s8] sm:$0xff] %vm6044, %v6022
    %6046 = vst.msk [vmem:[%s8 + $0x8] sm:$0xff] %vm6044, %v6025
    %6047 = vst.msk [vmem:[%s8 + $0x10] sm:$0xff] %vm6044, %v6028
    %6048 = vst.msk [vmem:[%s8 + $0x18] sm:$0xff] %vm6044, %v6031
    %6049 = vst.msk [vmem:[%s8 + $0x20] sm:$0xff] %vm6044, %v6034
    %6050 = vst.msk [vmem:[%s8 + $0x28] sm:$0xff] %vm6044, %v6037
    %6051 = vst.msk [vmem:[%s8 + $0x30] sm:$0xff] %vm6044, %v6040
    %6052 = vst.msk [vmem:[%s8 + $0x38] sm:$0xff] %vm6044, %v6043
    // Predicated region
    $region38: #{din_attn_forward.1} parent=1 // pred_check
      _
    $region39: #{din_attn_forward.1} parent=1 // pred_check_branch
      %6054 = sbr.rel (0) target = $region41
    $region40: #{din_attn_forward.1} parent=1 // pred_region
      _
    $region41: #{din_attn_forward.1} parent=1 // pred_fallthru
      _
    // Predicated region
    $region42: #{din_attn_forward.1} parent=1 // pred_check
      _
    $region43: #{din_attn_forward.1} parent=1 // pred_check_branch
      %6056 = sbr.rel (0) target = $region45
    $region44: #{din_attn_forward.1} parent=1 // pred_region
      _
    $region45: #{din_attn_forward.1} parent=1 // pred_fallthru
      _
    %6057 = vsyncpa [#allocation3], 1

</llo_original>
